<compile_context>
chip_gen: v6e
topology: v6e:2x2x1
jax: 0.10.0
libtpu: 0.0.40
codegen_flags: <defaults>
</compile_context>

<pallas_src>
import math
import jax
import jax.numpy as jnp
from jax.experimental import pallas as pl
from jax.experimental.pallas import tpu as pltpu

# ---- model dims (small, synthetic) ----
B = 2          # batch
S = 8          # sequence length
D = 128        # hidden size
H = 4          # attention heads
DH = D // H    # head dim
FFN = 256      # feed-forward inner dim
VOCAB = 64     # vocab size
LAYERS = 2     # number of transformer layers
LN_EPS = 1e-12
NORM_EPS = 1e-12   # F.normalize eps
NEG_INF = -1e9


def _layernorm(x, g, b):
    mu = jnp.mean(x, axis=-1, keepdims=True)
    var = jnp.mean((x - mu) ** 2, axis=-1, keepdims=True)
    return (x - mu) * jax.lax.rsqrt(var + LN_EPS) * g + b


def _split_heads(t2d):
    """(B*S, D) bf16 -> (B*H, S, DH), batch rows ordered (b, h)."""
    heads = [t2d[:, h * DH:(h + 1) * DH].reshape(B, 1, S, DH) for h in range(H)]
    return jnp.concatenate(heads, axis=1).reshape(B * H, S, DH)


def _merge_heads(ctx3):
    """(B*H, S, DH) with rows ordered (b, h) -> (B*S, D) via lane-axis concat in vregs."""
    ctx4 = ctx3.reshape(B, H, S, DH)
    ctx = jnp.concatenate([ctx4[:, h, :, :] for h in range(H)], axis=-1)   # (B, S, D)
    return ctx.reshape(B * S, D)


# ---------------------------------------------------------------------------
# Fused Pallas kernel: LAYERS transformer layers + masked mean pool + L2 norm
# ---------------------------------------------------------------------------
def fused_encoder_kernel(x_ref, mask_ref,
                         wqkv_ref, bqkv_ref, wo_ref, bo_ref,
                         g1_ref, b1_ref,
                         w1_ref, bb1_ref, w2_ref, bb2_ref,
                         g2_ref, b2_ref,
                         out_ref):
    x = x_ref[...]                                   # (B*S, D) f32
    mask2 = mask_ref[...]                            # (B, S)   f32, 1 = attend
    inv_sqrt_dh = 1.0 / math.sqrt(DH)

    # Additive key-side attention bias replicated per head -> (B*H, 1, S); hoisted
    # out of the layer loop (layer-invariant).
    bias2 = (1.0 - mask2) * NEG_INF                  # (B, S)
    bias_bh = jnp.broadcast_to(bias2[:, None, None, :], (B, H, 1, S)).reshape(B * H, 1, S)

    # TODO(synk): at real encoder sizes (12+ layers / BERT-base), switch the Python
    # unroll to grid=(LAYERS,) with weight BlockSpecs (index_map=lambda l: (l,0,0)) so
    # layer l+1 weights are double-buffered under layer l compute and VMEM stays
    # bounded (mandatory on v7x's 64 MiB VMEM). At 2 layers everything fits resident.
    for l in range(LAYERS):                          # static unroll over layers
        # --- fused QKV projection over the whole batch (M = B*S = 16) ---
        xb = x.astype(jnp.bfloat16)                  # one bf16 cast per layer input
        qkv = jnp.dot(xb, wqkv_ref[l],
                      preferred_element_type=jnp.float32) + bqkv_ref[l]   # (B*S, 3D) f32
        qb = qkv[:, 0 * D:1 * D].astype(jnp.bfloat16)
        kb = qkv[:, 1 * D:2 * D].astype(jnp.bfloat16)
        vb = qkv[:, 2 * D:3 * D].astype(jnp.bfloat16)

        # --- multi-head self-attention batched over B*H (no per-head loop) ---
        q3 = _split_heads(qb)                        # (B*H, S, DH) bf16
        k3 = _split_heads(kb)
        v3 = _split_heads(vb)

        s = jnp.einsum('bqd,bkd->bqk', q3, k3,
                       preferred_element_type=jnp.float32) * inv_sqrt_dh + bias_bh
        s = s - jnp.max(s, axis=-1, keepdims=True)
        p = jnp.exp(s)                               # f32 softmax
        inv = pl.reciprocal(jnp.sum(p, axis=-1, keepdims=True), approx=False)
        p = p * inv
        ctx3 = jnp.einsum('bqk,bkd->bqd', p.astype(jnp.bfloat16), v3,
                          preferred_element_type=jnp.float32)             # (B*H, S, DH)

        ctx2d = _merge_heads(ctx3).astype(jnp.bfloat16)                   # (B*S, D)
        attn_out = jnp.dot(ctx2d, wo_ref[l],
                           preferred_element_type=jnp.float32) + bo_ref[l]
        x = _layernorm(x + attn_out, g1_ref[l], b1_ref[l])

        # --- feed-forward ---
        hdn = jnp.dot(x.astype(jnp.bfloat16), w1_ref[l],
                      preferred_element_type=jnp.float32) + bb1_ref[l]
        # TODO(synk): real BERT uses exact erf GELU; tanh approximation kept here
        # (irrelevant for the synthetic weights, flagged for checkpoint fidelity).
        hdn = jax.nn.gelu(hdn, approximate=True)
        ffn_out = jnp.dot(hdn.astype(jnp.bfloat16), w2_ref[l],
                          preferred_element_type=jnp.float32) + bb2_ref[l]
        x = _layernorm(x + ffn_out, g2_ref[l], b2_ref[l])

    # --- epilogue: masked mean pooling + L2 normalize (the module's own math) ---
    # Pooling is a VPU masked multiply + sublane reduce (no f32 MXU contraction).
    xf = x.reshape(B, S, D)                                            # f32
    msum = jnp.sum(xf * mask2[:, :, None], axis=1)                     # (B, D)
    denom = jnp.maximum(jnp.sum(mask2, axis=-1, keepdims=True), 1e-9)  # (B, 1)
    # approx reciprocal is exact-cancelling here: the per-row positive scale drops
    # out of the L2 normalization below.
    pooled = msum * pl.reciprocal(denom, approx=True)                  # (B, D)
    # F.normalize(p=2): x / max(||x||, eps) == x * rsqrt(max(sumsq, eps^2))
    sumsq = jnp.sum(pooled * pooled, axis=-1, keepdims=True)           # (B, 1)
    normalized = pooled * jax.lax.rsqrt(jnp.maximum(sumsq, NORM_EPS * NORM_EPS))
    out_ref[...] = normalized


def encode_fused(x2d, mask2, layer_stack):
    n_in = 2 + len(layer_stack)
    vmem_specs = [pl.BlockSpec(memory_space=pltpu.MemorySpace.VMEM) for _ in range(n_in)]
    return pl.pallas_call(
        fused_encoder_kernel,
        out_shape=jax.ShapeDtypeStruct((B, D), jnp.float32),
        in_specs=vmem_specs,
        out_specs=pl.BlockSpec(memory_space=pltpu.MemorySpace.VMEM),
    )(x2d, mask2, *layer_stack)


# ---------------------------------------------------------------------------
# Parameter construction (deterministic) + full forward
# ---------------------------------------------------------------------------
def init_params(key):
    scale = 0.02
    keys = jax.random.split(key, 3 + LAYERS * 4)
    word_emb = scale * jax.random.normal(keys[0], (VOCAB, D), jnp.float32)
    pos_emb = scale * jax.random.normal(keys[1], (S, D), jnp.float32)
    type_emb = scale * jax.random.normal(keys[2], (2, D), jnp.float32)

    def wk(i, j):
        return keys[3 + i * 4 + j]

    # Stacked per-layer weights; matmul weights stored in bf16 (f32 accumulation in-kernel).
    wqkv = jnp.stack([scale * jax.random.normal(wk(i, 0), (D, 3 * D), jnp.float32)
                      for i in range(LAYERS)]).astype(jnp.bfloat16)
    wo = jnp.stack([scale * jax.random.normal(wk(i, 1), (D, D), jnp.float32)
                    for i in range(LAYERS)]).astype(jnp.bfloat16)
    w1 = jnp.stack([scale * jax.random.normal(wk(i, 2), (D, FFN), jnp.float32)
                    for i in range(LAYERS)]).astype(jnp.bfloat16)
    w2 = jnp.stack([scale * jax.random.normal(wk(i, 3), (FFN, D), jnp.float32)
                    for i in range(LAYERS)]).astype(jnp.bfloat16)
    bqkv = jnp.zeros((LAYERS, 1, 3 * D), jnp.float32)
    bo = jnp.zeros((LAYERS, 1, D), jnp.float32)
    g1 = jnp.ones((LAYERS, 1, D), jnp.float32)
    b1 = jnp.zeros((LAYERS, 1, D), jnp.float32)
    bb1 = jnp.zeros((LAYERS, 1, FFN), jnp.float32)
    bb2 = jnp.zeros((LAYERS, 1, D), jnp.float32)
    g2 = jnp.ones((LAYERS, 1, D), jnp.float32)
    b2 = jnp.zeros((LAYERS, 1, D), jnp.float32)
    layer_stack = (wqkv, bqkv, wo, bo, g1, b1, w1, bb1, w2, bb2, g2, b2)
    return word_emb, pos_emb, type_emb, layer_stack


def sentence_encoder_forward(params, input_ids, attention_mask, token_type_ids=None):
    word_emb, pos_emb, type_emb, layer_stack = params
    if token_type_ids is None:
        token_type_ids = jnp.zeros_like(input_ids)

    # Embedding lookup (gather) + embedding LayerNorm: plain JAX glue, fused by XLA.
    # TODO(synk): embedding LayerNorm has no learned gamma/beta in this synthetic encoder.
    x = word_emb[input_ids] + pos_emb[None, :, :] + type_emb[token_type_ids]
    mu = jnp.mean(x, axis=-1, keepdims=True)
    var = jnp.mean((x - mu) ** 2, axis=-1, keepdims=True)
    x = (x - mu) * jax.lax.rsqrt(var + LN_EPS)

    x2d = x.reshape(B * S, D)                                   # batch folded into M
    mask2 = attention_mask.astype(jnp.float32)                  # (B, S)
    return encode_fused(x2d, mask2, layer_stack)                # single fused Pallas kernel


# TODO(synk): gradient_checkpointing_enable() is a training-time memory optimization
# with no forward-semantics effect; not represented in the kernel.
# TODO(synk): on v7x the single-block fused kernel uses one of the two TensorCores;
# a leading parallel batch grid axis (or core_map split) only pays off at B >= ~16.

if __name__ == "__main__":
    key = jax.random.PRNGKey(0)
    pkey, ikey = jax.random.split(key)
    params = init_params(pkey)

    input_ids = jax.random.randint(ikey, (B, S), 0, VOCAB, dtype=jnp.int32)
    lengths = jnp.array([S, 5], dtype=jnp.int32)
    attention_mask = (jnp.arange(S)[None, :] < lengths[:, None]).astype(jnp.int32)

    forward = jax.jit(lambda p, ids, am: sentence_encoder_forward(p, ids, am))
    out = forward(params, input_ids, attention_mask)
    out = jax.block_until_ready(out)

    assert out.shape == (B, D)
    norms = jnp.linalg.norm(out, axis=1)
    assert bool(jnp.allclose(norms, 1.0, atol=1e-5)), "L2 normalization failed"
    print("KERNEL_OK")
</pallas_src>

<mosaic_0001>
module attributes {stable_mosaic.version = 11 : i64} {
  func.func @fused_encoder_kernel(%arg0: memref<16x128xf32, #tpu.memory_space<vmem>>, %arg1: memref<2x8xf32, #tpu.memory_space<vmem>>, %arg2: memref<2x128x384xbf16, #tpu.memory_space<vmem>>, %arg3: memref<2x1x384xf32, #tpu.memory_space<vmem>>, %arg4: memref<2x128x128xbf16, #tpu.memory_space<vmem>>, %arg5: memref<2x1x128xf32, #tpu.memory_space<vmem>>, %arg6: memref<2x1x128xf32, #tpu.memory_space<vmem>>, %arg7: memref<2x1x128xf32, #tpu.memory_space<vmem>>, %arg8: memref<2x128x256xbf16, #tpu.memory_space<vmem>>, %arg9: memref<2x1x256xf32, #tpu.memory_space<vmem>>, %arg10: memref<2x256x128xbf16, #tpu.memory_space<vmem>>, %arg11: memref<2x1x128xf32, #tpu.memory_space<vmem>>, %arg12: memref<2x1x128xf32, #tpu.memory_space<vmem>>, %arg13: memref<2x1x128xf32, #tpu.memory_space<vmem>>, %arg14: memref<2x128xf32, #tpu.memory_space<vmem>>) attributes {dimension_semantics = [], scalar_prefetch = 0 : i64, scratch_operands = 0 : i64, tpu.core_type = #tpu.core_type<tc>} {
    %c0 = arith.constant 0 : index
    %c0_0 = arith.constant 0 : index
    %0 = vector.load %arg0[%c0, %c0_0] : memref<16x128xf32, #tpu.memory_space<vmem>>, vector<16x128xf32>
    %c0_1 = arith.constant 0 : index
    %c0_2 = arith.constant 0 : index
    %1 = vector.load %arg1[%c0_1, %c0_2] : memref<2x8xf32, #tpu.memory_space<vmem>>, vector<2x8xf32>
    %cst = arith.constant 1.000000e+00 : f32
    %2 = vector.broadcast %cst : f32 to vector<2x8xf32>
    %3 = arith.subf %2, %1 : vector<2x8xf32>
    %cst_3 = arith.constant -1.000000e+09 : f32
    %4 = vector.broadcast %cst_3 : f32 to vector<2x8xf32>
    %5 = arith.mulf %3, %4 : vector<2x8xf32>
    %6 = vector.shape_cast %5 : vector<2x8xf32> to vector<2x1x1x8xf32>
    %7 = vector.shape_cast %6 : vector<2x1x1x8xf32> to vector<2x1x1x8xf32>
    %8 = vector.broadcast %7 : vector<2x1x1x8xf32> to vector<2x4x1x8xf32>
    %9 = vector.shape_cast %8 : vector<2x4x1x8xf32> to vector<8x1x8xf32>
    %10 = arith.truncf %0 : vector<16x128xf32> to vector<16x128xbf16>
    %c0_4 = arith.constant 0 : index
    %c0_5 = arith.constant 0 : index
    %c0_6 = arith.constant 0 : index
    %11 = vector.load %arg2[%c0_4, %c0_5, %c0_6] : memref<2x128x384xbf16, #tpu.memory_space<vmem>>, vector<1x128x384xbf16>
    %12 = vector.shape_cast %11 : vector<1x128x384xbf16> to vector<128x384xbf16>
    %cst_7 = arith.constant dense<0.000000e+00> : vector<16x384xf32>
    %13 = tpu.matmul %10, %12, %cst_7 {dimension_numbers = #tpu.dot_dimension_numbers<[1], [0], [0], [1], [0, 0, 1, 1], [], []>} : vector<16x128xbf16>, vector<128x384xbf16>, vector<16x384xf32> -> vector<16x384xf32>
    %c0_8 = arith.constant 0 : index
    %c0_9 = arith.constant 0 : index
    %c0_10 = arith.constant 0 : index
    %14 = vector.load %arg3[%c0_8, %c0_9, %c0_10] : memref<2x1x384xf32, #tpu.memory_space<vmem>>, vector<1x1x384xf32>
    %15 = vector.shape_cast %14 : vector<1x1x384xf32> to vector<1x384xf32>
    %16 = vector.broadcast %15 : vector<1x384xf32> to vector<16x384xf32>
    %17 = arith.addf %13, %16 : vector<16x384xf32>
    %18 = vector.extract_strided_slice %17 {offsets = [0, 0], sizes = [16, 128], strides = [1, 1]} : vector<16x384xf32> to vector<16x128xf32>
    %19 = arith.truncf %18 : vector<16x128xf32> to vector<16x128xbf16>
    %20 = vector.extract_strided_slice %17 {offsets = [0, 128], sizes = [16, 128], strides = [1, 1]} : vector<16x384xf32> to vector<16x128xf32>
    %21 = arith.truncf %20 : vector<16x128xf32> to vector<16x128xbf16>
    %22 = vector.extract_strided_slice %17 {offsets = [0, 256], sizes = [16, 128], strides = [1, 1]} : vector<16x384xf32> to vector<16x128xf32>
    %23 = arith.truncf %22 : vector<16x128xf32> to vector<16x128xbf16>
    %24 = vector.extract_strided_slice %19 {offsets = [0, 0], sizes = [16, 32], strides = [1, 1]} : vector<16x128xbf16> to vector<16x32xbf16>
    %25 = vector.shape_cast %24 : vector<16x32xbf16> to vector<2x1x8x32xbf16>
    %26 = vector.extract_strided_slice %19 {offsets = [0, 32], sizes = [16, 32], strides = [1, 1]} : vector<16x128xbf16> to vector<16x32xbf16>
    %27 = vector.shape_cast %26 : vector<16x32xbf16> to vector<2x1x8x32xbf16>
    %28 = vector.extract_strided_slice %19 {offsets = [0, 64], sizes = [16, 32], strides = [1, 1]} : vector<16x128xbf16> to vector<16x32xbf16>
    %29 = vector.shape_cast %28 : vector<16x32xbf16> to vector<2x1x8x32xbf16>
    %30 = vector.extract_strided_slice %19 {offsets = [0, 96], sizes = [16, 32], strides = [1, 1]} : vector<16x128xbf16> to vector<16x32xbf16>
    %31 = vector.shape_cast %30 : vector<16x32xbf16> to vector<2x1x8x32xbf16>
    %32 = tpu.concatenate %25, %27, %29, %31 in 1 : vector<2x1x8x32xbf16>, vector<2x1x8x32xbf16>, vector<2x1x8x32xbf16>, vector<2x1x8x32xbf16> -> vector<2x4x8x32xbf16>
    %33 = vector.shape_cast %32 : vector<2x4x8x32xbf16> to vector<8x8x32xbf16>
    %34 = vector.extract_strided_slice %21 {offsets = [0, 0], sizes = [16, 32], strides = [1, 1]} : vector<16x128xbf16> to vector<16x32xbf16>
    %35 = vector.shape_cast %34 : vector<16x32xbf16> to vector<2x1x8x32xbf16>
    %36 = vector.extract_strided_slice %21 {offsets = [0, 32], sizes = [16, 32], strides = [1, 1]} : vector<16x128xbf16> to vector<16x32xbf16>
    %37 = vector.shape_cast %36 : vector<16x32xbf16> to vector<2x1x8x32xbf16>
    %38 = vector.extract_strided_slice %21 {offsets = [0, 64], sizes = [16, 32], strides = [1, 1]} : vector<16x128xbf16> to vector<16x32xbf16>
    %39 = vector.shape_cast %38 : vector<16x32xbf16> to vector<2x1x8x32xbf16>
    %40 = vector.extract_strided_slice %21 {offsets = [0, 96], sizes = [16, 32], strides = [1, 1]} : vector<16x128xbf16> to vector<16x32xbf16>
    %41 = vector.shape_cast %40 : vector<16x32xbf16> to vector<2x1x8x32xbf16>
    %42 = tpu.concatenate %35, %37, %39, %41 in 1 : vector<2x1x8x32xbf16>, vector<2x1x8x32xbf16>, vector<2x1x8x32xbf16>, vector<2x1x8x32xbf16> -> vector<2x4x8x32xbf16>
    %43 = vector.shape_cast %42 : vector<2x4x8x32xbf16> to vector<8x8x32xbf16>
    %44 = vector.extract_strided_slice %23 {offsets = [0, 0], sizes = [16, 32], strides = [1, 1]} : vector<16x128xbf16> to vector<16x32xbf16>
    %45 = vector.shape_cast %44 : vector<16x32xbf16> to vector<2x1x8x32xbf16>
    %46 = vector.extract_strided_slice %23 {offsets = [0, 32], sizes = [16, 32], strides = [1, 1]} : vector<16x128xbf16> to vector<16x32xbf16>
    %47 = vector.shape_cast %46 : vector<16x32xbf16> to vector<2x1x8x32xbf16>
    %48 = vector.extract_strided_slice %23 {offsets = [0, 64], sizes = [16, 32], strides = [1, 1]} : vector<16x128xbf16> to vector<16x32xbf16>
    %49 = vector.shape_cast %48 : vector<16x32xbf16> to vector<2x1x8x32xbf16>
    %50 = vector.extract_strided_slice %23 {offsets = [0, 96], sizes = [16, 32], strides = [1, 1]} : vector<16x128xbf16> to vector<16x32xbf16>
    %51 = vector.shape_cast %50 : vector<16x32xbf16> to vector<2x1x8x32xbf16>
    %52 = tpu.concatenate %45, %47, %49, %51 in 1 : vector<2x1x8x32xbf16>, vector<2x1x8x32xbf16>, vector<2x1x8x32xbf16>, vector<2x1x8x32xbf16> -> vector<2x4x8x32xbf16>
    %53 = vector.shape_cast %52 : vector<2x4x8x32xbf16> to vector<8x8x32xbf16>
    "tpu.trace_start"() <{level = 10 : i32, message = "bqd,bkd->bqk"}> : () -> ()
    %cst_11 = arith.constant dense<0.000000e+00> : vector<8x8x8xf32>
    %54 = tpu.matmul %33, %43, %cst_11 {dimension_numbers = #tpu.dot_dimension_numbers<[2], [2], [1], [1], [0, 0, 0, 1, 1, 1], [0], [0]>} : vector<8x8x32xbf16>, vector<8x8x32xbf16>, vector<8x8x8xf32> -> vector<8x8x8xf32>
    "tpu.trace_stop"() : () -> ()
    %cst_12 = arith.constant 0.176776692 : f32
    %55 = vector.broadcast %cst_12 : f32 to vector<8x8x8xf32>
    %56 = arith.mulf %54, %55 : vector<8x8x8xf32>
    %57 = vector.broadcast %9 : vector<8x1x8xf32> to vector<8x8x8xf32>
    %58 = arith.addf %56, %57 : vector<8x8x8xf32>
    %cst_13 = arith.constant dense<0xFF800000> : vector<8x8xf32>
    %59 = vector.multi_reduction <maximumf>, %58, %cst_13 [2] : vector<8x8x8xf32> to vector<8x8xf32>
    %60 = vector.shape_cast %59 : vector<8x8xf32> to vector<8x8x1xf32>
    %61 = vector.broadcast %60 : vector<8x8x1xf32> to vector<8x8x8xf32>
    %62 = arith.subf %58, %61 : vector<8x8x8xf32>
    %63 = math.exp %62 : vector<8x8x8xf32>
    %cst_14 = arith.constant dense<0.000000e+00> : vector<8x8xf32>
    %64 = vector.multi_reduction <add>, %63, %cst_14 [2] : vector<8x8x8xf32> to vector<8x8xf32>
    %65 = vector.shape_cast %64 : vector<8x8xf32> to vector<8x8x1xf32>
    %66 = tpu.reciprocal %65 : vector<8x8x1xf32> -> vector<8x8x1xf32>
    %67 = vector.broadcast %66 : vector<8x8x1xf32> to vector<8x8x8xf32>
    %68 = arith.mulf %63, %67 : vector<8x8x8xf32>
    %69 = arith.truncf %68 : vector<8x8x8xf32> to vector<8x8x8xbf16>
    "tpu.trace_start"() <{level = 10 : i32, message = "bqk,bkd->bqd"}> : () -> ()
    %cst_15 = arith.constant dense<0.000000e+00> : vector<8x8x32xf32>
    %70 = tpu.matmul %69, %53, %cst_15 {dimension_numbers = #tpu.dot_dimension_numbers<[2], [1], [1], [2], [0, 0, 0, 1, 1, 2], [0], [0]>} : vector<8x8x8xbf16>, vector<8x8x32xbf16>, vector<8x8x32xf32> -> vector<8x8x32xf32>
    "tpu.trace_stop"() : () -> ()
    %71 = vector.shape_cast %70 : vector<8x8x32xf32> to vector<2x4x8x32xf32>
    %72 = vector.extract_strided_slice %71 {offsets = [0, 0, 0, 0], sizes = [2, 1, 8, 32], strides = [1, 1, 1, 1]} : vector<2x4x8x32xf32> to vector<2x1x8x32xf32>
    %73 = vector.shape_cast %72 : vector<2x1x8x32xf32> to vector<2x8x32xf32>
    %74 = vector.extract_strided_slice %71 {offsets = [0, 1, 0, 0], sizes = [2, 1, 8, 32], strides = [1, 1, 1, 1]} : vector<2x4x8x32xf32> to vector<2x1x8x32xf32>
    %75 = vector.shape_cast %74 : vector<2x1x8x32xf32> to vector<2x8x32xf32>
    %76 = vector.extract_strided_slice %71 {offsets = [0, 2, 0, 0], sizes = [2, 1, 8, 32], strides = [1, 1, 1, 1]} : vector<2x4x8x32xf32> to vector<2x1x8x32xf32>
    %77 = vector.shape_cast %76 : vector<2x1x8x32xf32> to vector<2x8x32xf32>
    %78 = vector.extract_strided_slice %71 {offsets = [0, 3, 0, 0], sizes = [2, 1, 8, 32], strides = [1, 1, 1, 1]} : vector<2x4x8x32xf32> to vector<2x1x8x32xf32>
    %79 = vector.shape_cast %78 : vector<2x1x8x32xf32> to vector<2x8x32xf32>
    %80 = tpu.concatenate %73, %75, %77, %79 in 2 : vector<2x8x32xf32>, vector<2x8x32xf32>, vector<2x8x32xf32>, vector<2x8x32xf32> -> vector<2x8x128xf32>
    %81 = vector.shape_cast %80 : vector<2x8x128xf32> to vector<16x128xf32>
    %82 = arith.truncf %81 : vector<16x128xf32> to vector<16x128xbf16>
    %c0_16 = arith.constant 0 : index
    %c0_17 = arith.constant 0 : index
    %c0_18 = arith.constant 0 : index
    %83 = vector.load %arg4[%c0_16, %c0_17, %c0_18] : memref<2x128x128xbf16, #tpu.memory_space<vmem>>, vector<1x128x128xbf16>
    %84 = vector.shape_cast %83 : vector<1x128x128xbf16> to vector<128x128xbf16>
    %cst_19 = arith.constant dense<0.000000e+00> : vector<16x128xf32>
    %85 = tpu.matmul %82, %84, %cst_19 {dimension_numbers = #tpu.dot_dimension_numbers<[1], [0], [0], [1], [0, 0, 1, 1], [], []>} : vector<16x128xbf16>, vector<128x128xbf16>, vector<16x128xf32> -> vector<16x128xf32>
    %c0_20 = arith.constant 0 : index
    %c0_21 = arith.constant 0 : index
    %c0_22 = arith.constant 0 : index
    %86 = vector.load %arg5[%c0_20, %c0_21, %c0_22] : memref<2x1x128xf32, #tpu.memory_space<vmem>>, vector<1x1x128xf32>
    %87 = vector.shape_cast %86 : vector<1x1x128xf32> to vector<1x128xf32>
    %88 = vector.broadcast %87 : vector<1x128xf32> to vector<16x128xf32>
    %89 = arith.addf %85, %88 : vector<16x128xf32>
    %90 = arith.addf %0, %89 : vector<16x128xf32>
    %c0_23 = arith.constant 0 : index
    %c0_24 = arith.constant 0 : index
    %c0_25 = arith.constant 0 : index
    %91 = vector.load %arg6[%c0_23, %c0_24, %c0_25] : memref<2x1x128xf32, #tpu.memory_space<vmem>>, vector<1x1x128xf32>
    %92 = vector.shape_cast %91 : vector<1x1x128xf32> to vector<1x128xf32>
    %c0_26 = arith.constant 0 : index
    %c0_27 = arith.constant 0 : index
    %c0_28 = arith.constant 0 : index
    %93 = vector.load %arg7[%c0_26, %c0_27, %c0_28] : memref<2x1x128xf32, #tpu.memory_space<vmem>>, vector<1x1x128xf32>
    %94 = vector.shape_cast %93 : vector<1x1x128xf32> to vector<1x128xf32>
    %cst_29 = arith.constant dense<0.000000e+00> : vector<16xf32>
    %95 = vector.multi_reduction <add>, %90, %cst_29 [1] : vector<16x128xf32> to vector<16xf32>
    %96 = vector.shape_cast %95 : vector<16xf32> to vector<16x1xf32>
    %cst_30 = arith.constant 1.280000e+02 : f32
    %97 = vector.broadcast %cst_30 : f32 to vector<16x1xf32>
    %98 = arith.divf %96, %97 : vector<16x1xf32>
    %99 = vector.broadcast %98 : vector<16x1xf32> to vector<16x128xf32>
    %100 = arith.subf %90, %99 : vector<16x128xf32>
    %101 = arith.mulf %100, %100 : vector<16x128xf32>
    %cst_31 = arith.constant dense<0.000000e+00> : vector<16xf32>
    %102 = vector.multi_reduction <add>, %101, %cst_31 [1] : vector<16x128xf32> to vector<16xf32>
    %103 = vector.shape_cast %102 : vector<16xf32> to vector<16x1xf32>
    %cst_32 = arith.constant 1.280000e+02 : f32
    %104 = vector.broadcast %cst_32 : f32 to vector<16x1xf32>
    %105 = arith.divf %103, %104 : vector<16x1xf32>
    %106 = vector.broadcast %98 : vector<16x1xf32> to vector<16x128xf32>
    %107 = arith.subf %90, %106 : vector<16x128xf32>
    %cst_33 = arith.constant 9.99999996E-13 : f32
    %108 = vector.broadcast %cst_33 : f32 to vector<16x1xf32>
    %109 = arith.addf %105, %108 : vector<16x1xf32>
    %110 = math.rsqrt %109 : vector<16x1xf32>
    %111 = vector.broadcast %110 : vector<16x1xf32> to vector<16x128xf32>
    %112 = arith.mulf %107, %111 : vector<16x128xf32>
    %113 = vector.broadcast %92 : vector<1x128xf32> to vector<16x128xf32>
    %114 = arith.mulf %112, %113 : vector<16x128xf32>
    %115 = vector.broadcast %94 : vector<1x128xf32> to vector<16x128xf32>
    %116 = arith.addf %114, %115 : vector<16x128xf32>
    %117 = arith.truncf %116 : vector<16x128xf32> to vector<16x128xbf16>
    %c0_34 = arith.constant 0 : index
    %c0_35 = arith.constant 0 : index
    %c0_36 = arith.constant 0 : index
    %118 = vector.load %arg8[%c0_34, %c0_35, %c0_36] : memref<2x128x256xbf16, #tpu.memory_space<vmem>>, vector<1x128x256xbf16>
    %119 = vector.shape_cast %118 : vector<1x128x256xbf16> to vector<128x256xbf16>
    %cst_37 = arith.constant dense<0.000000e+00> : vector<16x256xf32>
    %120 = tpu.matmul %117, %119, %cst_37 {dimension_numbers = #tpu.dot_dimension_numbers<[1], [0], [0], [1], [0, 0, 1, 1], [], []>} : vector<16x128xbf16>, vector<128x256xbf16>, vector<16x256xf32> -> vector<16x256xf32>
    %c0_38 = arith.constant 0 : index
    %c0_39 = arith.constant 0 : index
    %c0_40 = arith.constant 0 : index
    %121 = vector.load %arg9[%c0_38, %c0_39, %c0_40] : memref<2x1x256xf32, #tpu.memory_space<vmem>>, vector<1x1x256xf32>
    %122 = vector.shape_cast %121 : vector<1x1x256xf32> to vector<1x256xf32>
    %123 = vector.broadcast %122 : vector<1x256xf32> to vector<16x256xf32>
    %124 = arith.addf %120, %123 : vector<16x256xf32>
    %125 = arith.mulf %124, %124 : vector<16x256xf32>
    %126 = arith.mulf %124, %125 : vector<16x256xf32>
    %cst_41 = arith.constant 4.471500e-02 : f32
    %127 = vector.broadcast %cst_41 : f32 to vector<16x256xf32>
    %128 = arith.mulf %127, %126 : vector<16x256xf32>
    %129 = arith.addf %124, %128 : vector<16x256xf32>
    %cst_42 = arith.constant 0.797884583 : f32
    %130 = vector.broadcast %cst_42 : f32 to vector<16x256xf32>
    %131 = arith.mulf %130, %129 : vector<16x256xf32>
    %132 = math.tanh %131 : vector<16x256xf32>
    %cst_43 = arith.constant 1.000000e+00 : f32
    %133 = vector.broadcast %cst_43 : f32 to vector<16x256xf32>
    %134 = arith.addf %133, %132 : vector<16x256xf32>
    %cst_44 = arith.constant 5.000000e-01 : f32
    %135 = vector.broadcast %cst_44 : f32 to vector<16x256xf32>
    %136 = arith.mulf %135, %134 : vector<16x256xf32>
    %137 = arith.mulf %124, %136 : vector<16x256xf32>
    %138 = arith.truncf %137 : vector<16x256xf32> to vector<16x256xbf16>
    %c0_45 = arith.constant 0 : index
    %c0_46 = arith.constant 0 : index
    %c0_47 = arith.constant 0 : index
    %139 = vector.load %arg10[%c0_45, %c0_46, %c0_47] : memref<2x256x128xbf16, #tpu.memory_space<vmem>>, vector<1x256x128xbf16>
    %140 = vector.shape_cast %139 : vector<1x256x128xbf16> to vector<256x128xbf16>
    %cst_48 = arith.constant dense<0.000000e+00> : vector<16x128xf32>
    %141 = tpu.matmul %138, %140, %cst_48 {dimension_numbers = #tpu.dot_dimension_numbers<[1], [0], [0], [1], [0, 0, 1, 1], [], []>} : vector<16x256xbf16>, vector<256x128xbf16>, vector<16x128xf32> -> vector<16x128xf32>
    %c0_49 = arith.constant 0 : index
    %c0_50 = arith.constant 0 : index
    %c0_51 = arith.constant 0 : index
    %142 = vector.load %arg11[%c0_49, %c0_50, %c0_51] : memref<2x1x128xf32, #tpu.memory_space<vmem>>, vector<1x1x128xf32>
    %143 = vector.shape_cast %142 : vector<1x1x128xf32> to vector<1x128xf32>
    %144 = vector.broadcast %143 : vector<1x128xf32> to vector<16x128xf32>
    %145 = arith.addf %141, %144 : vector<16x128xf32>
    %146 = arith.addf %116, %145 : vector<16x128xf32>
    %c0_52 = arith.constant 0 : index
    %c0_53 = arith.constant 0 : index
    %c0_54 = arith.constant 0 : index
    %147 = vector.load %arg12[%c0_52, %c0_53, %c0_54] : memref<2x1x128xf32, #tpu.memory_space<vmem>>, vector<1x1x128xf32>
    %148 = vector.shape_cast %147 : vector<1x1x128xf32> to vector<1x128xf32>
    %c0_55 = arith.constant 0 : index
    %c0_56 = arith.constant 0 : index
    %c0_57 = arith.constant 0 : index
    %149 = vector.load %arg13[%c0_55, %c0_56, %c0_57] : memref<2x1x128xf32, #tpu.memory_space<vmem>>, vector<1x1x128xf32>
    %150 = vector.shape_cast %149 : vector<1x1x128xf32> to vector<1x128xf32>
    %cst_58 = arith.constant dense<0.000000e+00> : vector<16xf32>
    %151 = vector.multi_reduction <add>, %146, %cst_58 [1] : vector<16x128xf32> to vector<16xf32>
    %152 = vector.shape_cast %151 : vector<16xf32> to vector<16x1xf32>
    %cst_59 = arith.constant 1.280000e+02 : f32
    %153 = vector.broadcast %cst_59 : f32 to vector<16x1xf32>
    %154 = arith.divf %152, %153 : vector<16x1xf32>
    %155 = vector.broadcast %154 : vector<16x1xf32> to vector<16x128xf32>
    %156 = arith.subf %146, %155 : vector<16x128xf32>
    %157 = arith.mulf %156, %156 : vector<16x128xf32>
    %cst_60 = arith.constant dense<0.000000e+00> : vector<16xf32>
    %158 = vector.multi_reduction <add>, %157, %cst_60 [1] : vector<16x128xf32> to vector<16xf32>
    %159 = vector.shape_cast %158 : vector<16xf32> to vector<16x1xf32>
    %cst_61 = arith.constant 1.280000e+02 : f32
    %160 = vector.broadcast %cst_61 : f32 to vector<16x1xf32>
    %161 = arith.divf %159, %160 : vector<16x1xf32>
    %162 = vector.broadcast %154 : vector<16x1xf32> to vector<16x128xf32>
    %163 = arith.subf %146, %162 : vector<16x128xf32>
    %cst_62 = arith.constant 9.99999996E-13 : f32
    %164 = vector.broadcast %cst_62 : f32 to vector<16x1xf32>
    %165 = arith.addf %161, %164 : vector<16x1xf32>
    %166 = math.rsqrt %165 : vector<16x1xf32>
    %167 = vector.broadcast %166 : vector<16x1xf32> to vector<16x128xf32>
    %168 = arith.mulf %163, %167 : vector<16x128xf32>
    %169 = vector.broadcast %148 : vector<1x128xf32> to vector<16x128xf32>
    %170 = arith.mulf %168, %169 : vector<16x128xf32>
    %171 = vector.broadcast %150 : vector<1x128xf32> to vector<16x128xf32>
    %172 = arith.addf %170, %171 : vector<16x128xf32>
    %173 = arith.truncf %172 : vector<16x128xf32> to vector<16x128xbf16>
    %c1 = arith.constant 1 : index
    %c0_63 = arith.constant 0 : index
    %c0_64 = arith.constant 0 : index
    %174 = vector.load %arg2[%c1, %c0_63, %c0_64] : memref<2x128x384xbf16, #tpu.memory_space<vmem>>, vector<1x128x384xbf16>
    %175 = vector.shape_cast %174 : vector<1x128x384xbf16> to vector<128x384xbf16>
    %cst_65 = arith.constant dense<0.000000e+00> : vector<16x384xf32>
    %176 = tpu.matmul %173, %175, %cst_65 {dimension_numbers = #tpu.dot_dimension_numbers<[1], [0], [0], [1], [0, 0, 1, 1], [], []>} : vector<16x128xbf16>, vector<128x384xbf16>, vector<16x384xf32> -> vector<16x384xf32>
    %c1_66 = arith.constant 1 : index
    %c0_67 = arith.constant 0 : index
    %c0_68 = arith.constant 0 : index
    %177 = vector.load %arg3[%c1_66, %c0_67, %c0_68] : memref<2x1x384xf32, #tpu.memory_space<vmem>>, vector<1x1x384xf32>
    %178 = vector.shape_cast %177 : vector<1x1x384xf32> to vector<1x384xf32>
    %179 = vector.broadcast %178 : vector<1x384xf32> to vector<16x384xf32>
    %180 = arith.addf %176, %179 : vector<16x384xf32>
    %181 = vector.extract_strided_slice %180 {offsets = [0, 0], sizes = [16, 128], strides = [1, 1]} : vector<16x384xf32> to vector<16x128xf32>
    %182 = arith.truncf %181 : vector<16x128xf32> to vector<16x128xbf16>
    %183 = vector.extract_strided_slice %180 {offsets = [0, 128], sizes = [16, 128], strides = [1, 1]} : vector<16x384xf32> to vector<16x128xf32>
    %184 = arith.truncf %183 : vector<16x128xf32> to vector<16x128xbf16>
    %185 = vector.extract_strided_slice %180 {offsets = [0, 256], sizes = [16, 128], strides = [1, 1]} : vector<16x384xf32> to vector<16x128xf32>
    %186 = arith.truncf %185 : vector<16x128xf32> to vector<16x128xbf16>
    %187 = vector.extract_strided_slice %182 {offsets = [0, 0], sizes = [16, 32], strides = [1, 1]} : vector<16x128xbf16> to vector<16x32xbf16>
    %188 = vector.shape_cast %187 : vector<16x32xbf16> to vector<2x1x8x32xbf16>
    %189 = vector.extract_strided_slice %182 {offsets = [0, 32], sizes = [16, 32], strides = [1, 1]} : vector<16x128xbf16> to vector<16x32xbf16>
    %190 = vector.shape_cast %189 : vector<16x32xbf16> to vector<2x1x8x32xbf16>
    %191 = vector.extract_strided_slice %182 {offsets = [0, 64], sizes = [16, 32], strides = [1, 1]} : vector<16x128xbf16> to vector<16x32xbf16>
    %192 = vector.shape_cast %191 : vector<16x32xbf16> to vector<2x1x8x32xbf16>
    %193 = vector.extract_strided_slice %182 {offsets = [0, 96], sizes = [16, 32], strides = [1, 1]} : vector<16x128xbf16> to vector<16x32xbf16>
    %194 = vector.shape_cast %193 : vector<16x32xbf16> to vector<2x1x8x32xbf16>
    %195 = tpu.concatenate %188, %190, %192, %194 in 1 : vector<2x1x8x32xbf16>, vector<2x1x8x32xbf16>, vector<2x1x8x32xbf16>, vector<2x1x8x32xbf16> -> vector<2x4x8x32xbf16>
    %196 = vector.shape_cast %195 : vector<2x4x8x32xbf16> to vector<8x8x32xbf16>
    %197 = vector.extract_strided_slice %184 {offsets = [0, 0], sizes = [16, 32], strides = [1, 1]} : vector<16x128xbf16> to vector<16x32xbf16>
    %198 = vector.shape_cast %197 : vector<16x32xbf16> to vector<2x1x8x32xbf16>
    %199 = vector.extract_strided_slice %184 {offsets = [0, 32], sizes = [16, 32], strides = [1, 1]} : vector<16x128xbf16> to vector<16x32xbf16>
    %200 = vector.shape_cast %199 : vector<16x32xbf16> to vector<2x1x8x32xbf16>
    %201 = vector.extract_strided_slice %184 {offsets = [0, 64], sizes = [16, 32], strides = [1, 1]} : vector<16x128xbf16> to vector<16x32xbf16>
    %202 = vector.shape_cast %201 : vector<16x32xbf16> to vector<2x1x8x32xbf16>
    %203 = vector.extract_strided_slice %184 {offsets = [0, 96], sizes = [16, 32], strides = [1, 1]} : vector<16x128xbf16> to vector<16x32xbf16>
    %204 = vector.shape_cast %203 : vector<16x32xbf16> to vector<2x1x8x32xbf16>
    %205 = tpu.concatenate %198, %200, %202, %204 in 1 : vector<2x1x8x32xbf16>, vector<2x1x8x32xbf16>, vector<2x1x8x32xbf16>, vector<2x1x8x32xbf16> -> vector<2x4x8x32xbf16>
    %206 = vector.shape_cast %205 : vector<2x4x8x32xbf16> to vector<8x8x32xbf16>
    %207 = vector.extract_strided_slice %186 {offsets = [0, 0], sizes = [16, 32], strides = [1, 1]} : vector<16x128xbf16> to vector<16x32xbf16>
    %208 = vector.shape_cast %207 : vector<16x32xbf16> to vector<2x1x8x32xbf16>
    %209 = vector.extract_strided_slice %186 {offsets = [0, 32], sizes = [16, 32], strides = [1, 1]} : vector<16x128xbf16> to vector<16x32xbf16>
    %210 = vector.shape_cast %209 : vector<16x32xbf16> to vector<2x1x8x32xbf16>
    %211 = vector.extract_strided_slice %186 {offsets = [0, 64], sizes = [16, 32], strides = [1, 1]} : vector<16x128xbf16> to vector<16x32xbf16>
    %212 = vector.shape_cast %211 : vector<16x32xbf16> to vector<2x1x8x32xbf16>
    %213 = vector.extract_strided_slice %186 {offsets = [0, 96], sizes = [16, 32], strides = [1, 1]} : vector<16x128xbf16> to vector<16x32xbf16>
    %214 = vector.shape_cast %213 : vector<16x32xbf16> to vector<2x1x8x32xbf16>
    %215 = tpu.concatenate %208, %210, %212, %214 in 1 : vector<2x1x8x32xbf16>, vector<2x1x8x32xbf16>, vector<2x1x8x32xbf16>, vector<2x1x8x32xbf16> -> vector<2x4x8x32xbf16>
    %216 = vector.shape_cast %215 : vector<2x4x8x32xbf16> to vector<8x8x32xbf16>
    "tpu.trace_start"() <{level = 10 : i32, message = "bqd,bkd->bqk"}> : () -> ()
    %cst_69 = arith.constant dense<0.000000e+00> : vector<8x8x8xf32>
    %217 = tpu.matmul %196, %206, %cst_69 {dimension_numbers = #tpu.dot_dimension_numbers<[2], [2], [1], [1], [0, 0, 0, 1, 1, 1], [0], [0]>} : vector<8x8x32xbf16>, vector<8x8x32xbf16>, vector<8x8x8xf32> -> vector<8x8x8xf32>
    "tpu.trace_stop"() : () -> ()
    %cst_70 = arith.constant 0.176776692 : f32
    %218 = vector.broadcast %cst_70 : f32 to vector<8x8x8xf32>
    %219 = arith.mulf %217, %218 : vector<8x8x8xf32>
    %220 = vector.broadcast %9 : vector<8x1x8xf32> to vector<8x8x8xf32>
    %221 = arith.addf %219, %220 : vector<8x8x8xf32>
    %cst_71 = arith.constant dense<0xFF800000> : vector<8x8xf32>
    %222 = vector.multi_reduction <maximumf>, %221, %cst_71 [2] : vector<8x8x8xf32> to vector<8x8xf32>
    %223 = vector.shape_cast %222 : vector<8x8xf32> to vector<8x8x1xf32>
    %224 = vector.broadcast %223 : vector<8x8x1xf32> to vector<8x8x8xf32>
    %225 = arith.subf %221, %224 : vector<8x8x8xf32>
    %226 = math.exp %225 : vector<8x8x8xf32>
    %cst_72 = arith.constant dense<0.000000e+00> : vector<8x8xf32>
    %227 = vector.multi_reduction <add>, %226, %cst_72 [2] : vector<8x8x8xf32> to vector<8x8xf32>
    %228 = vector.shape_cast %227 : vector<8x8xf32> to vector<8x8x1xf32>
    %229 = tpu.reciprocal %228 : vector<8x8x1xf32> -> vector<8x8x1xf32>
    %230 = vector.broadcast %229 : vector<8x8x1xf32> to vector<8x8x8xf32>
    %231 = arith.mulf %226, %230 : vector<8x8x8xf32>
    %232 = arith.truncf %231 : vector<8x8x8xf32> to vector<8x8x8xbf16>
    "tpu.trace_start"() <{level = 10 : i32, message = "bqk,bkd->bqd"}> : () -> ()
    %cst_73 = arith.constant dense<0.000000e+00> : vector<8x8x32xf32>
    %233 = tpu.matmul %232, %216, %cst_73 {dimension_numbers = #tpu.dot_dimension_numbers<[2], [1], [1], [2], [0, 0, 0, 1, 1, 2], [0], [0]>} : vector<8x8x8xbf16>, vector<8x8x32xbf16>, vector<8x8x32xf32> -> vector<8x8x32xf32>
    "tpu.trace_stop"() : () -> ()
    %234 = vector.shape_cast %233 : vector<8x8x32xf32> to vector<2x4x8x32xf32>
    %235 = vector.extract_strided_slice %234 {offsets = [0, 0, 0, 0], sizes = [2, 1, 8, 32], strides = [1, 1, 1, 1]} : vector<2x4x8x32xf32> to vector<2x1x8x32xf32>
    %236 = vector.shape_cast %235 : vector<2x1x8x32xf32> to vector<2x8x32xf32>
    %237 = vector.extract_strided_slice %234 {offsets = [0, 1, 0, 0], sizes = [2, 1, 8, 32], strides = [1, 1, 1, 1]} : vector<2x4x8x32xf32> to vector<2x1x8x32xf32>
    %238 = vector.shape_cast %237 : vector<2x1x8x32xf32> to vector<2x8x32xf32>
    %239 = vector.extract_strided_slice %234 {offsets = [0, 2, 0, 0], sizes = [2, 1, 8, 32], strides = [1, 1, 1, 1]} : vector<2x4x8x32xf32> to vector<2x1x8x32xf32>
    %240 = vector.shape_cast %239 : vector<2x1x8x32xf32> to vector<2x8x32xf32>
    %241 = vector.extract_strided_slice %234 {offsets = [0, 3, 0, 0], sizes = [2, 1, 8, 32], strides = [1, 1, 1, 1]} : vector<2x4x8x32xf32> to vector<2x1x8x32xf32>
    %242 = vector.shape_cast %241 : vector<2x1x8x32xf32> to vector<2x8x32xf32>
    %243 = tpu.concatenate %236, %238, %240, %242 in 2 : vector<2x8x32xf32>, vector<2x8x32xf32>, vector<2x8x32xf32>, vector<2x8x32xf32> -> vector<2x8x128xf32>
    %244 = vector.shape_cast %243 : vector<2x8x128xf32> to vector<16x128xf32>
    %245 = arith.truncf %244 : vector<16x128xf32> to vector<16x128xbf16>
    %c1_74 = arith.constant 1 : index
    %c0_75 = arith.constant 0 : index
    %c0_76 = arith.constant 0 : index
    %246 = vector.load %arg4[%c1_74, %c0_75, %c0_76] : memref<2x128x128xbf16, #tpu.memory_space<vmem>>, vector<1x128x128xbf16>
    %247 = vector.shape_cast %246 : vector<1x128x128xbf16> to vector<128x128xbf16>
    %cst_77 = arith.constant dense<0.000000e+00> : vector<16x128xf32>
    %248 = tpu.matmul %245, %247, %cst_77 {dimension_numbers = #tpu.dot_dimension_numbers<[1], [0], [0], [1], [0, 0, 1, 1], [], []>} : vector<16x128xbf16>, vector<128x128xbf16>, vector<16x128xf32> -> vector<16x128xf32>
    %c1_78 = arith.constant 1 : index
    %c0_79 = arith.constant 0 : index
    %c0_80 = arith.constant 0 : index
    %249 = vector.load %arg5[%c1_78, %c0_79, %c0_80] : memref<2x1x128xf32, #tpu.memory_space<vmem>>, vector<1x1x128xf32>
    %250 = vector.shape_cast %249 : vector<1x1x128xf32> to vector<1x128xf32>
    %251 = vector.broadcast %250 : vector<1x128xf32> to vector<16x128xf32>
    %252 = arith.addf %248, %251 : vector<16x128xf32>
    %253 = arith.addf %172, %252 : vector<16x128xf32>
    %c1_81 = arith.constant 1 : index
    %c0_82 = arith.constant 0 : index
    %c0_83 = arith.constant 0 : index
    %254 = vector.load %arg6[%c1_81, %c0_82, %c0_83] : memref<2x1x128xf32, #tpu.memory_space<vmem>>, vector<1x1x128xf32>
    %255 = vector.shape_cast %254 : vector<1x1x128xf32> to vector<1x128xf32>
    %c1_84 = arith.constant 1 : index
    %c0_85 = arith.constant 0 : index
    %c0_86 = arith.constant 0 : index
    %256 = vector.load %arg7[%c1_84, %c0_85, %c0_86] : memref<2x1x128xf32, #tpu.memory_space<vmem>>, vector<1x1x128xf32>
    %257 = vector.shape_cast %256 : vector<1x1x128xf32> to vector<1x128xf32>
    %cst_87 = arith.constant dense<0.000000e+00> : vector<16xf32>
    %258 = vector.multi_reduction <add>, %253, %cst_87 [1] : vector<16x128xf32> to vector<16xf32>
    %259 = vector.shape_cast %258 : vector<16xf32> to vector<16x1xf32>
    %cst_88 = arith.constant 1.280000e+02 : f32
    %260 = vector.broadcast %cst_88 : f32 to vector<16x1xf32>
    %261 = arith.divf %259, %260 : vector<16x1xf32>
    %262 = vector.broadcast %261 : vector<16x1xf32> to vector<16x128xf32>
    %263 = arith.subf %253, %262 : vector<16x128xf32>
    %264 = arith.mulf %263, %263 : vector<16x128xf32>
    %cst_89 = arith.constant dense<0.000000e+00> : vector<16xf32>
    %265 = vector.multi_reduction <add>, %264, %cst_89 [1] : vector<16x128xf32> to vector<16xf32>
    %266 = vector.shape_cast %265 : vector<16xf32> to vector<16x1xf32>
    %cst_90 = arith.constant 1.280000e+02 : f32
    %267 = vector.broadcast %cst_90 : f32 to vector<16x1xf32>
    %268 = arith.divf %266, %267 : vector<16x1xf32>
    %269 = vector.broadcast %261 : vector<16x1xf32> to vector<16x128xf32>
    %270 = arith.subf %253, %269 : vector<16x128xf32>
    %cst_91 = arith.constant 9.99999996E-13 : f32
    %271 = vector.broadcast %cst_91 : f32 to vector<16x1xf32>
    %272 = arith.addf %268, %271 : vector<16x1xf32>
    %273 = math.rsqrt %272 : vector<16x1xf32>
    %274 = vector.broadcast %273 : vector<16x1xf32> to vector<16x128xf32>
    %275 = arith.mulf %270, %274 : vector<16x128xf32>
    %276 = vector.broadcast %255 : vector<1x128xf32> to vector<16x128xf32>
    %277 = arith.mulf %275, %276 : vector<16x128xf32>
    %278 = vector.broadcast %257 : vector<1x128xf32> to vector<16x128xf32>
    %279 = arith.addf %277, %278 : vector<16x128xf32>
    %280 = arith.truncf %279 : vector<16x128xf32> to vector<16x128xbf16>
    %c1_92 = arith.constant 1 : index
    %c0_93 = arith.constant 0 : index
    %c0_94 = arith.constant 0 : index
    %281 = vector.load %arg8[%c1_92, %c0_93, %c0_94] : memref<2x128x256xbf16, #tpu.memory_space<vmem>>, vector<1x128x256xbf16>
    %282 = vector.shape_cast %281 : vector<1x128x256xbf16> to vector<128x256xbf16>
    %cst_95 = arith.constant dense<0.000000e+00> : vector<16x256xf32>
    %283 = tpu.matmul %280, %282, %cst_95 {dimension_numbers = #tpu.dot_dimension_numbers<[1], [0], [0], [1], [0, 0, 1, 1], [], []>} : vector<16x128xbf16>, vector<128x256xbf16>, vector<16x256xf32> -> vector<16x256xf32>
    %c1_96 = arith.constant 1 : index
    %c0_97 = arith.constant 0 : index
    %c0_98 = arith.constant 0 : index
    %284 = vector.load %arg9[%c1_96, %c0_97, %c0_98] : memref<2x1x256xf32, #tpu.memory_space<vmem>>, vector<1x1x256xf32>
    %285 = vector.shape_cast %284 : vector<1x1x256xf32> to vector<1x256xf32>
    %286 = vector.broadcast %285 : vector<1x256xf32> to vector<16x256xf32>
    %287 = arith.addf %283, %286 : vector<16x256xf32>
    %288 = arith.mulf %287, %287 : vector<16x256xf32>
    %289 = arith.mulf %287, %288 : vector<16x256xf32>
    %cst_99 = arith.constant 4.471500e-02 : f32
    %290 = vector.broadcast %cst_99 : f32 to vector<16x256xf32>
    %291 = arith.mulf %290, %289 : vector<16x256xf32>
    %292 = arith.addf %287, %291 : vector<16x256xf32>
    %cst_100 = arith.constant 0.797884583 : f32
    %293 = vector.broadcast %cst_100 : f32 to vector<16x256xf32>
    %294 = arith.mulf %293, %292 : vector<16x256xf32>
    %295 = math.tanh %294 : vector<16x256xf32>
    %cst_101 = arith.constant 1.000000e+00 : f32
    %296 = vector.broadcast %cst_101 : f32 to vector<16x256xf32>
    %297 = arith.addf %296, %295 : vector<16x256xf32>
    %cst_102 = arith.constant 5.000000e-01 : f32
    %298 = vector.broadcast %cst_102 : f32 to vector<16x256xf32>
    %299 = arith.mulf %298, %297 : vector<16x256xf32>
    %300 = arith.mulf %287, %299 : vector<16x256xf32>
    %301 = arith.truncf %300 : vector<16x256xf32> to vector<16x256xbf16>
    %c1_103 = arith.constant 1 : index
    %c0_104 = arith.constant 0 : index
    %c0_105 = arith.constant 0 : index
    %302 = vector.load %arg10[%c1_103, %c0_104, %c0_105] : memref<2x256x128xbf16, #tpu.memory_space<vmem>>, vector<1x256x128xbf16>
    %303 = vector.shape_cast %302 : vector<1x256x128xbf16> to vector<256x128xbf16>
    %cst_106 = arith.constant dense<0.000000e+00> : vector<16x128xf32>
    %304 = tpu.matmul %301, %303, %cst_106 {dimension_numbers = #tpu.dot_dimension_numbers<[1], [0], [0], [1], [0, 0, 1, 1], [], []>} : vector<16x256xbf16>, vector<256x128xbf16>, vector<16x128xf32> -> vector<16x128xf32>
    %c1_107 = arith.constant 1 : index
    %c0_108 = arith.constant 0 : index
    %c0_109 = arith.constant 0 : index
    %305 = vector.load %arg11[%c1_107, %c0_108, %c0_109] : memref<2x1x128xf32, #tpu.memory_space<vmem>>, vector<1x1x128xf32>
    %306 = vector.shape_cast %305 : vector<1x1x128xf32> to vector<1x128xf32>
    %307 = vector.broadcast %306 : vector<1x128xf32> to vector<16x128xf32>
    %308 = arith.addf %304, %307 : vector<16x128xf32>
    %309 = arith.addf %279, %308 : vector<16x128xf32>
    %c1_110 = arith.constant 1 : index
    %c0_111 = arith.constant 0 : index
    %c0_112 = arith.constant 0 : index
    %310 = vector.load %arg12[%c1_110, %c0_111, %c0_112] : memref<2x1x128xf32, #tpu.memory_space<vmem>>, vector<1x1x128xf32>
    %311 = vector.shape_cast %310 : vector<1x1x128xf32> to vector<1x128xf32>
    %c1_113 = arith.constant 1 : index
    %c0_114 = arith.constant 0 : index
    %c0_115 = arith.constant 0 : index
    %312 = vector.load %arg13[%c1_113, %c0_114, %c0_115] : memref<2x1x128xf32, #tpu.memory_space<vmem>>, vector<1x1x128xf32>
    %313 = vector.shape_cast %312 : vector<1x1x128xf32> to vector<1x128xf32>
    %cst_116 = arith.constant dense<0.000000e+00> : vector<16xf32>
    %314 = vector.multi_reduction <add>, %309, %cst_116 [1] : vector<16x128xf32> to vector<16xf32>
    %315 = vector.shape_cast %314 : vector<16xf32> to vector<16x1xf32>
    %cst_117 = arith.constant 1.280000e+02 : f32
    %316 = vector.broadcast %cst_117 : f32 to vector<16x1xf32>
    %317 = arith.divf %315, %316 : vector<16x1xf32>
    %318 = vector.broadcast %317 : vector<16x1xf32> to vector<16x128xf32>
    %319 = arith.subf %309, %318 : vector<16x128xf32>
    %320 = arith.mulf %319, %319 : vector<16x128xf32>
    %cst_118 = arith.constant dense<0.000000e+00> : vector<16xf32>
    %321 = vector.multi_reduction <add>, %320, %cst_118 [1] : vector<16x128xf32> to vector<16xf32>
    %322 = vector.shape_cast %321 : vector<16xf32> to vector<16x1xf32>
    %cst_119 = arith.constant 1.280000e+02 : f32
    %323 = vector.broadcast %cst_119 : f32 to vector<16x1xf32>
    %324 = arith.divf %322, %323 : vector<16x1xf32>
    %325 = vector.broadcast %317 : vector<16x1xf32> to vector<16x128xf32>
    %326 = arith.subf %309, %325 : vector<16x128xf32>
    %cst_120 = arith.constant 9.99999996E-13 : f32
    %327 = vector.broadcast %cst_120 : f32 to vector<16x1xf32>
    %328 = arith.addf %324, %327 : vector<16x1xf32>
    %329 = math.rsqrt %328 : vector<16x1xf32>
    %330 = vector.broadcast %329 : vector<16x1xf32> to vector<16x128xf32>
    %331 = arith.mulf %326, %330 : vector<16x128xf32>
    %332 = vector.broadcast %311 : vector<1x128xf32> to vector<16x128xf32>
    %333 = arith.mulf %331, %332 : vector<16x128xf32>
    %334 = vector.broadcast %313 : vector<1x128xf32> to vector<16x128xf32>
    %335 = arith.addf %333, %334 : vector<16x128xf32>
    %336 = vector.shape_cast %335 : vector<16x128xf32> to vector<2x8x128xf32>
    %337 = vector.shape_cast %1 : vector<2x8xf32> to vector<2x8x1xf32>
    %338 = vector.broadcast %337 : vector<2x8x1xf32> to vector<2x8x128xf32>
    %339 = arith.mulf %336, %338 : vector<2x8x128xf32>
    %cst_121 = arith.constant dense<0.000000e+00> : vector<2x128xf32>
    %340 = vector.multi_reduction <add>, %339, %cst_121 [1] : vector<2x8x128xf32> to vector<2x128xf32>
    %cst_122 = arith.constant dense<0.000000e+00> : vector<2xf32>
    %341 = vector.multi_reduction <add>, %1, %cst_122 [1] : vector<2x8xf32> to vector<2xf32>
    %342 = vector.shape_cast %341 : vector<2xf32> to vector<2x1xf32>
    %cst_123 = arith.constant 9.99999971E-10 : f32
    %343 = vector.broadcast %cst_123 : f32 to vector<2x1xf32>
    %344 = arith.maximumf %342, %343 : vector<2x1xf32>
    %345 = tpu.reciprocal %344 {approx = true} : vector<2x1xf32> -> vector<2x1xf32>
    %346 = vector.broadcast %345 : vector<2x1xf32> to vector<2x128xf32>
    %347 = arith.mulf %340, %346 : vector<2x128xf32>
    %348 = arith.mulf %347, %347 : vector<2x128xf32>
    %cst_124 = arith.constant dense<0.000000e+00> : vector<2xf32>
    %349 = vector.multi_reduction <add>, %348, %cst_124 [1] : vector<2x128xf32> to vector<2xf32>
    %350 = vector.shape_cast %349 : vector<2xf32> to vector<2x1xf32>
    %cst_125 = arith.constant 1.000000e-24 : f32
    %351 = vector.broadcast %cst_125 : f32 to vector<2x1xf32>
    %352 = arith.maximumf %350, %351 : vector<2x1xf32>
    %353 = math.rsqrt %352 : vector<2x1xf32>
    %354 = vector.broadcast %353 : vector<2x1xf32> to vector<2x128xf32>
    %355 = arith.mulf %347, %354 : vector<2x128xf32>
    %c0_126 = arith.constant 0 : index
    %c0_127 = arith.constant 0 : index
    %356 = vector.load %arg14[%c0_126, %c0_127] : memref<2x128xf32, #tpu.memory_space<vmem>>, vector<2x128xf32>
    tpu.vector_store %arg14[%c0_126, %c0_127], %355 {strides = array<i32>} : memref<2x128xf32, #tpu.memory_space<vmem>>, vector<2x128xf32>,
    return
  }
}

</mosaic_0001>

<llo_original>
// kernel: _lambda_.1
$region0: #{_lambda_.1}
  #allocation0 [shape = 'u32[]', space=smem, size = 0x4, offset = 0x4, fixed_abs, tag = 'smem constant byte address 0x4 - core index']
  #allocation1 [shape = 'u32[144,128]{1,0:T(1,128)}', space=vmem, size = 0x12000, scoped, tag = 'internal scratch']
  %s0 = inlined_call_operand.vmem [shape: f32[16,128], index: 0, kind: input, shape index: {}]
  %s1 = inlined_call_operand.vmem [shape: f32[2,8], index: 1, kind: input, shape index: {}]
  %s2 = inlined_call_operand.hbm [shape: bf16[2,128,384], index: 2, kind: input, shape index: {}]
  %s3 = inlined_call_operand.vmem [shape: f32[2,1,384], index: 3, kind: input, shape index: {}]
  %s4 = inlined_call_operand.vmem [shape: bf16[2,128,128], index: 4, kind: input, shape index: {}]
  %s5 = inlined_call_operand.vmem [shape: f32[2,1,128], index: 5, kind: input, shape index: {}]
  %s6 = inlined_call_operand.vmem [shape: f32[2,1,128], index: 6, kind: input, shape index: {}]
  %s7 = inlined_call_operand.vmem [shape: f32[2,1,128], index: 7, kind: input, shape index: {}]
  %s8 = inlined_call_operand.vmem [shape: bf16[2,128,256], index: 8, kind: input, shape index: {}]
  %s9 = inlined_call_operand.vmem [shape: f32[2,1,256], index: 9, kind: input, shape index: {}]
  %s10 = inlined_call_operand.hbm [shape: bf16[2,256,128], index: 10, kind: input, shape index: {}]
  %s11 = inlined_call_operand.vmem [shape: f32[2,1,128], index: 11, kind: input, shape index: {}]
  %s12 = inlined_call_operand.vmem [shape: f32[2,1,128], index: 12, kind: input, shape index: {}]
  %s13 = inlined_call_operand.vmem [shape: f32[2,1,128], index: 13, kind: input, shape index: {}]
  %s14 = inlined_call_operand.hbm [shape: f32[2,128], index: 14, kind: output, shape index: {}]
  %s15 = sld [smem:[#allocation0]]
  $region74: #{_lambda_.1} parent=0
    _
  %s17 = ssub.s32 1, %s15
  %s18 = scalar_select 0, %s17, %s15
  $region1: #{_lambda_.1} parent=0
    #allocation2 [shape = 'u8[196608]{0}', space=vmem, size = 0x30000, scoped, tag = 'input window, operand 2, single buffered']
    #allocation3 [shape = 's32[1]{0}', space=sflag, size = 0x4, scoped, tag = 'scoped memory for _lambda_.1']
    #allocation4 [shape = 's32[1]{0}', space=sflag, size = 0x4, scoped, tag = 'scoped memory for _lambda_.1']
    #allocation5 [shape = 'u8[131072]{0}', space=vmem, size = 0x20000, scoped, tag = 'input window, operand 10, single buffered']
    #allocation6 [shape = 's32[1]{0}', space=sflag, size = 0x4, scoped, tag = 'scoped memory for _lambda_.1']
    #allocation7 [shape = 'u8[1024]{0}', space=vmem, size = 0x400, scoped, tag = 'output window, operand 0, single buffered']
    %19 = vsyncpa [#allocation3], 0
    %20 = vsyncpa [#allocation6], 0
    %21 = vsyncpa [#allocation4], 0
    // Predicated region
    $region2: #{_lambda_.1} parent=1 // pred_check
      _
    $region3: #{_lambda_.1} parent=1 // pred_check_branch
      %23 = sbr.rel (0) target = $region5
    $region4: #{_lambda_.1} parent=1 // pred_region
      _
    $region5: #{_lambda_.1} parent=1 // pred_fallthru
      _
    // Predicated region
    $region6: #{_lambda_.1} parent=1 // pred_check
      _
    $region7: #{_lambda_.1} parent=1 // pred_check_branch
      %25 = sbr.rel (0) target = $region9
    $region8: #{_lambda_.1} parent=1 // pred_region
      _
    $region9: #{_lambda_.1} parent=1 // pred_fallthru
      _
    // Predicated region
    $region10: #{_lambda_.1} parent=1 // pred_check
      _
    $region11: #{_lambda_.1} parent=1 // pred_check_branch
      %27 = sbr.rel (0) target = $region13
    $region12: #{_lambda_.1} parent=1 // pred_region
      %s29 = ssub.s32 6144, 6144
      %30 = vsyncadd [#allocation3], %s29
      %s31 = sshll.u32 [#allocation2], 4
      %s32 = int_to_ptr.vmem [resolvable:$true] %s31
      %37 = dma.hbm_to_vmem [thread:$0]  %s2, 6144, %s32, [#allocation3], 192, 192, 12
    $region13: #{_lambda_.1} parent=1 // pred_fallthru
      _
    // Predicated region
    $region14: #{_lambda_.1} parent=1 // pred_check
      _
    $region15: #{_lambda_.1} parent=1 // pred_check_branch
      %39 = sbr.rel (0) target = $region17
    $region16: #{_lambda_.1} parent=1 // pred_region
      _
    $region17: #{_lambda_.1} parent=1 // pred_fallthru
      _
    // Predicated region
    $region18: #{_lambda_.1} parent=1 // pred_check
      _
    $region19: #{_lambda_.1} parent=1 // pred_check_branch
      %41 = sbr.rel (0) target = $region21
    $region20: #{_lambda_.1} parent=1 // pred_region
      _
    $region21: #{_lambda_.1} parent=1 // pred_fallthru
      _
    // Predicated region
    $region22: #{_lambda_.1} parent=1 // pred_check
      _
    $region23: #{_lambda_.1} parent=1 // pred_check_branch
      %43 = sbr.rel (0) target = $region25
    $region24: #{_lambda_.1} parent=1 // pred_region
      _
    $region25: #{_lambda_.1} parent=1 // pred_fallthru
      _
    // Predicated region
    $region26: #{_lambda_.1} parent=1 // pred_check
      _
    $region27: #{_lambda_.1} parent=1 // pred_check_branch
      %45 = sbr.rel (0) target = $region29
    $region28: #{_lambda_.1} parent=1 // pred_region
      _
    $region29: #{_lambda_.1} parent=1 // pred_fallthru
      _
    // Predicated region
    $region30: #{_lambda_.1} parent=1 // pred_check
      _
    $region31: #{_lambda_.1} parent=1 // pred_check_branch
      %47 = sbr.rel (0) target = $region33
    $region32: #{_lambda_.1} parent=1 // pred_region
      _
    $region33: #{_lambda_.1} parent=1 // pred_fallthru
      _
    // Predicated region
    $region34: #{_lambda_.1} parent=1 // pred_check
      _
    $region35: #{_lambda_.1} parent=1 // pred_check_branch
      %49 = sbr.rel (0) target = $region37
    $region36: #{_lambda_.1} parent=1 // pred_region
      _
    $region37: #{_lambda_.1} parent=1 // pred_fallthru
      _
    // Predicated region
    $region38: #{_lambda_.1} parent=1 // pred_check
      _
    $region39: #{_lambda_.1} parent=1 // pred_check_branch
      %51 = sbr.rel (0) target = $region41
    $region40: #{_lambda_.1} parent=1 // pred_region
      _
    $region41: #{_lambda_.1} parent=1 // pred_fallthru
      _
    // Predicated region
    $region42: #{_lambda_.1} parent=1 // pred_check
      _
    $region43: #{_lambda_.1} parent=1 // pred_check_branch
      %53 = sbr.rel (0) target = $region45
    $region44: #{_lambda_.1} parent=1 // pred_region
      %s55 = ssub.s32 4096, 4096
      %56 = vsyncadd [#allocation6], %s55
      %s57 = sshll.u32 [#allocation5], 4
      %s58 = int_to_ptr.vmem [resolvable:$true] %s57
      %63 = dma.hbm_to_vmem [thread:$0]  %s10, 4096, %s58, [#allocation6], 64, 64, 4
    $region45: #{_lambda_.1} parent=1 // pred_fallthru
      _
    // Predicated region
    $region46: #{_lambda_.1} parent=1 // pred_check
      _
    $region47: #{_lambda_.1} parent=1 // pred_check_branch
      %65 = sbr.rel (0) target = $region49
    $region48: #{_lambda_.1} parent=1 // pred_region
      _
    $region49: #{_lambda_.1} parent=1 // pred_fallthru
      _
    // Predicated region
    $region50: #{_lambda_.1} parent=1 // pred_check
      _
    $region51: #{_lambda_.1} parent=1 // pred_check_branch
      %67 = sbr.rel (0) target = $region53
    $region52: #{_lambda_.1} parent=1 // pred_region
      _
    $region53: #{_lambda_.1} parent=1 // pred_fallthru
      _
    // Predicated region
    $region54: #{_lambda_.1} parent=1 // pred_check
      _
    $region55: #{_lambda_.1} parent=1 // pred_check_branch
      %69 = sbr.rel (0) target = $region57
    $region56: #{_lambda_.1} parent=1 // pred_region
      _
    $region57: #{_lambda_.1} parent=1 // pred_fallthru
      _
    // Predicated region
    $region58: #{_lambda_.1} parent=1 // pred_check
      _
    $region59: #{_lambda_.1} parent=1 // pred_check_branch
      %71 = sbr.rel (0) target = $region61
    $region60: #{_lambda_.1} parent=1 // pred_region
      %72 = dma.done [#allocation3], 6144
    $region61: #{_lambda_.1} parent=1 // pred_fallthru
      _
    // Predicated region
    $region62: #{_lambda_.1} parent=1 // pred_check
      _
    $region63: #{_lambda_.1} parent=1 // pred_check_branch
      %74 = sbr.rel (0) target = $region65
    $region64: #{_lambda_.1} parent=1 // pred_region
      %75 = dma.done [#allocation6], 4096
    $region65: #{_lambda_.1} parent=1 // pred_fallthru
      _
    %v77 = vld [vmem:[%s0] sm:$0xff]
    %v78 = vld [vmem:[%s0 + $0x8] sm:$0xff]
    %v79 = vld [vmem:[%s1] sm:$0x3]
    %v80 = vsub.f32 1.0, %v79
    %v81 = vmul.f32 %v80, -1e+09
    %v84 = vunpack.c.l.s4 1966171168
    %v85 = vunpack.c.0.s8 %v84
    %v86 = vlaneseq
    %v87 = vshrl.u32 %v86, 7
    %v88 = vsub.s32 %v85, %v87
    %v89 = vrot.slane %v81, %v88
    %v90 = vcombine.high %v89, %v89
    %v92 = vunpack.c.l.s4 1966171168
    %v93 = vunpack.c.0.s8 %v92
    %v94 = vlaneseq
    %v95 = vshrl.u32 %v94, 7
    %v96 = vsub.s32 %v93, %v95
    %v97 = vrot.slane %v89, %v96
    %v99 = vunpack.c.l.s4 1966171168
    %v100 = vunpack.c.0.s8 %v99
    %v101 = vlaneseq
    %v102 = vshrl.u32 %v101, 7
    %v103 = vsub.s32 %v100, %v102
    %v104 = vrot.slane %v90, %v103
    %v105 = vpack.c.bf16 %v78, %v77
    %v106 = vld [vmem:[#allocation2] sm:$0xff]
    %v107 = vld [vmem:[#allocation2 + $0x8] sm:$0xf]
    %v108 = vld [vmem:[#allocation2 + $0xc] sm:$0xff]
    %v109 = vld [vmem:[#allocation2 + $0x14] sm:$0xf]
    %v110 = vld [vmem:[#allocation2 + $0x18] sm:$0xff]
    %v111 = vld [vmem:[#allocation2 + $0x20] sm:$0xf]
    %v112 = vld [vmem:[#allocation2 + $0x24] sm:$0xff]
    %v113 = vld [vmem:[#allocation2 + $0x2c] sm:$0xf]
    %v114 = vld [vmem:[#allocation2 + $0x30] sm:$0xff]
    %v115 = vld [vmem:[#allocation2 + $0x38] sm:$0xf]
    %v116 = vld [vmem:[#allocation2 + $0x3c] sm:$0xff]
    %v117 = vld [vmem:[#allocation2 + $0x44] sm:$0xf]
    %v118 = vld [vmem:[#allocation2 + $0x48] sm:$0xff]
    %v119 = vld [vmem:[#allocation2 + $0x50] sm:$0xf]
    %v120 = vld [vmem:[#allocation2 + $0x54] sm:$0xff]
    %v121 = vld [vmem:[#allocation2 + $0x5c] sm:$0xf]
    %v122 = vld [vmem:[#allocation2 + $0x60] sm:$0xff]
    %v123 = vld [vmem:[#allocation2 + $0x68] sm:$0xf]
    %v124 = vld [vmem:[#allocation2 + $0x6c] sm:$0xff]
    %v125 = vld [vmem:[#allocation2 + $0x74] sm:$0xf]
    %v126 = vld [vmem:[#allocation2 + $0x78] sm:$0xff]
    %v127 = vld [vmem:[#allocation2 + $0x80] sm:$0xf]
    %v128 = vld [vmem:[#allocation2 + $0x84] sm:$0xff]
    %v129 = vld [vmem:[#allocation2 + $0x8c] sm:$0xf]
    %v130 = vld [vmem:[#allocation2 + $0x90] sm:$0xff]
    %v131 = vld [vmem:[#allocation2 + $0x98] sm:$0xf]
    %v132 = vld [vmem:[#allocation2 + $0x9c] sm:$0xff]
    %v133 = vld [vmem:[#allocation2 + $0xa4] sm:$0xf]
    %v134 = vld [vmem:[#allocation2 + $0xa8] sm:$0xff]
    %v135 = vld [vmem:[#allocation2 + $0xb0] sm:$0xf]
    %v136 = vld [vmem:[#allocation2 + $0xb4] sm:$0xff]
    %v137 = vld [vmem:[#allocation2 + $0xbc] sm:$0xf]
    %v138 = vld [vmem:[%s3] sm:$0x7]
    %v140 = vlaneseq
    %v141 = vshrl.u32 %v140, 7
    %v142 = vsub.s32 0, %v141
    %v143 = vrot.slane %v138, %v142
    %v144 = vlaneseq
    %v145 = vshrl.u32 %v144, 7
    %v146 = vsub.s32 1, %v145
    %v147 = vrot.slane %v138, %v146
    %v148 = vlaneseq
    %v149 = vshrl.u32 %v148, 7
    %v150 = vsub.s32 2, %v149
    %v151 = vrot.slane %v138, %v150
    %v187 = vunpack.c.l.b16 %v106
    %v188 = vunpack.c.h.b16 %v106
    %v189 = vunpack.c.l.b16 %v107
    %v190 = vunpack.c.l.b16 %v108
    %v191 = vunpack.c.h.b16 %v108
    %v192 = vunpack.c.l.b16 %v109
    %v193 = vunpack.c.l.b16 %v110
    %v194 = vunpack.c.h.b16 %v110
    %v195 = vunpack.c.l.b16 %v111
    %v196 = vunpack.c.l.b16 %v112
    %v197 = vunpack.c.h.b16 %v112
    %v198 = vunpack.c.l.b16 %v113
    %v199 = vunpack.c.l.b16 %v114
    %v200 = vunpack.c.h.b16 %v114
    %v201 = vunpack.c.l.b16 %v115
    %v202 = vunpack.c.l.b16 %v116
    %v203 = vunpack.c.h.b16 %v116
    %v204 = vunpack.c.l.b16 %v117
    %v205 = vunpack.c.l.b16 %v118
    %v206 = vunpack.c.h.b16 %v118
    %v207 = vunpack.c.l.b16 %v119
    %v208 = vunpack.c.l.b16 %v120
    %v209 = vunpack.c.h.b16 %v120
    %v210 = vunpack.c.l.b16 %v121
    %v211 = vunpack.c.l.b16 %v122
    %v212 = vunpack.c.h.b16 %v122
    %v213 = vunpack.c.l.b16 %v123
    %v214 = vunpack.c.l.b16 %v124
    %v215 = vunpack.c.h.b16 %v124
    %v216 = vunpack.c.l.b16 %v125
    %v217 = vunpack.c.l.b16 %v126
    %v218 = vunpack.c.h.b16 %v126
    %v219 = vunpack.c.l.b16 %v127
    %v220 = vunpack.c.l.b16 %v128
    %v221 = vunpack.c.h.b16 %v128
    %v222 = vunpack.c.l.b16 %v129
    %v223 = vunpack.c.l.b16 %v130
    %v224 = vunpack.c.h.b16 %v130
    %v225 = vunpack.c.l.b16 %v131
    %v226 = vunpack.c.l.b16 %v132
    %v227 = vunpack.c.h.b16 %v132
    %v228 = vunpack.c.l.b16 %v133
    %v229 = vunpack.c.l.b16 %v134
    %v230 = vunpack.c.h.b16 %v134
    %v231 = vunpack.c.l.b16 %v135
    %v232 = vunpack.c.l.b16 %v136
    %v233 = vunpack.c.h.b16 %v136
    %v234 = vunpack.c.l.b16 %v137
    %v235 = vpack.c.b16 %v190, %v187
    %v236 = vpack.c.b16 %v191, %v188
    %v237 = vpack.c.b16 %v192, %v189
    %v238 = vpack.c.b16 %v196, %v193
    %v239 = vpack.c.b16 %v197, %v194
    %v240 = vpack.c.b16 %v198, %v195
    %v241 = vpack.c.b16 %v202, %v199
    %v242 = vpack.c.b16 %v203, %v200
    %v243 = vpack.c.b16 %v204, %v201
    %v244 = vpack.c.b16 %v208, %v205
    %v245 = vpack.c.b16 %v209, %v206
    %v246 = vpack.c.b16 %v210, %v207
    %v247 = vpack.c.b16 %v214, %v211
    %v248 = vpack.c.b16 %v215, %v212
    %v249 = vpack.c.b16 %v216, %v213
    %v250 = vpack.c.b16 %v220, %v217
    %v251 = vpack.c.b16 %v221, %v218
    %v252 = vpack.c.b16 %v222, %v219
    %v253 = vpack.c.b16 %v226, %v223
    %v254 = vpack.c.b16 %v227, %v224
    %v255 = vpack.c.b16 %v228, %v225
    %v256 = vpack.c.b16 %v232, %v229
    %v257 = vpack.c.b16 %v233, %v230
    %v258 = vpack.c.b16 %v234, %v231
    %283 = vmatprep.subr.bf16.mxu0 %v257
    %284 = vmatpush1.bf16.msra.mxu0 %v256
    %285 = vmatprep.subr.bf16.mxu0 %v254
    %286 = vmatpush1.bf16.msra.mxu0 %v253
    %287 = vmatprep.subr.bf16.mxu0 %v251
    %288 = vmatpush1.bf16.msra.mxu0 %v250
    %289 = vmatprep.subr.bf16.mxu0 %v248
    %290 = vmatpush1.bf16.msra.mxu0 %v247
    %291 = vmatprep.subr.bf16.mxu0 %v245
    %292 = vmatpush1.bf16.msra.mxu0 %v244
    %293 = vmatprep.subr.bf16.mxu0 %v242
    %294 = vmatpush1.bf16.msra.mxu0 %v241
    %295 = vmatprep.subr.bf16.mxu0 %v239
    %296 = vmatpush1.bf16.msra.mxu0 %v238
    %297 = vmatprep.subr.bf16.mxu0 %v236
    %298 = vmatpush1.bf16.msra.mxu0 %v235
    %299 = vmatprep.subr.bf16.mxu0 0
    %300 = vmatpush2.bf16.msra.mxu0 0
    %301 = vmatprep.subr.bf16.mxu0 0
    %302 = vmatpush2.bf16.msra.mxu0 0
    %303 = vmatprep.subr.bf16.mxu0 0
    %304 = vmatpush2.bf16.msra.mxu0 0
    %305 = vmatprep.subr.bf16.mxu0 0
    %306 = vmatpush2.bf16.msra.mxu0 0
    %307 = vmatprep.subr.bf16.mxu0 0
    %308 = vmatpush2.bf16.msra.mxu0 0
    %309 = vmatprep.subr.bf16.mxu0 0
    %310 = vmatpush2.bf16.msra.mxu0 0
    %311 = vmatprep.subr.bf16.mxu0 0
    %312 = vmatpush2.bf16.msra.mxu0 0
    %313 = vmatprep.subr.bf16.mxu0 0
    %314 = vmatpush2.bf16.msra.mxu0 0
    %315 = vmatprep.mubr.bf16.mxu0 0
    %316 = vmatmul.mubr.bf16.gmra.mxu0 %v105
    %v317 = vpop.f32.mrf.mxu0
    %v318 = vadd.f32 %v143, %v317
    %v319 = vpop.f32.mrf.mxu0
    %v320 = vadd.f32 %v147, %v319
    %v321 = vpop.f32.mrf.mxu0
    %v322 = vadd.f32 %v143, %v321
    %v323 = vpop.f32.mrf.mxu0
    %v324 = vadd.f32 %v147, %v323
    %325 = vdwg.mxu0
    %326 = vmatprep.subr.bf16.mxu0 0
    %327 = vmatpush1.bf16.msra.mxu0 %v258
    %328 = vmatprep.subr.bf16.mxu0 0
    %329 = vmatpush1.bf16.msra.mxu0 %v255
    %330 = vmatprep.subr.bf16.mxu0 0
    %331 = vmatpush1.bf16.msra.mxu0 %v252
    %332 = vmatprep.subr.bf16.mxu0 0
    %333 = vmatpush1.bf16.msra.mxu0 %v249
    %334 = vmatprep.subr.bf16.mxu0 0
    %335 = vmatpush1.bf16.msra.mxu0 %v246
    %336 = vmatprep.subr.bf16.mxu0 0
    %337 = vmatpush1.bf16.msra.mxu0 %v243
    %338 = vmatprep.subr.bf16.mxu0 0
    %339 = vmatpush1.bf16.msra.mxu0 %v240
    %340 = vmatprep.subr.bf16.mxu0 0
    %341 = vmatpush1.bf16.msra.mxu0 %v237
    %342 = vmatprep.subr.bf16.mxu0 0
    %343 = vmatpush2.bf16.msra.mxu0 0
    %344 = vmatprep.subr.bf16.mxu0 0
    %345 = vmatpush2.bf16.msra.mxu0 0
    %346 = vmatprep.subr.bf16.mxu0 0
    %347 = vmatpush2.bf16.msra.mxu0 0
    %348 = vmatprep.subr.bf16.mxu0 0
    %349 = vmatpush2.bf16.msra.mxu0 0
    %350 = vmatprep.subr.bf16.mxu0 0
    %351 = vmatpush2.bf16.msra.mxu0 0
    %352 = vmatprep.subr.bf16.mxu0 0
    %353 = vmatpush2.bf16.msra.mxu0 0
    %354 = vmatprep.subr.bf16.mxu0 0
    %355 = vmatpush2.bf16.msra.mxu0 0
    %356 = vmatprep.subr.bf16.mxu0 0
    %357 = vmatpush2.bf16.msra.mxu0 0
    %358 = vmatprep.mubr.bf16.mxu0 0
    %359 = vmatmul.mubr.bf16.gmra.mxu0 %v105
    %v360 = vpop.f32.mrf.mxu0
    %v361 = vadd.f32 %v151, %v360
    %v362 = vpop.f32.mrf.mxu0
    %v363 = vpop.f32.mrf.mxu0
    %v364 = vadd.f32 %v151, %v363
    %v365 = vpop.f32.mrf.mxu0
    %366 = vdwg.mxu0
    %v367 = vpack.c.bf16 %v322, %v318
    %v368 = vpack.c.bf16 %v324, %v320
    %v369 = vpack.c.bf16 %v364, %v361
    %v371 = vunpack.c.l.b16 %v367
    %v372 = vunpack.c.h.b16 %v367
    %v373 = vpack.c.b16 %v371, %v371
    %v374 = vpack.c.b16 %v372, %v372
    %375 = vrot.lane.b32.xlu0 %v373, 96
    %v376 = vpop.permute.xlu0 %375
    %377 = vrot.lane.b32.xlu0 %v374, 96
    %v378 = vpop.permute.xlu0 %377
    %379 = vrot.lane.b32.xlu0 %v373, 64
    %v380 = vpop.permute.xlu0 %379
    %381 = vrot.lane.b32.xlu0 %v374, 64
    %v382 = vpop.permute.xlu0 %381
    %383 = vrot.lane.b32.xlu0 %v373, 32
    %v384 = vpop.permute.xlu0 %383
    %385 = vrot.lane.b32.xlu0 %v374, 32
    %v386 = vpop.permute.xlu0 %385
    %v388 = vunpack.c.l.b16 %v368
    %v389 = vunpack.c.h.b16 %v368
    %v390 = vpack.c.b16 %v388, %v388
    %v391 = vpack.c.b16 %v389, %v389
    %392 = vrot.lane.b32.xlu0 %v390, 96
    %v393 = vpop.permute.xlu0 %392
    %394 = vrot.lane.b32.xlu0 %v391, 96
    %v395 = vpop.permute.xlu0 %394
    %396 = vrot.lane.b32.xlu0 %v390, 64
    %v397 = vpop.permute.xlu0 %396
    %398 = vrot.lane.b32.xlu0 %v391, 64
    %v399 = vpop.permute.xlu0 %398
    %400 = vrot.lane.b32.xlu0 %v390, 32
    %v401 = vpop.permute.xlu0 %400
    %402 = vrot.lane.b32.xlu0 %v391, 32
    %v403 = vpop.permute.xlu0 %402
    %v405 = vunpack.c.l.b16 %v369
    %v406 = vunpack.c.h.b16 %v369
    %v407 = vpack.c.b16 %v405, %v405
    %v408 = vpack.c.b16 %v406, %v406
    %409 = vrot.lane.b32.xlu0 %v407, 96
    %v410 = vpop.permute.xlu0 %409
    %411 = vrot.lane.b32.xlu0 %v408, 96
    %v412 = vpop.permute.xlu0 %411
    %413 = vrot.lane.b32.xlu0 %v407, 64
    %v414 = vpop.permute.xlu0 %413
    %415 = vrot.lane.b32.xlu0 %v408, 64
    %v416 = vpop.permute.xlu0 %415
    %417 = vrot.lane.b32.xlu0 %v407, 32
    %v418 = vpop.permute.xlu0 %417
    %419 = vrot.lane.b32.xlu0 %v408, 32
    %v420 = vpop.permute.xlu0 %419
    %vm421 = vcmask 261120
    %v423 = vsel %vm421, %v373, 0
    %v426 = vsel %vm421, %v390, 0
    %428 = vmatprep.subr.bf16.mxu0 0
    %429 = vmatpush1.bf16.xpose.msra.mxu0 0
    %430 = vmatprep.subr.bf16.mxu0 0
    %431 = vmatpush1.bf16.xpose.msra.mxu0 0
    %432 = vmatprep.subr.bf16.mxu0 0
    %433 = vmatpush1.bf16.xpose.msra.mxu0 0
    %434 = vmatprep.subr.bf16.mxu0 0
    %435 = vmatpush1.bf16.xpose.msra.mxu0 0
    %436 = vmatprep.subr.bf16.mxu0 0
    %437 = vmatpush1.bf16.xpose.msra.mxu0 0
    %438 = vmatprep.subr.bf16.mxu0 0
    %439 = vmatpush1.bf16.xpose.msra.mxu0 0
    %440 = vmatprep.subr.bf16.mxu0 0
    %441 = vmatpush1.bf16.xpose.msra.mxu0 0
    %442 = vmatprep.subr.bf16.mxu0 0
    %443 = vmatpush1.bf16.xpose.msra.mxu0 %v426
    %444 = vmatprep.subr.bf16.mxu0 0
    %445 = vmatpush2.bf16.xpose.msra.mxu0 0
    %446 = vmatprep.subr.bf16.mxu0 0
    %447 = vmatpush2.bf16.xpose.msra.mxu0 0
    %448 = vmatprep.subr.bf16.mxu0 0
    %449 = vmatpush2.bf16.xpose.msra.mxu0 0
    %450 = vmatprep.subr.bf16.mxu0 0
    %451 = vmatpush2.bf16.xpose.msra.mxu0 0
    %452 = vmatprep.subr.bf16.mxu0 0
    %453 = vmatpush2.bf16.xpose.msra.mxu0 0
    %454 = vmatprep.subr.bf16.mxu0 0
    %455 = vmatpush2.bf16.xpose.msra.mxu0 0
    %456 = vmatprep.subr.bf16.mxu0 0
    %457 = vmatpush2.bf16.xpose.msra.mxu0 0
    %458 = vmatprep.subr.bf16.mxu0 0
    %459 = vmatpush2.bf16.xpose.msra.mxu0 0
    %460 = vmatprep.mubr.bf16.mxu0 0
    %461 = vmatmul.mubr.bf16.gmra.mxu0 %v423
    %v462 = vpop.f32.mrf.mxu0
    %v463 = vadd.f32 0.0, %v462
    %v464 = vpop.f32.mrf.mxu0
    %v465 = vpop.f32.mrf.mxu0
    %v466 = vpop.f32.mrf.mxu0
    %467 = vdwg.mxu0
    %v469 = vsel %vm421, %v376, 0
    %v472 = vsel %vm421, %v393, 0
    %474 = vmatprep.subr.bf16.mxu0 0
    %475 = vmatpush1.bf16.xpose.msra.mxu0 0
    %476 = vmatprep.subr.bf16.mxu0 0
    %477 = vmatpush1.bf16.xpose.msra.mxu0 0
    %478 = vmatprep.subr.bf16.mxu0 0
    %479 = vmatpush1.bf16.xpose.msra.mxu0 0
    %480 = vmatprep.subr.bf16.mxu0 0
    %481 = vmatpush1.bf16.xpose.msra.mxu0 0
    %482 = vmatprep.subr.bf16.mxu0 0
    %483 = vmatpush1.bf16.xpose.msra.mxu0 0
    %484 = vmatprep.subr.bf16.mxu0 0
    %485 = vmatpush1.bf16.xpose.msra.mxu0 0
    %486 = vmatprep.subr.bf16.mxu0 0
    %487 = vmatpush1.bf16.xpose.msra.mxu0 0
    %488 = vmatprep.subr.bf16.mxu0 0
    %489 = vmatpush1.bf16.xpose.msra.mxu0 %v472
    %490 = vmatprep.subr.bf16.mxu0 0
    %491 = vmatpush2.bf16.xpose.msra.mxu0 0
    %492 = vmatprep.subr.bf16.mxu0 0
    %493 = vmatpush2.bf16.xpose.msra.mxu0 0
    %494 = vmatprep.subr.bf16.mxu0 0
    %495 = vmatpush2.bf16.xpose.msra.mxu0 0
    %496 = vmatprep.subr.bf16.mxu0 0
    %497 = vmatpush2.bf16.xpose.msra.mxu0 0
    %498 = vmatprep.subr.bf16.mxu0 0
    %499 = vmatpush2.bf16.xpose.msra.mxu0 0
    %500 = vmatprep.subr.bf16.mxu0 0
    %501 = vmatpush2.bf16.xpose.msra.mxu0 0
    %502 = vmatprep.subr.bf16.mxu0 0
    %503 = vmatpush2.bf16.xpose.msra.mxu0 0
    %504 = vmatprep.subr.bf16.mxu0 0
    %505 = vmatpush2.bf16.xpose.msra.mxu0 0
    %506 = vmatprep.mubr.bf16.mxu0 0
    %507 = vmatmul.mubr.bf16.gmra.mxu0 %v469
    %v508 = vpop.f32.mrf.mxu0
    %v509 = vadd.f32 0.0, %v508
    %v510 = vpop.f32.mrf.mxu0
    %v511 = vpop.f32.mrf.mxu0
    %v512 = vpop.f32.mrf.mxu0
    %513 = vdwg.mxu0
    %v515 = vsel %vm421, %v380, 0
    %v518 = vsel %vm421, %v397, 0
    %520 = vmatprep.subr.bf16.mxu0 0
    %521 = vmatpush1.bf16.xpose.msra.mxu0 0
    %522 = vmatprep.subr.bf16.mxu0 0
    %523 = vmatpush1.bf16.xpose.msra.mxu0 0
    %524 = vmatprep.subr.bf16.mxu0 0
    %525 = vmatpush1.bf16.xpose.msra.mxu0 0
    %526 = vmatprep.subr.bf16.mxu0 0
    %527 = vmatpush1.bf16.xpose.msra.mxu0 0
    %528 = vmatprep.subr.bf16.mxu0 0
    %529 = vmatpush1.bf16.xpose.msra.mxu0 0
    %530 = vmatprep.subr.bf16.mxu0 0
    %531 = vmatpush1.bf16.xpose.msra.mxu0 0
    %532 = vmatprep.subr.bf16.mxu0 0
    %533 = vmatpush1.bf16.xpose.msra.mxu0 0
    %534 = vmatprep.subr.bf16.mxu0 0
    %535 = vmatpush1.bf16.xpose.msra.mxu0 %v518
    %536 = vmatprep.subr.bf16.mxu0 0
    %537 = vmatpush2.bf16.xpose.msra.mxu0 0
    %538 = vmatprep.subr.bf16.mxu0 0
    %539 = vmatpush2.bf16.xpose.msra.mxu0 0
    %540 = vmatprep.subr.bf16.mxu0 0
    %541 = vmatpush2.bf16.xpose.msra.mxu0 0
    %542 = vmatprep.subr.bf16.mxu0 0
    %543 = vmatpush2.bf16.xpose.msra.mxu0 0
    %544 = vmatprep.subr.bf16.mxu0 0
    %545 = vmatpush2.bf16.xpose.msra.mxu0 0
    %546 = vmatprep.subr.bf16.mxu0 0
    %547 = vmatpush2.bf16.xpose.msra.mxu0 0
    %548 = vmatprep.subr.bf16.mxu0 0
    %549 = vmatpush2.bf16.xpose.msra.mxu0 0
    %550 = vmatprep.subr.bf16.mxu0 0
    %551 = vmatpush2.bf16.xpose.msra.mxu0 0
    %552 = vmatprep.mubr.bf16.mxu0 0
    %553 = vmatmul.mubr.bf16.gmra.mxu0 %v515
    %v554 = vpop.f32.mrf.mxu0
    %v555 = vadd.f32 0.0, %v554
    %v556 = vpop.f32.mrf.mxu0
    %v557 = vpop.f32.mrf.mxu0
    %v558 = vpop.f32.mrf.mxu0
    %559 = vdwg.mxu0
    %v561 = vsel %vm421, %v384, 0
    %v564 = vsel %vm421, %v401, 0
    %566 = vmatprep.subr.bf16.mxu0 0
    %567 = vmatpush1.bf16.xpose.msra.mxu0 0
    %568 = vmatprep.subr.bf16.mxu0 0
    %569 = vmatpush1.bf16.xpose.msra.mxu0 0
    %570 = vmatprep.subr.bf16.mxu0 0
    %571 = vmatpush1.bf16.xpose.msra.mxu0 0
    %572 = vmatprep.subr.bf16.mxu0 0
    %573 = vmatpush1.bf16.xpose.msra.mxu0 0
    %574 = vmatprep.subr.bf16.mxu0 0
    %575 = vmatpush1.bf16.xpose.msra.mxu0 0
    %576 = vmatprep.subr.bf16.mxu0 0
    %577 = vmatpush1.bf16.xpose.msra.mxu0 0
    %578 = vmatprep.subr.bf16.mxu0 0
    %579 = vmatpush1.bf16.xpose.msra.mxu0 0
    %580 = vmatprep.subr.bf16.mxu0 0
    %581 = vmatpush1.bf16.xpose.msra.mxu0 %v564
    %582 = vmatprep.subr.bf16.mxu0 0
    %583 = vmatpush2.bf16.xpose.msra.mxu0 0
    %584 = vmatprep.subr.bf16.mxu0 0
    %585 = vmatpush2.bf16.xpose.msra.mxu0 0
    %586 = vmatprep.subr.bf16.mxu0 0
    %587 = vmatpush2.bf16.xpose.msra.mxu0 0
    %588 = vmatprep.subr.bf16.mxu0 0
    %589 = vmatpush2.bf16.xpose.msra.mxu0 0
    %590 = vmatprep.subr.bf16.mxu0 0
    %591 = vmatpush2.bf16.xpose.msra.mxu0 0
    %592 = vmatprep.subr.bf16.mxu0 0
    %593 = vmatpush2.bf16.xpose.msra.mxu0 0
    %594 = vmatprep.subr.bf16.mxu0 0
    %595 = vmatpush2.bf16.xpose.msra.mxu0 0
    %596 = vmatprep.subr.bf16.mxu0 0
    %597 = vmatpush2.bf16.xpose.msra.mxu0 0
    %598 = vmatprep.mubr.bf16.mxu0 0
    %599 = vmatmul.mubr.bf16.gmra.mxu0 %v561
    %v600 = vpop.f32.mrf.mxu0
    %v601 = vadd.f32 0.0, %v600
    %v602 = vpop.f32.mrf.mxu0
    %v603 = vpop.f32.mrf.mxu0
    %v604 = vpop.f32.mrf.mxu0
    %605 = vdwg.mxu0
    %v607 = vsel %vm421, %v374, 0
    %v610 = vsel %vm421, %v391, 0
    %612 = vmatprep.subr.bf16.mxu0 0
    %613 = vmatpush1.bf16.xpose.msra.mxu0 0
    %614 = vmatprep.subr.bf16.mxu0 0
    %615 = vmatpush1.bf16.xpose.msra.mxu0 0
    %616 = vmatprep.subr.bf16.mxu0 0
    %617 = vmatpush1.bf16.xpose.msra.mxu0 0
    %618 = vmatprep.subr.bf16.mxu0 0
    %619 = vmatpush1.bf16.xpose.msra.mxu0 0
    %620 = vmatprep.subr.bf16.mxu0 0
    %621 = vmatpush1.bf16.xpose.msra.mxu0 0
    %622 = vmatprep.subr.bf16.mxu0 0
    %623 = vmatpush1.bf16.xpose.msra.mxu0 0
    %624 = vmatprep.subr.bf16.mxu0 0
    %625 = vmatpush1.bf16.xpose.msra.mxu0 0
    %626 = vmatprep.subr.bf16.mxu0 0
    %627 = vmatpush1.bf16.xpose.msra.mxu0 %v610
    %628 = vmatprep.subr.bf16.mxu0 0
    %629 = vmatpush2.bf16.xpose.msra.mxu0 0
    %630 = vmatprep.subr.bf16.mxu0 0
    %631 = vmatpush2.bf16.xpose.msra.mxu0 0
    %632 = vmatprep.subr.bf16.mxu0 0
    %633 = vmatpush2.bf16.xpose.msra.mxu0 0
    %634 = vmatprep.subr.bf16.mxu0 0
    %635 = vmatpush2.bf16.xpose.msra.mxu0 0
    %636 = vmatprep.subr.bf16.mxu0 0
    %637 = vmatpush2.bf16.xpose.msra.mxu0 0
    %638 = vmatprep.subr.bf16.mxu0 0
    %639 = vmatpush2.bf16.xpose.msra.mxu0 0
    %640 = vmatprep.subr.bf16.mxu0 0
    %641 = vmatpush2.bf16.xpose.msra.mxu0 0
    %642 = vmatprep.subr.bf16.mxu0 0
    %643 = vmatpush2.bf16.xpose.msra.mxu0 0
    %644 = vmatprep.mubr.bf16.mxu0 0
    %645 = vmatmul.mubr.bf16.gmra.mxu0 %v607
    %v646 = vpop.f32.mrf.mxu0
    %v647 = vadd.f32 0.0, %v646
    %v648 = vpop.f32.mrf.mxu0
    %v649 = vpop.f32.mrf.mxu0
    %v650 = vpop.f32.mrf.mxu0
    %651 = vdwg.mxu0
    %v653 = vsel %vm421, %v378, 0
    %v656 = vsel %vm421, %v395, 0
    %658 = vmatprep.subr.bf16.mxu0 0
    %659 = vmatpush1.bf16.xpose.msra.mxu0 0
    %660 = vmatprep.subr.bf16.mxu0 0
    %661 = vmatpush1.bf16.xpose.msra.mxu0 0
    %662 = vmatprep.subr.bf16.mxu0 0
    %663 = vmatpush1.bf16.xpose.msra.mxu0 0
    %664 = vmatprep.subr.bf16.mxu0 0
    %665 = vmatpush1.bf16.xpose.msra.mxu0 0
    %666 = vmatprep.subr.bf16.mxu0 0
    %667 = vmatpush1.bf16.xpose.msra.mxu0 0
    %668 = vmatprep.subr.bf16.mxu0 0
    %669 = vmatpush1.bf16.xpose.msra.mxu0 0
    %670 = vmatprep.subr.bf16.mxu0 0
    %671 = vmatpush1.bf16.xpose.msra.mxu0 0
    %672 = vmatprep.subr.bf16.mxu0 0
    %673 = vmatpush1.bf16.xpose.msra.mxu0 %v656
    %674 = vmatprep.subr.bf16.mxu0 0
    %675 = vmatpush2.bf16.xpose.msra.mxu0 0
    %676 = vmatprep.subr.bf16.mxu0 0
    %677 = vmatpush2.bf16.xpose.msra.mxu0 0
    %678 = vmatprep.subr.bf16.mxu0 0
    %679 = vmatpush2.bf16.xpose.msra.mxu0 0
    %680 = vmatprep.subr.bf16.mxu0 0
    %681 = vmatpush2.bf16.xpose.msra.mxu0 0
    %682 = vmatprep.subr.bf16.mxu0 0
    %683 = vmatpush2.bf16.xpose.msra.mxu0 0
    %684 = vmatprep.subr.bf16.mxu0 0
    %685 = vmatpush2.bf16.xpose.msra.mxu0 0
    %686 = vmatprep.subr.bf16.mxu0 0
    %687 = vmatpush2.bf16.xpose.msra.mxu0 0
    %688 = vmatprep.subr.bf16.mxu0 0
    %689 = vmatpush2.bf16.xpose.msra.mxu0 0
    %690 = vmatprep.mubr.bf16.mxu0 0
    %691 = vmatmul.mubr.bf16.gmra.mxu0 %v653
    %v692 = vpop.f32.mrf.mxu0
    %v693 = vadd.f32 0.0, %v692
    %v694 = vpop.f32.mrf.mxu0
    %v695 = vpop.f32.mrf.mxu0
    %v696 = vpop.f32.mrf.mxu0
    %697 = vdwg.mxu0
    %v699 = vsel %vm421, %v382, 0
    %v702 = vsel %vm421, %v399, 0
    %704 = vmatprep.subr.bf16.mxu0 0
    %705 = vmatpush1.bf16.xpose.msra.mxu0 0
    %706 = vmatprep.subr.bf16.mxu0 0
    %707 = vmatpush1.bf16.xpose.msra.mxu0 0
    %708 = vmatprep.subr.bf16.mxu0 0
    %709 = vmatpush1.bf16.xpose.msra.mxu0 0
    %710 = vmatprep.subr.bf16.mxu0 0
    %711 = vmatpush1.bf16.xpose.msra.mxu0 0
    %712 = vmatprep.subr.bf16.mxu0 0
    %713 = vmatpush1.bf16.xpose.msra.mxu0 0
    %714 = vmatprep.subr.bf16.mxu0 0
    %715 = vmatpush1.bf16.xpose.msra.mxu0 0
    %716 = vmatprep.subr.bf16.mxu0 0
    %717 = vmatpush1.bf16.xpose.msra.mxu0 0
    %718 = vmatprep.subr.bf16.mxu0 0
    %719 = vmatpush1.bf16.xpose.msra.mxu0 %v702
    %720 = vmatprep.subr.bf16.mxu0 0
    %721 = vmatpush2.bf16.xpose.msra.mxu0 0
    %722 = vmatprep.subr.bf16.mxu0 0
    %723 = vmatpush2.bf16.xpose.msra.mxu0 0
    %724 = vmatprep.subr.bf16.mxu0 0
    %725 = vmatpush2.bf16.xpose.msra.mxu0 0
    %726 = vmatprep.subr.bf16.mxu0 0
    %727 = vmatpush2.bf16.xpose.msra.mxu0 0
    %728 = vmatprep.subr.bf16.mxu0 0
    %729 = vmatpush2.bf16.xpose.msra.mxu0 0
    %730 = vmatprep.subr.bf16.mxu0 0
    %731 = vmatpush2.bf16.xpose.msra.mxu0 0
    %732 = vmatprep.subr.bf16.mxu0 0
    %733 = vmatpush2.bf16.xpose.msra.mxu0 0
    %734 = vmatprep.subr.bf16.mxu0 0
    %735 = vmatpush2.bf16.xpose.msra.mxu0 0
    %736 = vmatprep.mubr.bf16.mxu0 0
    %737 = vmatmul.mubr.bf16.gmra.mxu0 %v699
    %v738 = vpop.f32.mrf.mxu0
    %v739 = vadd.f32 0.0, %v738
    %v740 = vpop.f32.mrf.mxu0
    %v741 = vpop.f32.mrf.mxu0
    %v742 = vpop.f32.mrf.mxu0
    %743 = vdwg.mxu0
    %v745 = vsel %vm421, %v386, 0
    %v748 = vsel %vm421, %v403, 0
    %750 = vmatprep.subr.bf16.mxu0 0
    %751 = vmatpush1.bf16.xpose.msra.mxu0 0
    %752 = vmatprep.subr.bf16.mxu0 0
    %753 = vmatpush1.bf16.xpose.msra.mxu0 0
    %754 = vmatprep.subr.bf16.mxu0 0
    %755 = vmatpush1.bf16.xpose.msra.mxu0 0
    %756 = vmatprep.subr.bf16.mxu0 0
    %757 = vmatpush1.bf16.xpose.msra.mxu0 0
    %758 = vmatprep.subr.bf16.mxu0 0
    %759 = vmatpush1.bf16.xpose.msra.mxu0 0
    %760 = vmatprep.subr.bf16.mxu0 0
    %761 = vmatpush1.bf16.xpose.msra.mxu0 0
    %762 = vmatprep.subr.bf16.mxu0 0
    %763 = vmatpush1.bf16.xpose.msra.mxu0 0
    %764 = vmatprep.subr.bf16.mxu0 0
    %765 = vmatpush1.bf16.xpose.msra.mxu0 %v748
    %766 = vmatprep.subr.bf16.mxu0 0
    %767 = vmatpush2.bf16.xpose.msra.mxu0 0
    %768 = vmatprep.subr.bf16.mxu0 0
    %769 = vmatpush2.bf16.xpose.msra.mxu0 0
    %770 = vmatprep.subr.bf16.mxu0 0
    %771 = vmatpush2.bf16.xpose.msra.mxu0 0
    %772 = vmatprep.subr.bf16.mxu0 0
    %773 = vmatpush2.bf16.xpose.msra.mxu0 0
    %774 = vmatprep.subr.bf16.mxu0 0
    %775 = vmatpush2.bf16.xpose.msra.mxu0 0
    %776 = vmatprep.subr.bf16.mxu0 0
    %777 = vmatpush2.bf16.xpose.msra.mxu0 0
    %778 = vmatprep.subr.bf16.mxu0 0
    %779 = vmatpush2.bf16.xpose.msra.mxu0 0
    %780 = vmatprep.subr.bf16.mxu0 0
    %781 = vmatpush2.bf16.xpose.msra.mxu0 0
    %782 = vmatprep.mubr.bf16.mxu0 0
    %783 = vmatmul.mubr.bf16.gmra.mxu0 %v745
    %v784 = vpop.f32.mrf.mxu0
    %v785 = vadd.f32 0.0, %v784
    %v786 = vpop.f32.mrf.mxu0
    %v787 = vpop.f32.mrf.mxu0
    %v788 = vpop.f32.mrf.mxu0
    %789 = vdwg.mxu0
    %v790 = vmul.f32 %v463, 0.17677669
    %v791 = vmul.f32 %v509, 0.17677669
    %v792 = vmul.f32 %v555, 0.17677669
    %v793 = vmul.f32 %v601, 0.17677669
    %v794 = vmul.f32 %v647, 0.17677669
    %v795 = vmul.f32 %v693, 0.17677669
    %v796 = vmul.f32 %v739, 0.17677669
    %v797 = vmul.f32 %v785, 0.17677669
    %v798 = vlaneseq
    %v799 = vshrl.u32 %v798, 7
    %v800 = vsub.s32 0, %v799
    %v801 = vrot.slane %v97, %v800
    %v802 = vlaneseq
    %v803 = vshrl.u32 %v802, 7
    %v804 = vsub.s32 0, %v803
    %v805 = vrot.slane %v104, %v804
    %v808 = vadd.f32 %v790, %v801
    %v809 = vadd.f32 %v791, %v801
    %v810 = vadd.f32 %v792, %v801
    %v811 = vadd.f32 %v793, %v801
    %v812 = vadd.f32 %v794, %v805
    %v813 = vadd.f32 %v795, %v805
    %v814 = vadd.f32 %v796, %v805
    %v815 = vadd.f32 %v797, %v805
    %vm816 = vcmask 64512
    %v817 = vsel %vm816, %v808, -inf
    %818 = vmax.xlane.f32.xlu0 %v817
    %v819 = vpop.xlane.xlu0 %818
    %v820 = vsel %vm816, %v809, -inf
    %821 = vmax.xlane.f32.xlu0 %v820
    %v822 = vpop.xlane.xlu0 %821
    %v823 = vsel %vm816, %v810, -inf
    %824 = vmax.xlane.f32.xlu0 %v823
    %v825 = vpop.xlane.xlu0 %824
    %v826 = vsel %vm816, %v811, -inf
    %827 = vmax.xlane.f32.xlu0 %v826
    %v828 = vpop.xlane.xlu0 %827
    %v829 = vsel %vm816, %v812, -inf
    %830 = vmax.xlane.f32.xlu0 %v829
    %v831 = vpop.xlane.xlu0 %830
    %v832 = vsel %vm816, %v813, -inf
    %833 = vmax.xlane.f32.xlu0 %v832
    %v834 = vpop.xlane.xlu0 %833
    %v835 = vsel %vm816, %v814, -inf
    %836 = vmax.xlane.f32.xlu0 %v835
    %v837 = vpop.xlane.xlu0 %836
    %v838 = vsel %vm816, %v815, -inf
    %839 = vmax.xlane.f32.xlu0 %v838
    %v840 = vpop.xlane.xlu0 %839
    %v841 = vsub.f32 %v808, %v819
    %v842 = vsub.f32 %v809, %v822
    %v843 = vsub.f32 %v810, %v825
    %v844 = vsub.f32 %v811, %v828
    %v845 = vsub.f32 %v812, %v831
    %v846 = vsub.f32 %v813, %v834
    %v847 = vsub.f32 %v814, %v837
    %v848 = vsub.f32 %v815, %v840
    %v849 = vmul.f32 %v841, 1.442695
    %v850 = vpow.pop %v849
    %v851 = vmul.f32 %v842, 1.442695
    %v852 = vpow.pop %v851
    %v853 = vmul.f32 %v843, 1.442695
    %v854 = vpow.pop %v853
    %v855 = vmul.f32 %v844, 1.442695
    %v856 = vpow.pop %v855
    %v857 = vmul.f32 %v845, 1.442695
    %v858 = vpow.pop %v857
    %v859 = vmul.f32 %v846, 1.442695
    %v860 = vpow.pop %v859
    %v861 = vmul.f32 %v847, 1.442695
    %v862 = vpow.pop %v861
    %v863 = vmul.f32 %v848, 1.442695
    %v864 = vpow.pop %v863
    %v865 = vsel %vm816, %v850, 0.0
    %866 = vadd.xlane.f32.xlu0 %v865
    %v867 = vpop.xlane.xlu0 %866
    %v868 = vsel %vm816, %v852, 0.0
    %869 = vadd.xlane.f32.xlu0 %v868
    %v870 = vpop.xlane.xlu0 %869
    %v871 = vsel %vm816, %v854, 0.0
    %872 = vadd.xlane.f32.xlu0 %v871
    %v873 = vpop.xlane.xlu0 %872
    %v874 = vsel %vm816, %v856, 0.0
    %875 = vadd.xlane.f32.xlu0 %v874
    %v876 = vpop.xlane.xlu0 %875
    %v877 = vsel %vm816, %v858, 0.0
    %878 = vadd.xlane.f32.xlu0 %v877
    %v879 = vpop.xlane.xlu0 %878
    %v880 = vsel %vm816, %v860, 0.0
    %881 = vadd.xlane.f32.xlu0 %v880
    %v882 = vpop.xlane.xlu0 %881
    %v883 = vsel %vm816, %v862, 0.0
    %884 = vadd.xlane.f32.xlu0 %v883
    %v885 = vpop.xlane.xlu0 %884
    %v886 = vsel %vm816, %v864, 0.0
    %887 = vadd.xlane.f32.xlu0 %v886
    %v888 = vpop.xlane.xlu0 %887
    %v889 = vrcp.pop %v867
    %v890 = vrcp.pop %v870
    %v891 = vrcp.pop %v873
    %v892 = vrcp.pop %v876
    %v893 = vrcp.pop %v879
    %v894 = vrcp.pop %v882
    %v895 = vrcp.pop %v885
    %v896 = vrcp.pop %v888
    %v897 = vmul.f32 %v850, %v889
    %v898 = vmul.f32 %v852, %v890
    %v899 = vmul.f32 %v854, %v891
    %v900 = vmul.f32 %v856, %v892
    %v901 = vmul.f32 %v858, %v893
    %v902 = vmul.f32 %v860, %v894
    %v903 = vmul.f32 %v862, %v895
    %v904 = vmul.f32 %v864, %v896
    %v905 = vpack.c.bf16 %v897, %v897
    %v906 = vpack.c.bf16 %v898, %v898
    %v907 = vpack.c.bf16 %v899, %v899
    %v908 = vpack.c.bf16 %v900, %v900
    %v909 = vpack.c.bf16 %v901, %v901
    %v910 = vpack.c.bf16 %v902, %v902
    %v911 = vpack.c.bf16 %v903, %v903
    %v912 = vpack.c.bf16 %v904, %v904
    %v914 = vsel %vm816, %v905, 0
    %vm916 = vcmask 1043456
    %v918 = vsel %vm916, %v407, 0
    %920 = vmatprep.subr.bf16.mxu0 0
    %921 = vmatpush1.bf16.msra.mxu0 0
    %922 = vmatprep.subr.bf16.mxu0 0
    %923 = vmatpush1.bf16.msra.mxu0 0
    %924 = vmatprep.subr.bf16.mxu0 0
    %925 = vmatpush1.bf16.msra.mxu0 0
    %926 = vmatprep.subr.bf16.mxu0 0
    %927 = vmatpush1.bf16.msra.mxu0 0
    %928 = vmatprep.subr.bf16.mxu0 0
    %929 = vmatpush1.bf16.msra.mxu0 0
    %930 = vmatprep.subr.bf16.mxu0 0
    %931 = vmatpush1.bf16.msra.mxu0 0
    %932 = vmatprep.subr.bf16.mxu0 0
    %933 = vmatpush1.bf16.msra.mxu0 0
    %934 = vmatprep.subr.bf16.mxu0 0
    %935 = vmatpush1.bf16.msra.mxu0 %v918
    %936 = vmatprep.subr.bf16.mxu0 0
    %937 = vmatpush2.bf16.msra.mxu0 0
    %938 = vmatprep.subr.bf16.mxu0 0
    %939 = vmatpush2.bf16.msra.mxu0 0
    %940 = vmatprep.subr.bf16.mxu0 0
    %941 = vmatpush2.bf16.msra.mxu0 0
    %942 = vmatprep.subr.bf16.mxu0 0
    %943 = vmatpush2.bf16.msra.mxu0 0
    %944 = vmatprep.subr.bf16.mxu0 0
    %945 = vmatpush2.bf16.msra.mxu0 0
    %946 = vmatprep.subr.bf16.mxu0 0
    %947 = vmatpush2.bf16.msra.mxu0 0
    %948 = vmatprep.subr.bf16.mxu0 0
    %949 = vmatpush2.bf16.msra.mxu0 0
    %950 = vmatprep.subr.bf16.mxu0 0
    %951 = vmatpush2.bf16.msra.mxu0 0
    %952 = vmatprep.mubr.bf16.mxu0 0
    %953 = vmatmul.mubr.bf16.gmra.mxu0 %v914
    %v954 = vpop.f32.mrf.mxu0
    %v955 = vadd.f32 0.0, %v954
    %v956 = vpop.f32.mrf.mxu0
    %v957 = vpop.f32.mrf.mxu0
    %v958 = vpop.f32.mrf.mxu0
    %959 = vdwg.mxu0
    %v961 = vsel %vm816, %v906, 0
    %v964 = vsel %vm916, %v410, 0
    %966 = vmatprep.subr.bf16.mxu0 0
    %967 = vmatpush1.bf16.msra.mxu0 0
    %968 = vmatprep.subr.bf16.mxu0 0
    %969 = vmatpush1.bf16.msra.mxu0 0
    %970 = vmatprep.subr.bf16.mxu0 0
    %971 = vmatpush1.bf16.msra.mxu0 0
    %972 = vmatprep.subr.bf16.mxu0 0
    %973 = vmatpush1.bf16.msra.mxu0 0
    %974 = vmatprep.subr.bf16.mxu0 0
    %975 = vmatpush1.bf16.msra.mxu0 0
    %976 = vmatprep.subr.bf16.mxu0 0
    %977 = vmatpush1.bf16.msra.mxu0 0
    %978 = vmatprep.subr.bf16.mxu0 0
    %979 = vmatpush1.bf16.msra.mxu0 0
    %980 = vmatprep.subr.bf16.mxu0 0
    %981 = vmatpush1.bf16.msra.mxu0 %v964
    %982 = vmatprep.subr.bf16.mxu0 0
    %983 = vmatpush2.bf16.msra.mxu0 0
    %984 = vmatprep.subr.bf16.mxu0 0
    %985 = vmatpush2.bf16.msra.mxu0 0
    %986 = vmatprep.subr.bf16.mxu0 0
    %987 = vmatpush2.bf16.msra.mxu0 0
    %988 = vmatprep.subr.bf16.mxu0 0
    %989 = vmatpush2.bf16.msra.mxu0 0
    %990 = vmatprep.subr.bf16.mxu0 0
    %991 = vmatpush2.bf16.msra.mxu0 0
    %992 = vmatprep.subr.bf16.mxu0 0
    %993 = vmatpush2.bf16.msra.mxu0 0
    %994 = vmatprep.subr.bf16.mxu0 0
    %995 = vmatpush2.bf16.msra.mxu0 0
    %996 = vmatprep.subr.bf16.mxu0 0
    %997 = vmatpush2.bf16.msra.mxu0 0
    %998 = vmatprep.mubr.bf16.mxu0 0
    %999 = vmatmul.mubr.bf16.gmra.mxu0 %v961
    %v1000 = vpop.f32.mrf.mxu0
    %v1001 = vadd.f32 0.0, %v1000
    %v1002 = vpop.f32.mrf.mxu0
    %v1003 = vpop.f32.mrf.mxu0
    %v1004 = vpop.f32.mrf.mxu0
    %1005 = vdwg.mxu0
    %v1007 = vsel %vm816, %v907, 0
    %v1010 = vsel %vm916, %v414, 0
    %1012 = vmatprep.subr.bf16.mxu0 0
    %1013 = vmatpush1.bf16.msra.mxu0 0
    %1014 = vmatprep.subr.bf16.mxu0 0
    %1015 = vmatpush1.bf16.msra.mxu0 0
    %1016 = vmatprep.subr.bf16.mxu0 0
    %1017 = vmatpush1.bf16.msra.mxu0 0
    %1018 = vmatprep.subr.bf16.mxu0 0
    %1019 = vmatpush1.bf16.msra.mxu0 0
    %1020 = vmatprep.subr.bf16.mxu0 0
    %1021 = vmatpush1.bf16.msra.mxu0 0
    %1022 = vmatprep.subr.bf16.mxu0 0
    %1023 = vmatpush1.bf16.msra.mxu0 0
    %1024 = vmatprep.subr.bf16.mxu0 0
    %1025 = vmatpush1.bf16.msra.mxu0 0
    %1026 = vmatprep.subr.bf16.mxu0 0
    %1027 = vmatpush1.bf16.msra.mxu0 %v1010
    %1028 = vmatprep.subr.bf16.mxu0 0
    %1029 = vmatpush2.bf16.msra.mxu0 0
    %1030 = vmatprep.subr.bf16.mxu0 0
    %1031 = vmatpush2.bf16.msra.mxu0 0
    %1032 = vmatprep.subr.bf16.mxu0 0
    %1033 = vmatpush2.bf16.msra.mxu0 0
    %1034 = vmatprep.subr.bf16.mxu0 0
    %1035 = vmatpush2.bf16.msra.mxu0 0
    %1036 = vmatprep.subr.bf16.mxu0 0
    %1037 = vmatpush2.bf16.msra.mxu0 0
    %1038 = vmatprep.subr.bf16.mxu0 0
    %1039 = vmatpush2.bf16.msra.mxu0 0
    %1040 = vmatprep.subr.bf16.mxu0 0
    %1041 = vmatpush2.bf16.msra.mxu0 0
    %1042 = vmatprep.subr.bf16.mxu0 0
    %1043 = vmatpush2.bf16.msra.mxu0 0
    %1044 = vmatprep.mubr.bf16.mxu0 0
    %1045 = vmatmul.mubr.bf16.gmra.mxu0 %v1007
    %v1046 = vpop.f32.mrf.mxu0
    %v1047 = vadd.f32 0.0, %v1046
    %v1048 = vpop.f32.mrf.mxu0
    %v1049 = vpop.f32.mrf.mxu0
    %v1050 = vpop.f32.mrf.mxu0
    %1051 = vdwg.mxu0
    %v1053 = vsel %vm816, %v908, 0
    %v1056 = vsel %vm916, %v418, 0
    %1058 = vmatprep.subr.bf16.mxu0 0
    %1059 = vmatpush1.bf16.msra.mxu0 0
    %1060 = vmatprep.subr.bf16.mxu0 0
    %1061 = vmatpush1.bf16.msra.mxu0 0
    %1062 = vmatprep.subr.bf16.mxu0 0
    %1063 = vmatpush1.bf16.msra.mxu0 0
    %1064 = vmatprep.subr.bf16.mxu0 0
    %1065 = vmatpush1.bf16.msra.mxu0 0
    %1066 = vmatprep.subr.bf16.mxu0 0
    %1067 = vmatpush1.bf16.msra.mxu0 0
    %1068 = vmatprep.subr.bf16.mxu0 0
    %1069 = vmatpush1.bf16.msra.mxu0 0
    %1070 = vmatprep.subr.bf16.mxu0 0
    %1071 = vmatpush1.bf16.msra.mxu0 0
    %1072 = vmatprep.subr.bf16.mxu0 0
    %1073 = vmatpush1.bf16.msra.mxu0 %v1056
    %1074 = vmatprep.subr.bf16.mxu0 0
    %1075 = vmatpush2.bf16.msra.mxu0 0
    %1076 = vmatprep.subr.bf16.mxu0 0
    %1077 = vmatpush2.bf16.msra.mxu0 0
    %1078 = vmatprep.subr.bf16.mxu0 0
    %1079 = vmatpush2.bf16.msra.mxu0 0
    %1080 = vmatprep.subr.bf16.mxu0 0
    %1081 = vmatpush2.bf16.msra.mxu0 0
    %1082 = vmatprep.subr.bf16.mxu0 0
    %1083 = vmatpush2.bf16.msra.mxu0 0
    %1084 = vmatprep.subr.bf16.mxu0 0
    %1085 = vmatpush2.bf16.msra.mxu0 0
    %1086 = vmatprep.subr.bf16.mxu0 0
    %1087 = vmatpush2.bf16.msra.mxu0 0
    %1088 = vmatprep.subr.bf16.mxu0 0
    %1089 = vmatpush2.bf16.msra.mxu0 0
    %1090 = vmatprep.mubr.bf16.mxu0 0
    %1091 = vmatmul.mubr.bf16.gmra.mxu0 %v1053
    %v1092 = vpop.f32.mrf.mxu0
    %v1093 = vadd.f32 0.0, %v1092
    %v1094 = vpop.f32.mrf.mxu0
    %v1095 = vpop.f32.mrf.mxu0
    %v1096 = vpop.f32.mrf.mxu0
    %1097 = vdwg.mxu0
    %v1099 = vsel %vm816, %v909, 0
    %v1102 = vsel %vm916, %v408, 0
    %1104 = vmatprep.subr.bf16.mxu0 0
    %1105 = vmatpush1.bf16.msra.mxu0 0
    %1106 = vmatprep.subr.bf16.mxu0 0
    %1107 = vmatpush1.bf16.msra.mxu0 0
    %1108 = vmatprep.subr.bf16.mxu0 0
    %1109 = vmatpush1.bf16.msra.mxu0 0
    %1110 = vmatprep.subr.bf16.mxu0 0
    %1111 = vmatpush1.bf16.msra.mxu0 0
    %1112 = vmatprep.subr.bf16.mxu0 0
    %1113 = vmatpush1.bf16.msra.mxu0 0
    %1114 = vmatprep.subr.bf16.mxu0 0
    %1115 = vmatpush1.bf16.msra.mxu0 0
    %1116 = vmatprep.subr.bf16.mxu0 0
    %1117 = vmatpush1.bf16.msra.mxu0 0
    %1118 = vmatprep.subr.bf16.mxu0 0
    %1119 = vmatpush1.bf16.msra.mxu0 %v1102
    %1120 = vmatprep.subr.bf16.mxu0 0
    %1121 = vmatpush2.bf16.msra.mxu0 0
    %1122 = vmatprep.subr.bf16.mxu0 0
    %1123 = vmatpush2.bf16.msra.mxu0 0
    %1124 = vmatprep.subr.bf16.mxu0 0
    %1125 = vmatpush2.bf16.msra.mxu0 0
    %1126 = vmatprep.subr.bf16.mxu0 0
    %1127 = vmatpush2.bf16.msra.mxu0 0
    %1128 = vmatprep.subr.bf16.mxu0 0
    %1129 = vmatpush2.bf16.msra.mxu0 0
    %1130 = vmatprep.subr.bf16.mxu0 0
    %1131 = vmatpush2.bf16.msra.mxu0 0
    %1132 = vmatprep.subr.bf16.mxu0 0
    %1133 = vmatpush2.bf16.msra.mxu0 0
    %1134 = vmatprep.subr.bf16.mxu0 0
    %1135 = vmatpush2.bf16.msra.mxu0 0
    %1136 = vmatprep.mubr.bf16.mxu0 0
    %1137 = vmatmul.mubr.bf16.gmra.mxu0 %v1099
    %v1138 = vpop.f32.mrf.mxu0
    %v1139 = vadd.f32 0.0, %v1138
    %v1140 = vpop.f32.mrf.mxu0
    %v1141 = vpop.f32.mrf.mxu0
    %v1142 = vpop.f32.mrf.mxu0
    %1143 = vdwg.mxu0
    %v1145 = vsel %vm816, %v910, 0
    %v1148 = vsel %vm916, %v412, 0
    %1150 = vmatprep.subr.bf16.mxu0 0
    %1151 = vmatpush1.bf16.msra.mxu0 0
    %1152 = vmatprep.subr.bf16.mxu0 0
    %1153 = vmatpush1.bf16.msra.mxu0 0
    %1154 = vmatprep.subr.bf16.mxu0 0
    %1155 = vmatpush1.bf16.msra.mxu0 0
    %1156 = vmatprep.subr.bf16.mxu0 0
    %1157 = vmatpush1.bf16.msra.mxu0 0
    %1158 = vmatprep.subr.bf16.mxu0 0
    %1159 = vmatpush1.bf16.msra.mxu0 0
    %1160 = vmatprep.subr.bf16.mxu0 0
    %1161 = vmatpush1.bf16.msra.mxu0 0
    %1162 = vmatprep.subr.bf16.mxu0 0
    %1163 = vmatpush1.bf16.msra.mxu0 0
    %1164 = vmatprep.subr.bf16.mxu0 0
    %1165 = vmatpush1.bf16.msra.mxu0 %v1148
    %1166 = vmatprep.subr.bf16.mxu0 0
    %1167 = vmatpush2.bf16.msra.mxu0 0
    %1168 = vmatprep.subr.bf16.mxu0 0
    %1169 = vmatpush2.bf16.msra.mxu0 0
    %1170 = vmatprep.subr.bf16.mxu0 0
    %1171 = vmatpush2.bf16.msra.mxu0 0
    %1172 = vmatprep.subr.bf16.mxu0 0
    %1173 = vmatpush2.bf16.msra.mxu0 0
    %1174 = vmatprep.subr.bf16.mxu0 0
    %1175 = vmatpush2.bf16.msra.mxu0 0
    %1176 = vmatprep.subr.bf16.mxu0 0
    %1177 = vmatpush2.bf16.msra.mxu0 0
    %1178 = vmatprep.subr.bf16.mxu0 0
    %1179 = vmatpush2.bf16.msra.mxu0 0
    %1180 = vmatprep.subr.bf16.mxu0 0
    %1181 = vmatpush2.bf16.msra.mxu0 0
    %1182 = vmatprep.mubr.bf16.mxu0 0
    %1183 = vmatmul.mubr.bf16.gmra.mxu0 %v1145
    %v1184 = vpop.f32.mrf.mxu0
    %v1185 = vadd.f32 0.0, %v1184
    %v1186 = vpop.f32.mrf.mxu0
    %v1187 = vpop.f32.mrf.mxu0
    %v1188 = vpop.f32.mrf.mxu0
    %1189 = vdwg.mxu0
    %v1191 = vsel %vm816, %v911, 0
    %v1194 = vsel %vm916, %v416, 0
    %1196 = vmatprep.subr.bf16.mxu0 0
    %1197 = vmatpush1.bf16.msra.mxu0 0
    %1198 = vmatprep.subr.bf16.mxu0 0
    %1199 = vmatpush1.bf16.msra.mxu0 0
    %1200 = vmatprep.subr.bf16.mxu0 0
    %1201 = vmatpush1.bf16.msra.mxu0 0
    %1202 = vmatprep.subr.bf16.mxu0 0
    %1203 = vmatpush1.bf16.msra.mxu0 0
    %1204 = vmatprep.subr.bf16.mxu0 0
    %1205 = vmatpush1.bf16.msra.mxu0 0
    %1206 = vmatprep.subr.bf16.mxu0 0
    %1207 = vmatpush1.bf16.msra.mxu0 0
    %1208 = vmatprep.subr.bf16.mxu0 0
    %1209 = vmatpush1.bf16.msra.mxu0 0
    %1210 = vmatprep.subr.bf16.mxu0 0
    %1211 = vmatpush1.bf16.msra.mxu0 %v1194
    %1212 = vmatprep.subr.bf16.mxu0 0
    %1213 = vmatpush2.bf16.msra.mxu0 0
    %1214 = vmatprep.subr.bf16.mxu0 0
    %1215 = vmatpush2.bf16.msra.mxu0 0
    %1216 = vmatprep.subr.bf16.mxu0 0
    %1217 = vmatpush2.bf16.msra.mxu0 0
    %1218 = vmatprep.subr.bf16.mxu0 0
    %1219 = vmatpush2.bf16.msra.mxu0 0
    %1220 = vmatprep.subr.bf16.mxu0 0
    %1221 = vmatpush2.bf16.msra.mxu0 0
    %1222 = vmatprep.subr.bf16.mxu0 0
    %1223 = vmatpush2.bf16.msra.mxu0 0
    %1224 = vmatprep.subr.bf16.mxu0 0
    %1225 = vmatpush2.bf16.msra.mxu0 0
    %1226 = vmatprep.subr.bf16.mxu0 0
    %1227 = vmatpush2.bf16.msra.mxu0 0
    %1228 = vmatprep.mubr.bf16.mxu0 0
    %1229 = vmatmul.mubr.bf16.gmra.mxu0 %v1191
    %v1230 = vpop.f32.mrf.mxu0
    %v1231 = vadd.f32 0.0, %v1230
    %v1232 = vpop.f32.mrf.mxu0
    %v1233 = vpop.f32.mrf.mxu0
    %v1234 = vpop.f32.mrf.mxu0
    %1235 = vdwg.mxu0
    %v1237 = vsel %vm816, %v912, 0
    %v1240 = vsel %vm916, %v420, 0
    %1242 = vmatprep.subr.bf16.mxu0 0
    %1243 = vmatpush1.bf16.msra.mxu0 0
    %1244 = vmatprep.subr.bf16.mxu0 0
    %1245 = vmatpush1.bf16.msra.mxu0 0
    %1246 = vmatprep.subr.bf16.mxu0 0
    %1247 = vmatpush1.bf16.msra.mxu0 0
    %1248 = vmatprep.subr.bf16.mxu0 0
    %1249 = vmatpush1.bf16.msra.mxu0 0
    %1250 = vmatprep.subr.bf16.mxu0 0
    %1251 = vmatpush1.bf16.msra.mxu0 0
    %1252 = vmatprep.subr.bf16.mxu0 0
    %1253 = vmatpush1.bf16.msra.mxu0 0
    %1254 = vmatprep.subr.bf16.mxu0 0
    %1255 = vmatpush1.bf16.msra.mxu0 0
    %1256 = vmatprep.subr.bf16.mxu0 0
    %1257 = vmatpush1.bf16.msra.mxu0 %v1240
    %1258 = vmatprep.subr.bf16.mxu0 0
    %1259 = vmatpush2.bf16.msra.mxu0 0
    %1260 = vmatprep.subr.bf16.mxu0 0
    %1261 = vmatpush2.bf16.msra.mxu0 0
    %1262 = vmatprep.subr.bf16.mxu0 0
    %1263 = vmatpush2.bf16.msra.mxu0 0
    %1264 = vmatprep.subr.bf16.mxu0 0
    %1265 = vmatpush2.bf16.msra.mxu0 0
    %1266 = vmatprep.subr.bf16.mxu0 0
    %1267 = vmatpush2.bf16.msra.mxu0 0
    %1268 = vmatprep.subr.bf16.mxu0 0
    %1269 = vmatpush2.bf16.msra.mxu0 0
    %1270 = vmatprep.subr.bf16.mxu0 0
    %1271 = vmatpush2.bf16.msra.mxu0 0
    %1272 = vmatprep.subr.bf16.mxu0 0
    %1273 = vmatpush2.bf16.msra.mxu0 0
    %1274 = vmatprep.mubr.bf16.mxu0 0
    %1275 = vmatmul.mubr.bf16.gmra.mxu0 %v1237
    %v1276 = vpop.f32.mrf.mxu0
    %v1277 = vadd.f32 0.0, %v1276
    %v1278 = vpop.f32.mrf.mxu0
    %v1279 = vpop.f32.mrf.mxu0
    %v1280 = vpop.f32.mrf.mxu0
    %1281 = vdwg.mxu0
    %1284 = vrot.lane.b32.xlu0 %v1001, 32
    %v1285 = vpop.permute.xlu0 %1284
    %1286 = vrot.lane.b32.xlu0 %v1185, 32
    %v1287 = vpop.permute.xlu0 %1286
    %1292 = vrot.lane.b32.xlu0 %v1047, 64
    %v1293 = vpop.permute.xlu0 %1292
    %1294 = vrot.lane.b32.xlu0 %v1231, 64
    %v1295 = vpop.permute.xlu0 %1294
    %1300 = vrot.lane.b32.xlu0 %v1093, 96
    %v1301 = vpop.permute.xlu0 %1300
    %1302 = vrot.lane.b32.xlu0 %v1277, 96
    %v1303 = vpop.permute.xlu0 %1302
    %v1306 = vsel %vm421, %v955, %v1285
    %v1307 = vsel %vm421, %v1139, %v1287
    %vm1308 = vcmask 523264
    %v1309 = vsel %vm1308, %v1306, %v1293
    %v1310 = vsel %vm1308, %v1307, %v1295
    %vm1311 = vcmask 785408
    %v1312 = vsel %vm1311, %v1309, %v1301
    %v1313 = vsel %vm1311, %v1310, %v1303
    %v1314 = vpack.c.bf16 %v1313, %v1312
    %v1315 = vld [vmem:[%s4] sm:$0xf]
    %v1316 = vld [vmem:[%s4 + $0x4] sm:$0xf]
    %v1317 = vld [vmem:[%s4 + $0x8] sm:$0xf]
    %v1318 = vld [vmem:[%s4 + $0xc] sm:$0xf]
    %v1319 = vld [vmem:[%s4 + $0x10] sm:$0xf]
    %v1320 = vld [vmem:[%s4 + $0x14] sm:$0xf]
    %v1321 = vld [vmem:[%s4 + $0x18] sm:$0xf]
    %v1322 = vld [vmem:[%s4 + $0x1c] sm:$0xf]
    %v1323 = vld [vmem:[%s4 + $0x20] sm:$0xf]
    %v1324 = vld [vmem:[%s4 + $0x24] sm:$0xf]
    %v1325 = vld [vmem:[%s4 + $0x28] sm:$0xf]
    %v1326 = vld [vmem:[%s4 + $0x2c] sm:$0xf]
    %v1327 = vld [vmem:[%s4 + $0x30] sm:$0xf]
    %v1328 = vld [vmem:[%s4 + $0x34] sm:$0xf]
    %v1329 = vld [vmem:[%s4 + $0x38] sm:$0xf]
    %v1330 = vld [vmem:[%s4 + $0x3c] sm:$0xf]
    %v1331 = vld [vmem:[%s5] sm:$0x1]
    %v1333 = vlaneseq
    %v1334 = vshrl.u32 %v1333, 7
    %v1335 = vsub.s32 0, %v1334
    %v1336 = vrot.slane %v1331, %v1335
    %v1354 = vunpack.c.l.b16 %v1315
    %v1355 = vunpack.c.l.b16 %v1316
    %v1356 = vunpack.c.l.b16 %v1317
    %v1357 = vunpack.c.l.b16 %v1318
    %v1358 = vunpack.c.l.b16 %v1319
    %v1359 = vunpack.c.l.b16 %v1320
    %v1360 = vunpack.c.l.b16 %v1321
    %v1361 = vunpack.c.l.b16 %v1322
    %v1362 = vunpack.c.l.b16 %v1323
    %v1363 = vunpack.c.l.b16 %v1324
    %v1364 = vunpack.c.l.b16 %v1325
    %v1365 = vunpack.c.l.b16 %v1326
    %v1366 = vunpack.c.l.b16 %v1327
    %v1367 = vunpack.c.l.b16 %v1328
    %v1368 = vunpack.c.l.b16 %v1329
    %v1369 = vunpack.c.l.b16 %v1330
    %v1370 = vpack.c.b16 %v1355, %v1354
    %v1371 = vpack.c.b16 %v1357, %v1356
    %v1372 = vpack.c.b16 %v1359, %v1358
    %v1373 = vpack.c.b16 %v1361, %v1360
    %v1374 = vpack.c.b16 %v1363, %v1362
    %v1375 = vpack.c.b16 %v1365, %v1364
    %v1376 = vpack.c.b16 %v1367, %v1366
    %v1377 = vpack.c.b16 %v1369, %v1368
    %1386 = vmatprep.subr.bf16.mxu0 0
    %1387 = vmatpush1.bf16.msra.mxu0 %v1377
    %1388 = vmatprep.subr.bf16.mxu0 0
    %1389 = vmatpush1.bf16.msra.mxu0 %v1376
    %1390 = vmatprep.subr.bf16.mxu0 0
    %1391 = vmatpush1.bf16.msra.mxu0 %v1375
    %1392 = vmatprep.subr.bf16.mxu0 0
    %1393 = vmatpush1.bf16.msra.mxu0 %v1374
    %1394 = vmatprep.subr.bf16.mxu0 0
    %1395 = vmatpush1.bf16.msra.mxu0 %v1373
    %1396 = vmatprep.subr.bf16.mxu0 0
    %1397 = vmatpush1.bf16.msra.mxu0 %v1372
    %1398 = vmatprep.subr.bf16.mxu0 0
    %1399 = vmatpush1.bf16.msra.mxu0 %v1371
    %1400 = vmatprep.subr.bf16.mxu0 0
    %1401 = vmatpush1.bf16.msra.mxu0 %v1370
    %1402 = vmatprep.subr.bf16.mxu0 0
    %1403 = vmatpush2.bf16.msra.mxu0 0
    %1404 = vmatprep.subr.bf16.mxu0 0
    %1405 = vmatpush2.bf16.msra.mxu0 0
    %1406 = vmatprep.subr.bf16.mxu0 0
    %1407 = vmatpush2.bf16.msra.mxu0 0
    %1408 = vmatprep.subr.bf16.mxu0 0
    %1409 = vmatpush2.bf16.msra.mxu0 0
    %1410 = vmatprep.subr.bf16.mxu0 0
    %1411 = vmatpush2.bf16.msra.mxu0 0
    %1412 = vmatprep.subr.bf16.mxu0 0
    %1413 = vmatpush2.bf16.msra.mxu0 0
    %1414 = vmatprep.subr.bf16.mxu0 0
    %1415 = vmatpush2.bf16.msra.mxu0 0
    %1416 = vmatprep.subr.bf16.mxu0 0
    %1417 = vmatpush2.bf16.msra.mxu0 0
    %1418 = vmatprep.mubr.bf16.mxu0 0
    %1419 = vmatmul.mubr.bf16.gmra.mxu0 %v1314
    %v1420 = vpop.f32.mrf.mxu0
    %v1421 = vadd.f32 %v1336, %v1420
    %v1422 = vpop.f32.mrf.mxu0
    %v1423 = vpop.f32.mrf.mxu0
    %v1424 = vadd.f32 %v1336, %v1423
    %v1425 = vpop.f32.mrf.mxu0
    %1426 = vdwg.mxu0
    %v1427 = vadd.f32 %v77, %v1421
    %v1428 = vadd.f32 %v78, %v1424
    %v1429 = vld [vmem:[%s6] sm:$0x1]
    %v1430 = vld [vmem:[%s7] sm:$0x1]
    %1431 = vadd.xlane.f32.xlu0 %v1427
    %v1432 = vpop.xlane.xlu0 %1431
    %1433 = vadd.xlane.f32.xlu0 %v1428
    %v1434 = vpop.xlane.xlu0 %1433
    %v1435 = vrcp.pop 128.0
    %v1436 = vmul.f32 %v1432, %v1435
    %v1437 = vmul.f32 %v1434, %v1435
    %v1438 = vsub.f32 %v1427, %v1436
    %v1439 = vsub.f32 %v1428, %v1437
    %v1440 = vmul.f32 %v1438, %v1438
    %v1441 = vmul.f32 %v1439, %v1439
    %1442 = vadd.xlane.f32.xlu0 %v1440
    %v1443 = vpop.xlane.xlu0 %1442
    %1444 = vadd.xlane.f32.xlu0 %v1441
    %v1445 = vpop.xlane.xlu0 %1444
    %v1446 = vmul.f32 %v1443, %v1435
    %v1447 = vmul.f32 %v1445, %v1435
    %v1448 = vadd.f32 %v1446, 1e-12
    %v1449 = vadd.f32 %v1447, 1e-12
    %v1450 = vrsqrt.pop %v1448
    %v1451 = vrsqrt.pop %v1449
    %v1452 = vmul.f32 %v1438, %v1450
    %v1453 = vmul.f32 %v1439, %v1451
    %v1455 = vlaneseq
    %v1456 = vshrl.u32 %v1455, 7
    %v1457 = vsub.s32 0, %v1456
    %v1458 = vrot.slane %v1429, %v1457
    %v1460 = vmul.f32 %v1452, %v1458
    %v1461 = vmul.f32 %v1453, %v1458
    %v1463 = vlaneseq
    %v1464 = vshrl.u32 %v1463, 7
    %v1465 = vsub.s32 0, %v1464
    %v1466 = vrot.slane %v1430, %v1465
    %v1468 = vadd.f32 %v1460, %v1466
    %v1469 = vadd.f32 %v1461, %v1466
    %v1470 = vpack.c.bf16 %v1469, %v1468
    %v1471 = vld [vmem:[%s8] sm:$0xff]
    %v1472 = vld [vmem:[%s8 + $0x8] sm:$0xff]
    %v1473 = vld [vmem:[%s8 + $0x10] sm:$0xff]
    %v1474 = vld [vmem:[%s8 + $0x18] sm:$0xff]
    %v1475 = vld [vmem:[%s8 + $0x20] sm:$0xff]
    %v1476 = vld [vmem:[%s8 + $0x28] sm:$0xff]
    %v1477 = vld [vmem:[%s8 + $0x30] sm:$0xff]
    %v1478 = vld [vmem:[%s8 + $0x38] sm:$0xff]
    %v1479 = vld [vmem:[%s8 + $0x40] sm:$0xff]
    %v1480 = vld [vmem:[%s8 + $0x48] sm:$0xff]
    %v1481 = vld [vmem:[%s8 + $0x50] sm:$0xff]
    %v1482 = vld [vmem:[%s8 + $0x58] sm:$0xff]
    %v1483 = vld [vmem:[%s8 + $0x60] sm:$0xff]
    %v1484 = vld [vmem:[%s8 + $0x68] sm:$0xff]
    %v1485 = vld [vmem:[%s8 + $0x70] sm:$0xff]
    %v1486 = vld [vmem:[%s8 + $0x78] sm:$0xff]
    %v1487 = vld [vmem:[%s9] sm:$0x3]
    %v1489 = vlaneseq
    %v1490 = vshrl.u32 %v1489, 7
    %v1491 = vsub.s32 0, %v1490
    %v1492 = vrot.slane %v1487, %v1491
    %v1493 = vlaneseq
    %v1494 = vshrl.u32 %v1493, 7
    %v1495 = vsub.s32 1, %v1494
    %v1496 = vrot.slane %v1487, %v1495
    %v1515 = vunpack.c.l.b16 %v1471
    %v1516 = vunpack.c.h.b16 %v1471
    %v1517 = vunpack.c.l.b16 %v1472
    %v1518 = vunpack.c.h.b16 %v1472
    %v1519 = vunpack.c.l.b16 %v1473
    %v1520 = vunpack.c.h.b16 %v1473
    %v1521 = vunpack.c.l.b16 %v1474
    %v1522 = vunpack.c.h.b16 %v1474
    %v1523 = vunpack.c.l.b16 %v1475
    %v1524 = vunpack.c.h.b16 %v1475
    %v1525 = vunpack.c.l.b16 %v1476
    %v1526 = vunpack.c.h.b16 %v1476
    %v1527 = vunpack.c.l.b16 %v1477
    %v1528 = vunpack.c.h.b16 %v1477
    %v1529 = vunpack.c.l.b16 %v1478
    %v1530 = vunpack.c.h.b16 %v1478
    %v1531 = vunpack.c.l.b16 %v1479
    %v1532 = vunpack.c.h.b16 %v1479
    %v1533 = vunpack.c.l.b16 %v1480
    %v1534 = vunpack.c.h.b16 %v1480
    %v1535 = vunpack.c.l.b16 %v1481
    %v1536 = vunpack.c.h.b16 %v1481
    %v1537 = vunpack.c.l.b16 %v1482
    %v1538 = vunpack.c.h.b16 %v1482
    %v1539 = vunpack.c.l.b16 %v1483
    %v1540 = vunpack.c.h.b16 %v1483
    %v1541 = vunpack.c.l.b16 %v1484
    %v1542 = vunpack.c.h.b16 %v1484
    %v1543 = vunpack.c.l.b16 %v1485
    %v1544 = vunpack.c.h.b16 %v1485
    %v1545 = vunpack.c.l.b16 %v1486
    %v1546 = vunpack.c.h.b16 %v1486
    %v1547 = vpack.c.b16 %v1517, %v1515
    %v1548 = vpack.c.b16 %v1518, %v1516
    %v1549 = vpack.c.b16 %v1521, %v1519
    %v1550 = vpack.c.b16 %v1522, %v1520
    %v1551 = vpack.c.b16 %v1525, %v1523
    %v1552 = vpack.c.b16 %v1526, %v1524
    %v1553 = vpack.c.b16 %v1529, %v1527
    %v1554 = vpack.c.b16 %v1530, %v1528
    %v1555 = vpack.c.b16 %v1533, %v1531
    %v1556 = vpack.c.b16 %v1534, %v1532
    %v1557 = vpack.c.b16 %v1537, %v1535
    %v1558 = vpack.c.b16 %v1538, %v1536
    %v1559 = vpack.c.b16 %v1541, %v1539
    %v1560 = vpack.c.b16 %v1542, %v1540
    %v1561 = vpack.c.b16 %v1545, %v1543
    %v1562 = vpack.c.b16 %v1546, %v1544
    %1579 = vmatprep.subr.bf16.mxu0 %v1562
    %1580 = vmatpush1.bf16.msra.mxu0 %v1561
    %1581 = vmatprep.subr.bf16.mxu0 %v1560
    %1582 = vmatpush1.bf16.msra.mxu0 %v1559
    %1583 = vmatprep.subr.bf16.mxu0 %v1558
    %1584 = vmatpush1.bf16.msra.mxu0 %v1557
    %1585 = vmatprep.subr.bf16.mxu0 %v1556
    %1586 = vmatpush1.bf16.msra.mxu0 %v1555
    %1587 = vmatprep.subr.bf16.mxu0 %v1554
    %1588 = vmatpush1.bf16.msra.mxu0 %v1553
    %1589 = vmatprep.subr.bf16.mxu0 %v1552
    %1590 = vmatpush1.bf16.msra.mxu0 %v1551
    %1591 = vmatprep.subr.bf16.mxu0 %v1550
    %1592 = vmatpush1.bf16.msra.mxu0 %v1549
    %1593 = vmatprep.subr.bf16.mxu0 %v1548
    %1594 = vmatpush1.bf16.msra.mxu0 %v1547
    %1595 = vmatprep.subr.bf16.mxu0 0
    %1596 = vmatpush2.bf16.msra.mxu0 0
    %1597 = vmatprep.subr.bf16.mxu0 0
    %1598 = vmatpush2.bf16.msra.mxu0 0
    %1599 = vmatprep.subr.bf16.mxu0 0
    %1600 = vmatpush2.bf16.msra.mxu0 0
    %1601 = vmatprep.subr.bf16.mxu0 0
    %1602 = vmatpush2.bf16.msra.mxu0 0
    %1603 = vmatprep.subr.bf16.mxu0 0
    %1604 = vmatpush2.bf16.msra.mxu0 0
    %1605 = vmatprep.subr.bf16.mxu0 0
    %1606 = vmatpush2.bf16.msra.mxu0 0
    %1607 = vmatprep.subr.bf16.mxu0 0
    %1608 = vmatpush2.bf16.msra.mxu0 0
    %1609 = vmatprep.subr.bf16.mxu0 0
    %1610 = vmatpush2.bf16.msra.mxu0 0
    %1611 = vmatprep.mubr.bf16.mxu0 0
    %1612 = vmatmul.mubr.bf16.gmra.mxu0 %v1470
    %v1613 = vpop.f32.mrf.mxu0
    %v1614 = vadd.f32 %v1492, %v1613
    %v1615 = vpop.f32.mrf.mxu0
    %v1616 = vadd.f32 %v1496, %v1615
    %v1617 = vpop.f32.mrf.mxu0
    %v1618 = vadd.f32 %v1492, %v1617
    %v1619 = vpop.f32.mrf.mxu0
    %v1620 = vadd.f32 %v1496, %v1619
    %1621 = vdwg.mxu0
    %v1622 = vmul.f32 %v1614, %v1614
    %v1623 = vmul.f32 %v1616, %v1616
    %v1624 = vmul.f32 %v1618, %v1618
    %v1625 = vmul.f32 %v1620, %v1620
    %v1626 = vmul.f32 %v1614, %v1622
    %v1627 = vmul.f32 %v1616, %v1623
    %v1628 = vmul.f32 %v1618, %v1624
    %v1629 = vmul.f32 %v1620, %v1625
    %v1630 = vmul.f32 %v1626, 0.044715
    %v1631 = vmul.f32 %v1627, 0.044715
    %v1632 = vmul.f32 %v1628, 0.044715
    %v1633 = vmul.f32 %v1629, 0.044715
    %v1634 = vadd.f32 %v1614, %v1630
    %v1635 = vadd.f32 %v1616, %v1631
    %v1636 = vadd.f32 %v1618, %v1632
    %v1637 = vadd.f32 %v1620, %v1633
    %v1638 = vmul.f32 %v1634, 0.7978846
    %v1639 = vmul.f32 %v1635, 0.7978846
    %v1640 = vmul.f32 %v1636, 0.7978846
    %v1641 = vmul.f32 %v1637, 0.7978846
    %v1642 = vtanh.pop %v1638
    %v1643 = vtanh.pop %v1639
    %v1644 = vtanh.pop %v1640
    %v1645 = vtanh.pop %v1641
    %v1646 = vadd.f32 %v1642, 1.0
    %v1647 = vadd.f32 %v1643, 1.0
    %v1648 = vadd.f32 %v1644, 1.0
    %v1649 = vadd.f32 %v1645, 1.0
    %v1650 = vmul.f32 %v1646, 0.5
    %v1651 = vmul.f32 %v1647, 0.5
    %v1652 = vmul.f32 %v1648, 0.5
    %v1653 = vmul.f32 %v1649, 0.5
    %v1654 = vmul.f32 %v1614, %v1650
    %v1655 = vmul.f32 %v1616, %v1651
    %v1656 = vmul.f32 %v1618, %v1652
    %v1657 = vmul.f32 %v1620, %v1653
    %v1658 = vpack.c.bf16 %v1656, %v1654
    %v1659 = vpack.c.bf16 %v1657, %v1655
    %v1660 = vld [vmem:[#allocation5] sm:$0xf]
    %v1661 = vld [vmem:[#allocation5 + $0x4] sm:$0xf]
    %v1662 = vld [vmem:[#allocation5 + $0x8] sm:$0xf]
    %v1663 = vld [vmem:[#allocation5 + $0xc] sm:$0xf]
    %v1664 = vld [vmem:[#allocation5 + $0x10] sm:$0xf]
    %v1665 = vld [vmem:[#allocation5 + $0x14] sm:$0xf]
    %v1666 = vld [vmem:[#allocation5 + $0x18] sm:$0xf]
    %v1667 = vld [vmem:[#allocation5 + $0x1c] sm:$0xf]
    %v1668 = vld [vmem:[#allocation5 + $0x20] sm:$0xf]
    %v1669 = vld [vmem:[#allocation5 + $0x24] sm:$0xf]
    %v1670 = vld [vmem:[#allocation5 + $0x28] sm:$0xf]
    %v1671 = vld [vmem:[#allocation5 + $0x2c] sm:$0xf]
    %v1672 = vld [vmem:[#allocation5 + $0x30] sm:$0xf]
    %v1673 = vld [vmem:[#allocation5 + $0x34] sm:$0xf]
    %v1674 = vld [vmem:[#allocation5 + $0x38] sm:$0xf]
    %v1675 = vld [vmem:[#allocation5 + $0x3c] sm:$0xf]
    %v1676 = vld [vmem:[#allocation5 + $0x40] sm:$0xf]
    %v1677 = vld [vmem:[#allocation5 + $0x44] sm:$0xf]
    %v1678 = vld [vmem:[#allocation5 + $0x48] sm:$0xf]
    %v1679 = vld [vmem:[#allocation5 + $0x4c] sm:$0xf]
    %v1680 = vld [vmem:[#allocation5 + $0x50] sm:$0xf]
    %v1681 = vld [vmem:[#allocation5 + $0x54] sm:$0xf]
    %v1682 = vld [vmem:[#allocation5 + $0x58] sm:$0xf]
    %v1683 = vld [vmem:[#allocation5 + $0x5c] sm:$0xf]
    %v1684 = vld [vmem:[#allocation5 + $0x60] sm:$0xf]
    %v1685 = vld [vmem:[#allocation5 + $0x64] sm:$0xf]
    %v1686 = vld [vmem:[#allocation5 + $0x68] sm:$0xf]
    %v1687 = vld [vmem:[#allocation5 + $0x6c] sm:$0xf]
    %v1688 = vld [vmem:[#allocation5 + $0x70] sm:$0xf]
    %v1689 = vld [vmem:[#allocation5 + $0x74] sm:$0xf]
    %v1690 = vld [vmem:[#allocation5 + $0x78] sm:$0xf]
    %v1691 = vld [vmem:[#allocation5 + $0x7c] sm:$0xf]
    %v1692 = vld [vmem:[%s11] sm:$0x1]
    %v1694 = vlaneseq
    %v1695 = vshrl.u32 %v1694, 7
    %v1696 = vsub.s32 0, %v1695
    %v1697 = vrot.slane %v1692, %v1696
    %v1731 = vunpack.c.l.b16 %v1660
    %v1732 = vunpack.c.l.b16 %v1661
    %v1733 = vunpack.c.l.b16 %v1662
    %v1734 = vunpack.c.l.b16 %v1663
    %v1735 = vunpack.c.l.b16 %v1664
    %v1736 = vunpack.c.l.b16 %v1665
    %v1737 = vunpack.c.l.b16 %v1666
    %v1738 = vunpack.c.l.b16 %v1667
    %v1739 = vunpack.c.l.b16 %v1668
    %v1740 = vunpack.c.l.b16 %v1669
    %v1741 = vunpack.c.l.b16 %v1670
    %v1742 = vunpack.c.l.b16 %v1671
    %v1743 = vunpack.c.l.b16 %v1672
    %v1744 = vunpack.c.l.b16 %v1673
    %v1745 = vunpack.c.l.b16 %v1674
    %v1746 = vunpack.c.l.b16 %v1675
    %v1747 = vunpack.c.l.b16 %v1676
    %v1748 = vunpack.c.l.b16 %v1677
    %v1749 = vunpack.c.l.b16 %v1678
    %v1750 = vunpack.c.l.b16 %v1679
    %v1751 = vunpack.c.l.b16 %v1680
    %v1752 = vunpack.c.l.b16 %v1681
    %v1753 = vunpack.c.l.b16 %v1682
    %v1754 = vunpack.c.l.b16 %v1683
    %v1755 = vunpack.c.l.b16 %v1684
    %v1756 = vunpack.c.l.b16 %v1685
    %v1757 = vunpack.c.l.b16 %v1686
    %v1758 = vunpack.c.l.b16 %v1687
    %v1759 = vunpack.c.l.b16 %v1688
    %v1760 = vunpack.c.l.b16 %v1689
    %v1761 = vunpack.c.l.b16 %v1690
    %v1762 = vunpack.c.l.b16 %v1691
    %v1763 = vpack.c.b16 %v1732, %v1731
    %v1764 = vpack.c.b16 %v1734, %v1733
    %v1765 = vpack.c.b16 %v1736, %v1735
    %v1766 = vpack.c.b16 %v1738, %v1737
    %v1767 = vpack.c.b16 %v1740, %v1739
    %v1768 = vpack.c.b16 %v1742, %v1741
    %v1769 = vpack.c.b16 %v1744, %v1743
    %v1770 = vpack.c.b16 %v1746, %v1745
    %v1771 = vpack.c.b16 %v1748, %v1747
    %v1772 = vpack.c.b16 %v1750, %v1749
    %v1773 = vpack.c.b16 %v1752, %v1751
    %v1774 = vpack.c.b16 %v1754, %v1753
    %v1775 = vpack.c.b16 %v1756, %v1755
    %v1776 = vpack.c.b16 %v1758, %v1757
    %v1777 = vpack.c.b16 %v1760, %v1759
    %v1778 = vpack.c.b16 %v1762, %v1761
    %1795 = vmatprep.subr.bf16.mxu0 0
    %1796 = vmatpush1.bf16.msra.mxu0 %v1770
    %1797 = vmatprep.subr.bf16.mxu0 0
    %1798 = vmatpush1.bf16.msra.mxu0 %v1769
    %1799 = vmatprep.subr.bf16.mxu0 0
    %1800 = vmatpush1.bf16.msra.mxu0 %v1768
    %1801 = vmatprep.subr.bf16.mxu0 0
    %1802 = vmatpush1.bf16.msra.mxu0 %v1767
    %1803 = vmatprep.subr.bf16.mxu0 0
    %1804 = vmatpush1.bf16.msra.mxu0 %v1766
    %1805 = vmatprep.subr.bf16.mxu0 0
    %1806 = vmatpush1.bf16.msra.mxu0 %v1765
    %1807 = vmatprep.subr.bf16.mxu0 0
    %1808 = vmatpush1.bf16.msra.mxu0 %v1764
    %1809 = vmatprep.subr.bf16.mxu0 0
    %1810 = vmatpush1.bf16.msra.mxu0 %v1763
    %1811 = vmatprep.subr.bf16.mxu0 0
    %1812 = vmatpush2.bf16.msra.mxu0 %v1778
    %1813 = vmatprep.subr.bf16.mxu0 0
    %1814 = vmatpush2.bf16.msra.mxu0 %v1777
    %1815 = vmatprep.subr.bf16.mxu0 0
    %1816 = vmatpush2.bf16.msra.mxu0 %v1776
    %1817 = vmatprep.subr.bf16.mxu0 0
    %1818 = vmatpush2.bf16.msra.mxu0 %v1775
    %1819 = vmatprep.subr.bf16.mxu0 0
    %1820 = vmatpush2.bf16.msra.mxu0 %v1774
    %1821 = vmatprep.subr.bf16.mxu0 0
    %1822 = vmatpush2.bf16.msra.mxu0 %v1773
    %1823 = vmatprep.subr.bf16.mxu0 0
    %1824 = vmatpush2.bf16.msra.mxu0 %v1772
    %1825 = vmatprep.subr.bf16.mxu0 0
    %1826 = vmatpush2.bf16.msra.mxu0 %v1771
    %1827 = vmatprep.mubr.bf16.mxu0 %v1659
    %1828 = vmatmul.mubr.bf16.gmra.mxu0 %v1658
    %v1829 = vpop.f32.mrf.mxu0
    %v1830 = vadd.f32 %v1697, %v1829
    %v1831 = vpop.f32.mrf.mxu0
    %v1832 = vpop.f32.mrf.mxu0
    %v1833 = vadd.f32 %v1697, %v1832
    %v1834 = vpop.f32.mrf.mxu0
    %1835 = vdwg.mxu0
    %v1836 = vadd.f32 %v1468, %v1830
    %v1837 = vadd.f32 %v1469, %v1833
    %v1838 = vld [vmem:[%s12] sm:$0x1]
    %v1839 = vld [vmem:[%s13] sm:$0x1]
    %1840 = vadd.xlane.f32.xlu0 %v1836
    %v1841 = vpop.xlane.xlu0 %1840
    %1842 = vadd.xlane.f32.xlu0 %v1837
    %v1843 = vpop.xlane.xlu0 %1842
    %v1844 = vmul.f32 %v1841, %v1435
    %v1845 = vmul.f32 %v1843, %v1435
    %v1846 = vsub.f32 %v1836, %v1844
    %v1847 = vsub.f32 %v1837, %v1845
    %v1848 = vmul.f32 %v1846, %v1846
    %v1849 = vmul.f32 %v1847, %v1847
    %1850 = vadd.xlane.f32.xlu0 %v1848
    %v1851 = vpop.xlane.xlu0 %1850
    %1852 = vadd.xlane.f32.xlu0 %v1849
    %v1853 = vpop.xlane.xlu0 %1852
    %v1854 = vmul.f32 %v1851, %v1435
    %v1855 = vmul.f32 %v1853, %v1435
    %v1856 = vadd.f32 %v1854, 1e-12
    %v1857 = vadd.f32 %v1855, 1e-12
    %v1858 = vrsqrt.pop %v1856
    %v1859 = vrsqrt.pop %v1857
    %v1860 = vmul.f32 %v1846, %v1858
    %v1861 = vmul.f32 %v1847, %v1859
    %v1863 = vlaneseq
    %v1864 = vshrl.u32 %v1863, 7
    %v1865 = vsub.s32 0, %v1864
    %v1866 = vrot.slane %v1838, %v1865
    %v1868 = vmul.f32 %v1860, %v1866
    %v1869 = vmul.f32 %v1861, %v1866
    %v1871 = vlaneseq
    %v1872 = vshrl.u32 %v1871, 7
    %v1873 = vsub.s32 0, %v1872
    %v1874 = vrot.slane %v1839, %v1873
    %v1876 = vadd.f32 %v1868, %v1874
    %v1877 = vadd.f32 %v1869, %v1874
    %v1878 = vpack.c.bf16 %v1877, %v1876
    %s1879 = scalar_lea.vmem [#allocation2], 192
    %v1880 = vld [vmem:[%s1879] sm:$0xff]
    %v1881 = vld [vmem:[%s1879 + $0x8] sm:$0xf]
    %v1882 = vld [vmem:[%s1879 + $0xc] sm:$0xff]
    %v1883 = vld [vmem:[%s1879 + $0x14] sm:$0xf]
    %v1884 = vld [vmem:[%s1879 + $0x18] sm:$0xff]
    %v1885 = vld [vmem:[%s1879 + $0x20] sm:$0xf]
    %v1886 = vld [vmem:[%s1879 + $0x24] sm:$0xff]
    %v1887 = vld [vmem:[%s1879 + $0x2c] sm:$0xf]
    %v1888 = vld [vmem:[%s1879 + $0x30] sm:$0xff]
    %v1889 = vld [vmem:[%s1879 + $0x38] sm:$0xf]
    %v1890 = vld [vmem:[%s1879 + $0x3c] sm:$0xff]
    %v1891 = vld [vmem:[%s1879 + $0x44] sm:$0xf]
    %v1892 = vld [vmem:[%s1879 + $0x48] sm:$0xff]
    %v1893 = vld [vmem:[%s1879 + $0x50] sm:$0xf]
    %v1894 = vld [vmem:[%s1879 + $0x54] sm:$0xff]
    %v1895 = vld [vmem:[%s1879 + $0x5c] sm:$0xf]
    %v1896 = vld [vmem:[%s1879 + $0x60] sm:$0xff]
    %v1897 = vld [vmem:[%s1879 + $0x68] sm:$0xf]
    %v1898 = vld [vmem:[%s1879 + $0x6c] sm:$0xff]
    %v1899 = vld [vmem:[%s1879 + $0x74] sm:$0xf]
    %v1900 = vld [vmem:[%s1879 + $0x78] sm:$0xff]
    %v1901 = vld [vmem:[%s1879 + $0x80] sm:$0xf]
    %v1902 = vld [vmem:[%s1879 + $0x84] sm:$0xff]
    %v1903 = vld [vmem:[%s1879 + $0x8c] sm:$0xf]
    %v1904 = vld [vmem:[%s1879 + $0x90] sm:$0xff]
    %v1905 = vld [vmem:[%s1879 + $0x98] sm:$0xf]
    %v1906 = vld [vmem:[%s1879 + $0x9c] sm:$0xff]
    %v1907 = vld [vmem:[%s1879 + $0xa4] sm:$0xf]
    %v1908 = vld [vmem:[%s1879 + $0xa8] sm:$0xff]
    %v1909 = vld [vmem:[%s1879 + $0xb0] sm:$0xf]
    %v1910 = vld [vmem:[%s1879 + $0xb4] sm:$0xff]
    %v1911 = vld [vmem:[%s1879 + $0xbc] sm:$0xf]
    %s1912 = scalar_lea.vmem %s3, 3
    %v1913 = vld [vmem:[%s1912] sm:$0x7]
    %v1915 = vlaneseq
    %v1916 = vshrl.u32 %v1915, 7
    %v1917 = vsub.s32 0, %v1916
    %v1918 = vrot.slane %v1913, %v1917
    %v1919 = vlaneseq
    %v1920 = vshrl.u32 %v1919, 7
    %v1921 = vsub.s32 1, %v1920
    %v1922 = vrot.slane %v1913, %v1921
    %v1923 = vlaneseq
    %v1924 = vshrl.u32 %v1923, 7
    %v1925 = vsub.s32 2, %v1924
    %v1926 = vrot.slane %v1913, %v1925
    %v1962 = vunpack.c.l.b16 %v1880
    %v1963 = vunpack.c.h.b16 %v1880
    %v1964 = vunpack.c.l.b16 %v1881
    %v1965 = vunpack.c.l.b16 %v1882
    %v1966 = vunpack.c.h.b16 %v1882
    %v1967 = vunpack.c.l.b16 %v1883
    %v1968 = vunpack.c.l.b16 %v1884
    %v1969 = vunpack.c.h.b16 %v1884
    %v1970 = vunpack.c.l.b16 %v1885
    %v1971 = vunpack.c.l.b16 %v1886
    %v1972 = vunpack.c.h.b16 %v1886
    %v1973 = vunpack.c.l.b16 %v1887
    %v1974 = vunpack.c.l.b16 %v1888
    %v1975 = vunpack.c.h.b16 %v1888
    %v1976 = vunpack.c.l.b16 %v1889
    %v1977 = vunpack.c.l.b16 %v1890
    %v1978 = vunpack.c.h.b16 %v1890
    %v1979 = vunpack.c.l.b16 %v1891
    %v1980 = vunpack.c.l.b16 %v1892
    %v1981 = vunpack.c.h.b16 %v1892
    %v1982 = vunpack.c.l.b16 %v1893
    %v1983 = vunpack.c.l.b16 %v1894
    %v1984 = vunpack.c.h.b16 %v1894
    %v1985 = vunpack.c.l.b16 %v1895
    %v1986 = vunpack.c.l.b16 %v1896
    %v1987 = vunpack.c.h.b16 %v1896
    %v1988 = vunpack.c.l.b16 %v1897
    %v1989 = vunpack.c.l.b16 %v1898
    %v1990 = vunpack.c.h.b16 %v1898
    %v1991 = vunpack.c.l.b16 %v1899
    %v1992 = vunpack.c.l.b16 %v1900
    %v1993 = vunpack.c.h.b16 %v1900
    %v1994 = vunpack.c.l.b16 %v1901
    %v1995 = vunpack.c.l.b16 %v1902
    %v1996 = vunpack.c.h.b16 %v1902
    %v1997 = vunpack.c.l.b16 %v1903
    %v1998 = vunpack.c.l.b16 %v1904
    %v1999 = vunpack.c.h.b16 %v1904
    %v2000 = vunpack.c.l.b16 %v1905
    %v2001 = vunpack.c.l.b16 %v1906
    %v2002 = vunpack.c.h.b16 %v1906
    %v2003 = vunpack.c.l.b16 %v1907
    %v2004 = vunpack.c.l.b16 %v1908
    %v2005 = vunpack.c.h.b16 %v1908
    %v2006 = vunpack.c.l.b16 %v1909
    %v2007 = vunpack.c.l.b16 %v1910
    %v2008 = vunpack.c.h.b16 %v1910
    %v2009 = vunpack.c.l.b16 %v1911
    %v2010 = vpack.c.b16 %v1965, %v1962
    %v2011 = vpack.c.b16 %v1966, %v1963
    %v2012 = vpack.c.b16 %v1967, %v1964
    %v2013 = vpack.c.b16 %v1971, %v1968
    %v2014 = vpack.c.b16 %v1972, %v1969
    %v2015 = vpack.c.b16 %v1973, %v1970
    %v2016 = vpack.c.b16 %v1977, %v1974
    %v2017 = vpack.c.b16 %v1978, %v1975
    %v2018 = vpack.c.b16 %v1979, %v1976
    %v2019 = vpack.c.b16 %v1983, %v1980
    %v2020 = vpack.c.b16 %v1984, %v1981
    %v2021 = vpack.c.b16 %v1985, %v1982
    %v2022 = vpack.c.b16 %v1989, %v1986
    %v2023 = vpack.c.b16 %v1990, %v1987
    %v2024 = vpack.c.b16 %v1991, %v1988
    %v2025 = vpack.c.b16 %v1995, %v1992
    %v2026 = vpack.c.b16 %v1996, %v1993
    %v2027 = vpack.c.b16 %v1997, %v1994
    %v2028 = vpack.c.b16 %v2001, %v1998
    %v2029 = vpack.c.b16 %v2002, %v1999
    %v2030 = vpack.c.b16 %v2003, %v2000
    %v2031 = vpack.c.b16 %v2007, %v2004
    %v2032 = vpack.c.b16 %v2008, %v2005
    %v2033 = vpack.c.b16 %v2009, %v2006
    %2058 = vmatprep.subr.bf16.mxu0 %v2032
    %2059 = vmatpush1.bf16.msra.mxu0 %v2031
    %2060 = vmatprep.subr.bf16.mxu0 %v2029
    %2061 = vmatpush1.bf16.msra.mxu0 %v2028
    %2062 = vmatprep.subr.bf16.mxu0 %v2026
    %2063 = vmatpush1.bf16.msra.mxu0 %v2025
    %2064 = vmatprep.subr.bf16.mxu0 %v2023
    %2065 = vmatpush1.bf16.msra.mxu0 %v2022
    %2066 = vmatprep.subr.bf16.mxu0 %v2020
    %2067 = vmatpush1.bf16.msra.mxu0 %v2019
    %2068 = vmatprep.subr.bf16.mxu0 %v2017
    %2069 = vmatpush1.bf16.msra.mxu0 %v2016
    %2070 = vmatprep.subr.bf16.mxu0 %v2014
    %2071 = vmatpush1.bf16.msra.mxu0 %v2013
    %2072 = vmatprep.subr.bf16.mxu0 %v2011
    %2073 = vmatpush1.bf16.msra.mxu0 %v2010
    %2074 = vmatprep.subr.bf16.mxu0 0
    %2075 = vmatpush2.bf16.msra.mxu0 0
    %2076 = vmatprep.subr.bf16.mxu0 0
    %2077 = vmatpush2.bf16.msra.mxu0 0
    %2078 = vmatprep.subr.bf16.mxu0 0
    %2079 = vmatpush2.bf16.msra.mxu0 0
    %2080 = vmatprep.subr.bf16.mxu0 0
    %2081 = vmatpush2.bf16.msra.mxu0 0
    %2082 = vmatprep.subr.bf16.mxu0 0
    %2083 = vmatpush2.bf16.msra.mxu0 0
    %2084 = vmatprep.subr.bf16.mxu0 0
    %2085 = vmatpush2.bf16.msra.mxu0 0
    %2086 = vmatprep.subr.bf16.mxu0 0
    %2087 = vmatpush2.bf16.msra.mxu0 0
    %2088 = vmatprep.subr.bf16.mxu0 0
    %2089 = vmatpush2.bf16.msra.mxu0 0
    %2090 = vmatprep.mubr.bf16.mxu0 0
    %2091 = vmatmul.mubr.bf16.gmra.mxu0 %v1878
    %v2092 = vpop.f32.mrf.mxu0
    %v2093 = vadd.f32 %v1918, %v2092
    %v2094 = vpop.f32.mrf.mxu0
    %v2095 = vadd.f32 %v1922, %v2094
    %v2096 = vpop.f32.mrf.mxu0
    %v2097 = vadd.f32 %v1918, %v2096
    %v2098 = vpop.f32.mrf.mxu0
    %v2099 = vadd.f32 %v1922, %v2098
    %2100 = vdwg.mxu0
    %2101 = vmatprep.subr.bf16.mxu0 0
    %2102 = vmatpush1.bf16.msra.mxu0 %v2033
    %2103 = vmatprep.subr.bf16.mxu0 0
    %2104 = vmatpush1.bf16.msra.mxu0 %v2030
    %2105 = vmatprep.subr.bf16.mxu0 0
    %2106 = vmatpush1.bf16.msra.mxu0 %v2027
    %2107 = vmatprep.subr.bf16.mxu0 0
    %2108 = vmatpush1.bf16.msra.mxu0 %v2024
    %2109 = vmatprep.subr.bf16.mxu0 0
    %2110 = vmatpush1.bf16.msra.mxu0 %v2021
    %2111 = vmatprep.subr.bf16.mxu0 0
    %2112 = vmatpush1.bf16.msra.mxu0 %v2018
    %2113 = vmatprep.subr.bf16.mxu0 0
    %2114 = vmatpush1.bf16.msra.mxu0 %v2015
    %2115 = vmatprep.subr.bf16.mxu0 0
    %2116 = vmatpush1.bf16.msra.mxu0 %v2012
    %2117 = vmatprep.subr.bf16.mxu0 0
    %2118 = vmatpush2.bf16.msra.mxu0 0
    %2119 = vmatprep.subr.bf16.mxu0 0
    %2120 = vmatpush2.bf16.msra.mxu0 0
    %2121 = vmatprep.subr.bf16.mxu0 0
    %2122 = vmatpush2.bf16.msra.mxu0 0
    %2123 = vmatprep.subr.bf16.mxu0 0
    %2124 = vmatpush2.bf16.msra.mxu0 0
    %2125 = vmatprep.subr.bf16.mxu0 0
    %2126 = vmatpush2.bf16.msra.mxu0 0
    %2127 = vmatprep.subr.bf16.mxu0 0
    %2128 = vmatpush2.bf16.msra.mxu0 0
    %2129 = vmatprep.subr.bf16.mxu0 0
    %2130 = vmatpush2.bf16.msra.mxu0 0
    %2131 = vmatprep.subr.bf16.mxu0 0
    %2132 = vmatpush2.bf16.msra.mxu0 0
    %2133 = vmatprep.mubr.bf16.mxu0 0
    %2134 = vmatmul.mubr.bf16.gmra.mxu0 %v1878
    %v2135 = vpop.f32.mrf.mxu0
    %v2136 = vadd.f32 %v1926, %v2135
    %v2137 = vpop.f32.mrf.mxu0
    %v2138 = vpop.f32.mrf.mxu0
    %v2139 = vadd.f32 %v1926, %v2138
    %v2140 = vpop.f32.mrf.mxu0
    %2141 = vdwg.mxu0
    %v2142 = vpack.c.bf16 %v2097, %v2093
    %v2143 = vpack.c.bf16 %v2099, %v2095
    %v2144 = vpack.c.bf16 %v2139, %v2136
    %v2146 = vunpack.c.l.b16 %v2142
    %v2147 = vunpack.c.h.b16 %v2142
    %v2148 = vpack.c.b16 %v2146, %v2146
    %v2149 = vpack.c.b16 %v2147, %v2147
    %2150 = vrot.lane.b32.xlu0 %v2148, 96
    %v2151 = vpop.permute.xlu0 %2150
    %2152 = vrot.lane.b32.xlu0 %v2149, 96
    %v2153 = vpop.permute.xlu0 %2152
    %2154 = vrot.lane.b32.xlu0 %v2148, 64
    %v2155 = vpop.permute.xlu0 %2154
    %2156 = vrot.lane.b32.xlu0 %v2149, 64
    %v2157 = vpop.permute.xlu0 %2156
    %2158 = vrot.lane.b32.xlu0 %v2148, 32
    %v2159 = vpop.permute.xlu0 %2158
    %2160 = vrot.lane.b32.xlu0 %v2149, 32
    %v2161 = vpop.permute.xlu0 %2160
    %v2163 = vunpack.c.l.b16 %v2143
    %v2164 = vunpack.c.h.b16 %v2143
    %v2165 = vpack.c.b16 %v2163, %v2163
    %v2166 = vpack.c.b16 %v2164, %v2164
    %2167 = vrot.lane.b32.xlu0 %v2165, 96
    %v2168 = vpop.permute.xlu0 %2167
    %2169 = vrot.lane.b32.xlu0 %v2166, 96
    %v2170 = vpop.permute.xlu0 %2169
    %2171 = vrot.lane.b32.xlu0 %v2165, 64
    %v2172 = vpop.permute.xlu0 %2171
    %2173 = vrot.lane.b32.xlu0 %v2166, 64
    %v2174 = vpop.permute.xlu0 %2173
    %2175 = vrot.lane.b32.xlu0 %v2165, 32
    %v2176 = vpop.permute.xlu0 %2175
    %2177 = vrot.lane.b32.xlu0 %v2166, 32
    %v2178 = vpop.permute.xlu0 %2177
    %v2180 = vunpack.c.l.b16 %v2144
    %v2181 = vunpack.c.h.b16 %v2144
    %v2182 = vpack.c.b16 %v2180, %v2180
    %v2183 = vpack.c.b16 %v2181, %v2181
    %2184 = vrot.lane.b32.xlu0 %v2182, 96
    %v2185 = vpop.permute.xlu0 %2184
    %2186 = vrot.lane.b32.xlu0 %v2183, 96
    %v2187 = vpop.permute.xlu0 %2186
    %2188 = vrot.lane.b32.xlu0 %v2182, 64
    %v2189 = vpop.permute.xlu0 %2188
    %2190 = vrot.lane.b32.xlu0 %v2183, 64
    %v2191 = vpop.permute.xlu0 %2190
    %2192 = vrot.lane.b32.xlu0 %v2182, 32
    %v2193 = vpop.permute.xlu0 %2192
    %2194 = vrot.lane.b32.xlu0 %v2183, 32
    %v2195 = vpop.permute.xlu0 %2194
    %v2197 = vsel %vm421, %v2148, 0
    %v2200 = vsel %vm421, %v2165, 0
    %2202 = vmatprep.subr.bf16.mxu0 0
    %2203 = vmatpush1.bf16.xpose.msra.mxu0 0
    %2204 = vmatprep.subr.bf16.mxu0 0
    %2205 = vmatpush1.bf16.xpose.msra.mxu0 0
    %2206 = vmatprep.subr.bf16.mxu0 0
    %2207 = vmatpush1.bf16.xpose.msra.mxu0 0
    %2208 = vmatprep.subr.bf16.mxu0 0
    %2209 = vmatpush1.bf16.xpose.msra.mxu0 0
    %2210 = vmatprep.subr.bf16.mxu0 0
    %2211 = vmatpush1.bf16.xpose.msra.mxu0 0
    %2212 = vmatprep.subr.bf16.mxu0 0
    %2213 = vmatpush1.bf16.xpose.msra.mxu0 0
    %2214 = vmatprep.subr.bf16.mxu0 0
    %2215 = vmatpush1.bf16.xpose.msra.mxu0 0
    %2216 = vmatprep.subr.bf16.mxu0 0
    %2217 = vmatpush1.bf16.xpose.msra.mxu0 %v2200
    %2218 = vmatprep.subr.bf16.mxu0 0
    %2219 = vmatpush2.bf16.xpose.msra.mxu0 0
    %2220 = vmatprep.subr.bf16.mxu0 0
    %2221 = vmatpush2.bf16.xpose.msra.mxu0 0
    %2222 = vmatprep.subr.bf16.mxu0 0
    %2223 = vmatpush2.bf16.xpose.msra.mxu0 0
    %2224 = vmatprep.subr.bf16.mxu0 0
    %2225 = vmatpush2.bf16.xpose.msra.mxu0 0
    %2226 = vmatprep.subr.bf16.mxu0 0
    %2227 = vmatpush2.bf16.xpose.msra.mxu0 0
    %2228 = vmatprep.subr.bf16.mxu0 0
    %2229 = vmatpush2.bf16.xpose.msra.mxu0 0
    %2230 = vmatprep.subr.bf16.mxu0 0
    %2231 = vmatpush2.bf16.xpose.msra.mxu0 0
    %2232 = vmatprep.subr.bf16.mxu0 0
    %2233 = vmatpush2.bf16.xpose.msra.mxu0 0
    %2234 = vmatprep.mubr.bf16.mxu0 0
    %2235 = vmatmul.mubr.bf16.gmra.mxu0 %v2197
    %v2236 = vpop.f32.mrf.mxu0
    %v2237 = vadd.f32 0.0, %v2236
    %v2238 = vpop.f32.mrf.mxu0
    %v2239 = vpop.f32.mrf.mxu0
    %v2240 = vpop.f32.mrf.mxu0
    %2241 = vdwg.mxu0
    %v2243 = vsel %vm421, %v2151, 0
    %v2246 = vsel %vm421, %v2168, 0
    %2248 = vmatprep.subr.bf16.mxu0 0
    %2249 = vmatpush1.bf16.xpose.msra.mxu0 0
    %2250 = vmatprep.subr.bf16.mxu0 0
    %2251 = vmatpush1.bf16.xpose.msra.mxu0 0
    %2252 = vmatprep.subr.bf16.mxu0 0
    %2253 = vmatpush1.bf16.xpose.msra.mxu0 0
    %2254 = vmatprep.subr.bf16.mxu0 0
    %2255 = vmatpush1.bf16.xpose.msra.mxu0 0
    %2256 = vmatprep.subr.bf16.mxu0 0
    %2257 = vmatpush1.bf16.xpose.msra.mxu0 0
    %2258 = vmatprep.subr.bf16.mxu0 0
    %2259 = vmatpush1.bf16.xpose.msra.mxu0 0
    %2260 = vmatprep.subr.bf16.mxu0 0
    %2261 = vmatpush1.bf16.xpose.msra.mxu0 0
    %2262 = vmatprep.subr.bf16.mxu0 0
    %2263 = vmatpush1.bf16.xpose.msra.mxu0 %v2246
    %2264 = vmatprep.subr.bf16.mxu0 0
    %2265 = vmatpush2.bf16.xpose.msra.mxu0 0
    %2266 = vmatprep.subr.bf16.mxu0 0
    %2267 = vmatpush2.bf16.xpose.msra.mxu0 0
    %2268 = vmatprep.subr.bf16.mxu0 0
    %2269 = vmatpush2.bf16.xpose.msra.mxu0 0
    %2270 = vmatprep.subr.bf16.mxu0 0
    %2271 = vmatpush2.bf16.xpose.msra.mxu0 0
    %2272 = vmatprep.subr.bf16.mxu0 0
    %2273 = vmatpush2.bf16.xpose.msra.mxu0 0
    %2274 = vmatprep.subr.bf16.mxu0 0
    %2275 = vmatpush2.bf16.xpose.msra.mxu0 0
    %2276 = vmatprep.subr.bf16.mxu0 0
    %2277 = vmatpush2.bf16.xpose.msra.mxu0 0
    %2278 = vmatprep.subr.bf16.mxu0 0
    %2279 = vmatpush2.bf16.xpose.msra.mxu0 0
    %2280 = vmatprep.mubr.bf16.mxu0 0
    %2281 = vmatmul.mubr.bf16.gmra.mxu0 %v2243
    %v2282 = vpop.f32.mrf.mxu0
    %v2283 = vadd.f32 0.0, %v2282
    %v2284 = vpop.f32.mrf.mxu0
    %v2285 = vpop.f32.mrf.mxu0
    %v2286 = vpop.f32.mrf.mxu0
    %2287 = vdwg.mxu0
    %v2289 = vsel %vm421, %v2155, 0
    %v2292 = vsel %vm421, %v2172, 0
    %2294 = vmatprep.subr.bf16.mxu0 0
    %2295 = vmatpush1.bf16.xpose.msra.mxu0 0
    %2296 = vmatprep.subr.bf16.mxu0 0
    %2297 = vmatpush1.bf16.xpose.msra.mxu0 0
    %2298 = vmatprep.subr.bf16.mxu0 0
    %2299 = vmatpush1.bf16.xpose.msra.mxu0 0
    %2300 = vmatprep.subr.bf16.mxu0 0
    %2301 = vmatpush1.bf16.xpose.msra.mxu0 0
    %2302 = vmatprep.subr.bf16.mxu0 0
    %2303 = vmatpush1.bf16.xpose.msra.mxu0 0
    %2304 = vmatprep.subr.bf16.mxu0 0
    %2305 = vmatpush1.bf16.xpose.msra.mxu0 0
    %2306 = vmatprep.subr.bf16.mxu0 0
    %2307 = vmatpush1.bf16.xpose.msra.mxu0 0
    %2308 = vmatprep.subr.bf16.mxu0 0
    %2309 = vmatpush1.bf16.xpose.msra.mxu0 %v2292
    %2310 = vmatprep.subr.bf16.mxu0 0
    %2311 = vmatpush2.bf16.xpose.msra.mxu0 0
    %2312 = vmatprep.subr.bf16.mxu0 0
    %2313 = vmatpush2.bf16.xpose.msra.mxu0 0
    %2314 = vmatprep.subr.bf16.mxu0 0
    %2315 = vmatpush2.bf16.xpose.msra.mxu0 0
    %2316 = vmatprep.subr.bf16.mxu0 0
    %2317 = vmatpush2.bf16.xpose.msra.mxu0 0
    %2318 = vmatprep.subr.bf16.mxu0 0
    %2319 = vmatpush2.bf16.xpose.msra.mxu0 0
    %2320 = vmatprep.subr.bf16.mxu0 0
    %2321 = vmatpush2.bf16.xpose.msra.mxu0 0
    %2322 = vmatprep.subr.bf16.mxu0 0
    %2323 = vmatpush2.bf16.xpose.msra.mxu0 0
    %2324 = vmatprep.subr.bf16.mxu0 0
    %2325 = vmatpush2.bf16.xpose.msra.mxu0 0
    %2326 = vmatprep.mubr.bf16.mxu0 0
    %2327 = vmatmul.mubr.bf16.gmra.mxu0 %v2289
    %v2328 = vpop.f32.mrf.mxu0
    %v2329 = vadd.f32 0.0, %v2328
    %v2330 = vpop.f32.mrf.mxu0
    %v2331 = vpop.f32.mrf.mxu0
    %v2332 = vpop.f32.mrf.mxu0
    %2333 = vdwg.mxu0
    %v2335 = vsel %vm421, %v2159, 0
    %v2338 = vsel %vm421, %v2176, 0
    %2340 = vmatprep.subr.bf16.mxu0 0
    %2341 = vmatpush1.bf16.xpose.msra.mxu0 0
    %2342 = vmatprep.subr.bf16.mxu0 0
    %2343 = vmatpush1.bf16.xpose.msra.mxu0 0
    %2344 = vmatprep.subr.bf16.mxu0 0
    %2345 = vmatpush1.bf16.xpose.msra.mxu0 0
    %2346 = vmatprep.subr.bf16.mxu0 0
    %2347 = vmatpush1.bf16.xpose.msra.mxu0 0
    %2348 = vmatprep.subr.bf16.mxu0 0
    %2349 = vmatpush1.bf16.xpose.msra.mxu0 0
    %2350 = vmatprep.subr.bf16.mxu0 0
    %2351 = vmatpush1.bf16.xpose.msra.mxu0 0
    %2352 = vmatprep.subr.bf16.mxu0 0
    %2353 = vmatpush1.bf16.xpose.msra.mxu0 0
    %2354 = vmatprep.subr.bf16.mxu0 0
    %2355 = vmatpush1.bf16.xpose.msra.mxu0 %v2338
    %2356 = vmatprep.subr.bf16.mxu0 0
    %2357 = vmatpush2.bf16.xpose.msra.mxu0 0
    %2358 = vmatprep.subr.bf16.mxu0 0
    %2359 = vmatpush2.bf16.xpose.msra.mxu0 0
    %2360 = vmatprep.subr.bf16.mxu0 0
    %2361 = vmatpush2.bf16.xpose.msra.mxu0 0
    %2362 = vmatprep.subr.bf16.mxu0 0
    %2363 = vmatpush2.bf16.xpose.msra.mxu0 0
    %2364 = vmatprep.subr.bf16.mxu0 0
    %2365 = vmatpush2.bf16.xpose.msra.mxu0 0
    %2366 = vmatprep.subr.bf16.mxu0 0
    %2367 = vmatpush2.bf16.xpose.msra.mxu0 0
    %2368 = vmatprep.subr.bf16.mxu0 0
    %2369 = vmatpush2.bf16.xpose.msra.mxu0 0
    %2370 = vmatprep.subr.bf16.mxu0 0
    %2371 = vmatpush2.bf16.xpose.msra.mxu0 0
    %2372 = vmatprep.mubr.bf16.mxu0 0
    %2373 = vmatmul.mubr.bf16.gmra.mxu0 %v2335
    %v2374 = vpop.f32.mrf.mxu0
    %v2375 = vadd.f32 0.0, %v2374
    %v2376 = vpop.f32.mrf.mxu0
    %v2377 = vpop.f32.mrf.mxu0
    %v2378 = vpop.f32.mrf.mxu0
    %2379 = vdwg.mxu0
    %v2381 = vsel %vm421, %v2149, 0
    %v2384 = vsel %vm421, %v2166, 0
    %2386 = vmatprep.subr.bf16.mxu0 0
    %2387 = vmatpush1.bf16.xpose.msra.mxu0 0
    %2388 = vmatprep.subr.bf16.mxu0 0
    %2389 = vmatpush1.bf16.xpose.msra.mxu0 0
    %2390 = vmatprep.subr.bf16.mxu0 0
    %2391 = vmatpush1.bf16.xpose.msra.mxu0 0
    %2392 = vmatprep.subr.bf16.mxu0 0
    %2393 = vmatpush1.bf16.xpose.msra.mxu0 0
    %2394 = vmatprep.subr.bf16.mxu0 0
    %2395 = vmatpush1.bf16.xpose.msra.mxu0 0
    %2396 = vmatprep.subr.bf16.mxu0 0
    %2397 = vmatpush1.bf16.xpose.msra.mxu0 0
    %2398 = vmatprep.subr.bf16.mxu0 0
    %2399 = vmatpush1.bf16.xpose.msra.mxu0 0
    %2400 = vmatprep.subr.bf16.mxu0 0
    %2401 = vmatpush1.bf16.xpose.msra.mxu0 %v2384
    %2402 = vmatprep.subr.bf16.mxu0 0
    %2403 = vmatpush2.bf16.xpose.msra.mxu0 0
    %2404 = vmatprep.subr.bf16.mxu0 0
    %2405 = vmatpush2.bf16.xpose.msra.mxu0 0
    %2406 = vmatprep.subr.bf16.mxu0 0
    %2407 = vmatpush2.bf16.xpose.msra.mxu0 0
    %2408 = vmatprep.subr.bf16.mxu0 0
    %2409 = vmatpush2.bf16.xpose.msra.mxu0 0
    %2410 = vmatprep.subr.bf16.mxu0 0
    %2411 = vmatpush2.bf16.xpose.msra.mxu0 0
    %2412 = vmatprep.subr.bf16.mxu0 0
    %2413 = vmatpush2.bf16.xpose.msra.mxu0 0
    %2414 = vmatprep.subr.bf16.mxu0 0
    %2415 = vmatpush2.bf16.xpose.msra.mxu0 0
    %2416 = vmatprep.subr.bf16.mxu0 0
    %2417 = vmatpush2.bf16.xpose.msra.mxu0 0
    %2418 = vmatprep.mubr.bf16.mxu0 0
    %2419 = vmatmul.mubr.bf16.gmra.mxu0 %v2381
    %v2420 = vpop.f32.mrf.mxu0
    %v2421 = vadd.f32 0.0, %v2420
    %v2422 = vpop.f32.mrf.mxu0
    %v2423 = vpop.f32.mrf.mxu0
    %v2424 = vpop.f32.mrf.mxu0
    %2425 = vdwg.mxu0
    %v2427 = vsel %vm421, %v2153, 0
    %v2430 = vsel %vm421, %v2170, 0
    %2432 = vmatprep.subr.bf16.mxu0 0
    %2433 = vmatpush1.bf16.xpose.msra.mxu0 0
    %2434 = vmatprep.subr.bf16.mxu0 0
    %2435 = vmatpush1.bf16.xpose.msra.mxu0 0
    %2436 = vmatprep.subr.bf16.mxu0 0
    %2437 = vmatpush1.bf16.xpose.msra.mxu0 0
    %2438 = vmatprep.subr.bf16.mxu0 0
    %2439 = vmatpush1.bf16.xpose.msra.mxu0 0
    %2440 = vmatprep.subr.bf16.mxu0 0
    %2441 = vmatpush1.bf16.xpose.msra.mxu0 0
    %2442 = vmatprep.subr.bf16.mxu0 0
    %2443 = vmatpush1.bf16.xpose.msra.mxu0 0
    %2444 = vmatprep.subr.bf16.mxu0 0
    %2445 = vmatpush1.bf16.xpose.msra.mxu0 0
    %2446 = vmatprep.subr.bf16.mxu0 0
    %2447 = vmatpush1.bf16.xpose.msra.mxu0 %v2430
    %2448 = vmatprep.subr.bf16.mxu0 0
    %2449 = vmatpush2.bf16.xpose.msra.mxu0 0
    %2450 = vmatprep.subr.bf16.mxu0 0
    %2451 = vmatpush2.bf16.xpose.msra.mxu0 0
    %2452 = vmatprep.subr.bf16.mxu0 0
    %2453 = vmatpush2.bf16.xpose.msra.mxu0 0
    %2454 = vmatprep.subr.bf16.mxu0 0
    %2455 = vmatpush2.bf16.xpose.msra.mxu0 0
    %2456 = vmatprep.subr.bf16.mxu0 0
    %2457 = vmatpush2.bf16.xpose.msra.mxu0 0
    %2458 = vmatprep.subr.bf16.mxu0 0
    %2459 = vmatpush2.bf16.xpose.msra.mxu0 0
    %2460 = vmatprep.subr.bf16.mxu0 0
    %2461 = vmatpush2.bf16.xpose.msra.mxu0 0
    %2462 = vmatprep.subr.bf16.mxu0 0
    %2463 = vmatpush2.bf16.xpose.msra.mxu0 0
    %2464 = vmatprep.mubr.bf16.mxu0 0
    %2465 = vmatmul.mubr.bf16.gmra.mxu0 %v2427
    %v2466 = vpop.f32.mrf.mxu0
    %v2467 = vadd.f32 0.0, %v2466
    %v2468 = vpop.f32.mrf.mxu0
    %v2469 = vpop.f32.mrf.mxu0
    %v2470 = vpop.f32.mrf.mxu0
    %2471 = vdwg.mxu0
    %v2473 = vsel %vm421, %v2157, 0
    %v2476 = vsel %vm421, %v2174, 0
    %2478 = vmatprep.subr.bf16.mxu0 0
    %2479 = vmatpush1.bf16.xpose.msra.mxu0 0
    %2480 = vmatprep.subr.bf16.mxu0 0
    %2481 = vmatpush1.bf16.xpose.msra.mxu0 0
    %2482 = vmatprep.subr.bf16.mxu0 0
    %2483 = vmatpush1.bf16.xpose.msra.mxu0 0
    %2484 = vmatprep.subr.bf16.mxu0 0
    %2485 = vmatpush1.bf16.xpose.msra.mxu0 0
    %2486 = vmatprep.subr.bf16.mxu0 0
    %2487 = vmatpush1.bf16.xpose.msra.mxu0 0
    %2488 = vmatprep.subr.bf16.mxu0 0
    %2489 = vmatpush1.bf16.xpose.msra.mxu0 0
    %2490 = vmatprep.subr.bf16.mxu0 0
    %2491 = vmatpush1.bf16.xpose.msra.mxu0 0
    %2492 = vmatprep.subr.bf16.mxu0 0
    %2493 = vmatpush1.bf16.xpose.msra.mxu0 %v2476
    %2494 = vmatprep.subr.bf16.mxu0 0
    %2495 = vmatpush2.bf16.xpose.msra.mxu0 0
    %2496 = vmatprep.subr.bf16.mxu0 0
    %2497 = vmatpush2.bf16.xpose.msra.mxu0 0
    %2498 = vmatprep.subr.bf16.mxu0 0
    %2499 = vmatpush2.bf16.xpose.msra.mxu0 0
    %2500 = vmatprep.subr.bf16.mxu0 0
    %2501 = vmatpush2.bf16.xpose.msra.mxu0 0
    %2502 = vmatprep.subr.bf16.mxu0 0
    %2503 = vmatpush2.bf16.xpose.msra.mxu0 0
    %2504 = vmatprep.subr.bf16.mxu0 0
    %2505 = vmatpush2.bf16.xpose.msra.mxu0 0
    %2506 = vmatprep.subr.bf16.mxu0 0
    %2507 = vmatpush2.bf16.xpose.msra.mxu0 0
    %2508 = vmatprep.subr.bf16.mxu0 0
    %2509 = vmatpush2.bf16.xpose.msra.mxu0 0
    %2510 = vmatprep.mubr.bf16.mxu0 0
    %2511 = vmatmul.mubr.bf16.gmra.mxu0 %v2473
    %v2512 = vpop.f32.mrf.mxu0
    %v2513 = vadd.f32 0.0, %v2512
    %v2514 = vpop.f32.mrf.mxu0
    %v2515 = vpop.f32.mrf.mxu0
    %v2516 = vpop.f32.mrf.mxu0
    %2517 = vdwg.mxu0
    %v2519 = vsel %vm421, %v2161, 0
    %v2522 = vsel %vm421, %v2178, 0
    %2524 = vmatprep.subr.bf16.mxu0 0
    %2525 = vmatpush1.bf16.xpose.msra.mxu0 0
    %2526 = vmatprep.subr.bf16.mxu0 0
    %2527 = vmatpush1.bf16.xpose.msra.mxu0 0
    %2528 = vmatprep.subr.bf16.mxu0 0
    %2529 = vmatpush1.bf16.xpose.msra.mxu0 0
    %2530 = vmatprep.subr.bf16.mxu0 0
    %2531 = vmatpush1.bf16.xpose.msra.mxu0 0
    %2532 = vmatprep.subr.bf16.mxu0 0
    %2533 = vmatpush1.bf16.xpose.msra.mxu0 0
    %2534 = vmatprep.subr.bf16.mxu0 0
    %2535 = vmatpush1.bf16.xpose.msra.mxu0 0
    %2536 = vmatprep.subr.bf16.mxu0 0
    %2537 = vmatpush1.bf16.xpose.msra.mxu0 0
    %2538 = vmatprep.subr.bf16.mxu0 0
    %2539 = vmatpush1.bf16.xpose.msra.mxu0 %v2522
    %2540 = vmatprep.subr.bf16.mxu0 0
    %2541 = vmatpush2.bf16.xpose.msra.mxu0 0
    %2542 = vmatprep.subr.bf16.mxu0 0
    %2543 = vmatpush2.bf16.xpose.msra.mxu0 0
    %2544 = vmatprep.subr.bf16.mxu0 0
    %2545 = vmatpush2.bf16.xpose.msra.mxu0 0
    %2546 = vmatprep.subr.bf16.mxu0 0
    %2547 = vmatpush2.bf16.xpose.msra.mxu0 0
    %2548 = vmatprep.subr.bf16.mxu0 0
    %2549 = vmatpush2.bf16.xpose.msra.mxu0 0
    %2550 = vmatprep.subr.bf16.mxu0 0
    %2551 = vmatpush2.bf16.xpose.msra.mxu0 0
    %2552 = vmatprep.subr.bf16.mxu0 0
    %2553 = vmatpush2.bf16.xpose.msra.mxu0 0
    %2554 = vmatprep.subr.bf16.mxu0 0
    %2555 = vmatpush2.bf16.xpose.msra.mxu0 0
    %2556 = vmatprep.mubr.bf16.mxu0 0
    %2557 = vmatmul.mubr.bf16.gmra.mxu0 %v2519
    %v2558 = vpop.f32.mrf.mxu0
    %v2559 = vadd.f32 0.0, %v2558
    %v2560 = vpop.f32.mrf.mxu0
    %v2561 = vpop.f32.mrf.mxu0
    %v2562 = vpop.f32.mrf.mxu0
    %2563 = vdwg.mxu0
    %v2564 = vmul.f32 %v2237, 0.17677669
    %v2565 = vmul.f32 %v2283, 0.17677669
    %v2566 = vmul.f32 %v2329, 0.17677669
    %v2567 = vmul.f32 %v2375, 0.17677669
    %v2568 = vmul.f32 %v2421, 0.17677669
    %v2569 = vmul.f32 %v2467, 0.17677669
    %v2570 = vmul.f32 %v2513, 0.17677669
    %v2571 = vmul.f32 %v2559, 0.17677669
    %v2572 = vadd.f32 %v2564, %v801
    %v2573 = vadd.f32 %v2565, %v801
    %v2574 = vadd.f32 %v2566, %v801
    %v2575 = vadd.f32 %v2567, %v801
    %v2576 = vadd.f32 %v2568, %v805
    %v2577 = vadd.f32 %v2569, %v805
    %v2578 = vadd.f32 %v2570, %v805
    %v2579 = vadd.f32 %v2571, %v805
    %v2580 = vsel %vm816, %v2572, -inf
    %2581 = vmax.xlane.f32.xlu0 %v2580
    %v2582 = vpop.xlane.xlu0 %2581
    %v2583 = vsel %vm816, %v2573, -inf
    %2584 = vmax.xlane.f32.xlu0 %v2583
    %v2585 = vpop.xlane.xlu0 %2584
    %v2586 = vsel %vm816, %v2574, -inf
    %2587 = vmax.xlane.f32.xlu0 %v2586
    %v2588 = vpop.xlane.xlu0 %2587
    %v2589 = vsel %vm816, %v2575, -inf
    %2590 = vmax.xlane.f32.xlu0 %v2589
    %v2591 = vpop.xlane.xlu0 %2590
    %v2592 = vsel %vm816, %v2576, -inf
    %2593 = vmax.xlane.f32.xlu0 %v2592
    %v2594 = vpop.xlane.xlu0 %2593
    %v2595 = vsel %vm816, %v2577, -inf
    %2596 = vmax.xlane.f32.xlu0 %v2595
    %v2597 = vpop.xlane.xlu0 %2596
    %v2598 = vsel %vm816, %v2578, -inf
    %2599 = vmax.xlane.f32.xlu0 %v2598
    %v2600 = vpop.xlane.xlu0 %2599
    %v2601 = vsel %vm816, %v2579, -inf
    %2602 = vmax.xlane.f32.xlu0 %v2601
    %v2603 = vpop.xlane.xlu0 %2602
    %v2604 = vsub.f32 %v2572, %v2582
    %v2605 = vsub.f32 %v2573, %v2585
    %v2606 = vsub.f32 %v2574, %v2588
    %v2607 = vsub.f32 %v2575, %v2591
    %v2608 = vsub.f32 %v2576, %v2594
    %v2609 = vsub.f32 %v2577, %v2597
    %v2610 = vsub.f32 %v2578, %v2600
    %v2611 = vsub.f32 %v2579, %v2603
    %v2612 = vmul.f32 %v2604, 1.442695
    %v2613 = vpow.pop %v2612
    %v2614 = vmul.f32 %v2605, 1.442695
    %v2615 = vpow.pop %v2614
    %v2616 = vmul.f32 %v2606, 1.442695
    %v2617 = vpow.pop %v2616
    %v2618 = vmul.f32 %v2607, 1.442695
    %v2619 = vpow.pop %v2618
    %v2620 = vmul.f32 %v2608, 1.442695
    %v2621 = vpow.pop %v2620
    %v2622 = vmul.f32 %v2609, 1.442695
    %v2623 = vpow.pop %v2622
    %v2624 = vmul.f32 %v2610, 1.442695
    %v2625 = vpow.pop %v2624
    %v2626 = vmul.f32 %v2611, 1.442695
    %v2627 = vpow.pop %v2626
    %v2628 = vsel %vm816, %v2613, 0.0
    %2629 = vadd.xlane.f32.xlu0 %v2628
    %v2630 = vpop.xlane.xlu0 %2629
    %v2631 = vsel %vm816, %v2615, 0.0
    %2632 = vadd.xlane.f32.xlu0 %v2631
    %v2633 = vpop.xlane.xlu0 %2632
    %v2634 = vsel %vm816, %v2617, 0.0
    %2635 = vadd.xlane.f32.xlu0 %v2634
    %v2636 = vpop.xlane.xlu0 %2635
    %v2637 = vsel %vm816, %v2619, 0.0
    %2638 = vadd.xlane.f32.xlu0 %v2637
    %v2639 = vpop.xlane.xlu0 %2638
    %v2640 = vsel %vm816, %v2621, 0.0
    %2641 = vadd.xlane.f32.xlu0 %v2640
    %v2642 = vpop.xlane.xlu0 %2641
    %v2643 = vsel %vm816, %v2623, 0.0
    %2644 = vadd.xlane.f32.xlu0 %v2643
    %v2645 = vpop.xlane.xlu0 %2644
    %v2646 = vsel %vm816, %v2625, 0.0
    %2647 = vadd.xlane.f32.xlu0 %v2646
    %v2648 = vpop.xlane.xlu0 %2647
    %v2649 = vsel %vm816, %v2627, 0.0
    %2650 = vadd.xlane.f32.xlu0 %v2649
    %v2651 = vpop.xlane.xlu0 %2650
    %v2652 = vrcp.pop %v2630
    %v2653 = vrcp.pop %v2633
    %v2654 = vrcp.pop %v2636
    %v2655 = vrcp.pop %v2639
    %v2656 = vrcp.pop %v2642
    %v2657 = vrcp.pop %v2645
    %v2658 = vrcp.pop %v2648
    %v2659 = vrcp.pop %v2651
    %v2660 = vmul.f32 %v2613, %v2652
    %v2661 = vmul.f32 %v2615, %v2653
    %v2662 = vmul.f32 %v2617, %v2654
    %v2663 = vmul.f32 %v2619, %v2655
    %v2664 = vmul.f32 %v2621, %v2656
    %v2665 = vmul.f32 %v2623, %v2657
    %v2666 = vmul.f32 %v2625, %v2658
    %v2667 = vmul.f32 %v2627, %v2659
    %v2668 = vpack.c.bf16 %v2660, %v2660
    %v2669 = vpack.c.bf16 %v2661, %v2661
    %v2670 = vpack.c.bf16 %v2662, %v2662
    %v2671 = vpack.c.bf16 %v2663, %v2663
    %v2672 = vpack.c.bf16 %v2664, %v2664
    %v2673 = vpack.c.bf16 %v2665, %v2665
    %v2674 = vpack.c.bf16 %v2666, %v2666
    %v2675 = vpack.c.bf16 %v2667, %v2667
    %v2677 = vsel %vm816, %v2668, 0
    %v2680 = vsel %vm916, %v2182, 0
    %2682 = vmatprep.subr.bf16.mxu0 0
    %2683 = vmatpush1.bf16.msra.mxu0 0
    %2684 = vmatprep.subr.bf16.mxu0 0
    %2685 = vmatpush1.bf16.msra.mxu0 0
    %2686 = vmatprep.subr.bf16.mxu0 0
    %2687 = vmatpush1.bf16.msra.mxu0 0
    %2688 = vmatprep.subr.bf16.mxu0 0
    %2689 = vmatpush1.bf16.msra.mxu0 0
    %2690 = vmatprep.subr.bf16.mxu0 0
    %2691 = vmatpush1.bf16.msra.mxu0 0
    %2692 = vmatprep.subr.bf16.mxu0 0
    %2693 = vmatpush1.bf16.msra.mxu0 0
    %2694 = vmatprep.subr.bf16.mxu0 0
    %2695 = vmatpush1.bf16.msra.mxu0 0
    %2696 = vmatprep.subr.bf16.mxu0 0
    %2697 = vmatpush1.bf16.msra.mxu0 %v2680
    %2698 = vmatprep.subr.bf16.mxu0 0
    %2699 = vmatpush2.bf16.msra.mxu0 0
    %2700 = vmatprep.subr.bf16.mxu0 0
    %2701 = vmatpush2.bf16.msra.mxu0 0
    %2702 = vmatprep.subr.bf16.mxu0 0
    %2703 = vmatpush2.bf16.msra.mxu0 0
    %2704 = vmatprep.subr.bf16.mxu0 0
    %2705 = vmatpush2.bf16.msra.mxu0 0
    %2706 = vmatprep.subr.bf16.mxu0 0
    %2707 = vmatpush2.bf16.msra.mxu0 0
    %2708 = vmatprep.subr.bf16.mxu0 0
    %2709 = vmatpush2.bf16.msra.mxu0 0
    %2710 = vmatprep.subr.bf16.mxu0 0
    %2711 = vmatpush2.bf16.msra.mxu0 0
    %2712 = vmatprep.subr.bf16.mxu0 0
    %2713 = vmatpush2.bf16.msra.mxu0 0
    %2714 = vmatprep.mubr.bf16.mxu0 0
    %2715 = vmatmul.mubr.bf16.gmra.mxu0 %v2677
    %v2716 = vpop.f32.mrf.mxu0
    %v2717 = vadd.f32 0.0, %v2716
    %v2718 = vpop.f32.mrf.mxu0
    %v2719 = vpop.f32.mrf.mxu0
    %v2720 = vpop.f32.mrf.mxu0
    %2721 = vdwg.mxu0
    %v2723 = vsel %vm816, %v2669, 0
    %v2726 = vsel %vm916, %v2185, 0
    %2728 = vmatprep.subr.bf16.mxu0 0
    %2729 = vmatpush1.bf16.msra.mxu0 0
    %2730 = vmatprep.subr.bf16.mxu0 0
    %2731 = vmatpush1.bf16.msra.mxu0 0
    %2732 = vmatprep.subr.bf16.mxu0 0
    %2733 = vmatpush1.bf16.msra.mxu0 0
    %2734 = vmatprep.subr.bf16.mxu0 0
    %2735 = vmatpush1.bf16.msra.mxu0 0
    %2736 = vmatprep.subr.bf16.mxu0 0
    %2737 = vmatpush1.bf16.msra.mxu0 0
    %2738 = vmatprep.subr.bf16.mxu0 0
    %2739 = vmatpush1.bf16.msra.mxu0 0
    %2740 = vmatprep.subr.bf16.mxu0 0
    %2741 = vmatpush1.bf16.msra.mxu0 0
    %2742 = vmatprep.subr.bf16.mxu0 0
    %2743 = vmatpush1.bf16.msra.mxu0 %v2726
    %2744 = vmatprep.subr.bf16.mxu0 0
    %2745 = vmatpush2.bf16.msra.mxu0 0
    %2746 = vmatprep.subr.bf16.mxu0 0
    %2747 = vmatpush2.bf16.msra.mxu0 0
    %2748 = vmatprep.subr.bf16.mxu0 0
    %2749 = vmatpush2.bf16.msra.mxu0 0
    %2750 = vmatprep.subr.bf16.mxu0 0
    %2751 = vmatpush2.bf16.msra.mxu0 0
    %2752 = vmatprep.subr.bf16.mxu0 0
    %2753 = vmatpush2.bf16.msra.mxu0 0
    %2754 = vmatprep.subr.bf16.mxu0 0
    %2755 = vmatpush2.bf16.msra.mxu0 0
    %2756 = vmatprep.subr.bf16.mxu0 0
    %2757 = vmatpush2.bf16.msra.mxu0 0
    %2758 = vmatprep.subr.bf16.mxu0 0
    %2759 = vmatpush2.bf16.msra.mxu0 0
    %2760 = vmatprep.mubr.bf16.mxu0 0
    %2761 = vmatmul.mubr.bf16.gmra.mxu0 %v2723
    %v2762 = vpop.f32.mrf.mxu0
    %v2763 = vadd.f32 0.0, %v2762
    %v2764 = vpop.f32.mrf.mxu0
    %v2765 = vpop.f32.mrf.mxu0
    %v2766 = vpop.f32.mrf.mxu0
    %2767 = vdwg.mxu0
    %v2769 = vsel %vm816, %v2670, 0
    %v2772 = vsel %vm916, %v2189, 0
    %2774 = vmatprep.subr.bf16.mxu0 0
    %2775 = vmatpush1.bf16.msra.mxu0 0
    %2776 = vmatprep.subr.bf16.mxu0 0
    %2777 = vmatpush1.bf16.msra.mxu0 0
    %2778 = vmatprep.subr.bf16.mxu0 0
    %2779 = vmatpush1.bf16.msra.mxu0 0
    %2780 = vmatprep.subr.bf16.mxu0 0
    %2781 = vmatpush1.bf16.msra.mxu0 0
    %2782 = vmatprep.subr.bf16.mxu0 0
    %2783 = vmatpush1.bf16.msra.mxu0 0
    %2784 = vmatprep.subr.bf16.mxu0 0
    %2785 = vmatpush1.bf16.msra.mxu0 0
    %2786 = vmatprep.subr.bf16.mxu0 0
    %2787 = vmatpush1.bf16.msra.mxu0 0
    %2788 = vmatprep.subr.bf16.mxu0 0
    %2789 = vmatpush1.bf16.msra.mxu0 %v2772
    %2790 = vmatprep.subr.bf16.mxu0 0
    %2791 = vmatpush2.bf16.msra.mxu0 0
    %2792 = vmatprep.subr.bf16.mxu0 0
    %2793 = vmatpush2.bf16.msra.mxu0 0
    %2794 = vmatprep.subr.bf16.mxu0 0
    %2795 = vmatpush2.bf16.msra.mxu0 0
    %2796 = vmatprep.subr.bf16.mxu0 0
    %2797 = vmatpush2.bf16.msra.mxu0 0
    %2798 = vmatprep.subr.bf16.mxu0 0
    %2799 = vmatpush2.bf16.msra.mxu0 0
    %2800 = vmatprep.subr.bf16.mxu0 0
    %2801 = vmatpush2.bf16.msra.mxu0 0
    %2802 = vmatprep.subr.bf16.mxu0 0
    %2803 = vmatpush2.bf16.msra.mxu0 0
    %2804 = vmatprep.subr.bf16.mxu0 0
    %2805 = vmatpush2.bf16.msra.mxu0 0
    %2806 = vmatprep.mubr.bf16.mxu0 0
    %2807 = vmatmul.mubr.bf16.gmra.mxu0 %v2769
    %v2808 = vpop.f32.mrf.mxu0
    %v2809 = vadd.f32 0.0, %v2808
    %v2810 = vpop.f32.mrf.mxu0
    %v2811 = vpop.f32.mrf.mxu0
    %v2812 = vpop.f32.mrf.mxu0
    %2813 = vdwg.mxu0
    %v2815 = vsel %vm816, %v2671, 0
    %v2818 = vsel %vm916, %v2193, 0
    %2820 = vmatprep.subr.bf16.mxu0 0
    %2821 = vmatpush1.bf16.msra.mxu0 0
    %2822 = vmatprep.subr.bf16.mxu0 0
    %2823 = vmatpush1.bf16.msra.mxu0 0
    %2824 = vmatprep.subr.bf16.mxu0 0
    %2825 = vmatpush1.bf16.msra.mxu0 0
    %2826 = vmatprep.subr.bf16.mxu0 0
    %2827 = vmatpush1.bf16.msra.mxu0 0
    %2828 = vmatprep.subr.bf16.mxu0 0
    %2829 = vmatpush1.bf16.msra.mxu0 0
    %2830 = vmatprep.subr.bf16.mxu0 0
    %2831 = vmatpush1.bf16.msra.mxu0 0
    %2832 = vmatprep.subr.bf16.mxu0 0
    %2833 = vmatpush1.bf16.msra.mxu0 0
    %2834 = vmatprep.subr.bf16.mxu0 0
    %2835 = vmatpush1.bf16.msra.mxu0 %v2818
    %2836 = vmatprep.subr.bf16.mxu0 0
    %2837 = vmatpush2.bf16.msra.mxu0 0
    %2838 = vmatprep.subr.bf16.mxu0 0
    %2839 = vmatpush2.bf16.msra.mxu0 0
    %2840 = vmatprep.subr.bf16.mxu0 0
    %2841 = vmatpush2.bf16.msra.mxu0 0
    %2842 = vmatprep.subr.bf16.mxu0 0
    %2843 = vmatpush2.bf16.msra.mxu0 0
    %2844 = vmatprep.subr.bf16.mxu0 0
    %2845 = vmatpush2.bf16.msra.mxu0 0
    %2846 = vmatprep.subr.bf16.mxu0 0
    %2847 = vmatpush2.bf16.msra.mxu0 0
    %2848 = vmatprep.subr.bf16.mxu0 0
    %2849 = vmatpush2.bf16.msra.mxu0 0
    %2850 = vmatprep.subr.bf16.mxu0 0
    %2851 = vmatpush2.bf16.msra.mxu0 0
    %2852 = vmatprep.mubr.bf16.mxu0 0
    %2853 = vmatmul.mubr.bf16.gmra.mxu0 %v2815
    %v2854 = vpop.f32.mrf.mxu0
    %v2855 = vadd.f32 0.0, %v2854
    %v2856 = vpop.f32.mrf.mxu0
    %v2857 = vpop.f32.mrf.mxu0
    %v2858 = vpop.f32.mrf.mxu0
    %2859 = vdwg.mxu0
    %v2861 = vsel %vm816, %v2672, 0
    %v2864 = vsel %vm916, %v2183, 0
    %2866 = vmatprep.subr.bf16.mxu0 0
    %2867 = vmatpush1.bf16.msra.mxu0 0
    %2868 = vmatprep.subr.bf16.mxu0 0
    %2869 = vmatpush1.bf16.msra.mxu0 0
    %2870 = vmatprep.subr.bf16.mxu0 0
    %2871 = vmatpush1.bf16.msra.mxu0 0
    %2872 = vmatprep.subr.bf16.mxu0 0
    %2873 = vmatpush1.bf16.msra.mxu0 0
    %2874 = vmatprep.subr.bf16.mxu0 0
    %2875 = vmatpush1.bf16.msra.mxu0 0
    %2876 = vmatprep.subr.bf16.mxu0 0
    %2877 = vmatpush1.bf16.msra.mxu0 0
    %2878 = vmatprep.subr.bf16.mxu0 0
    %2879 = vmatpush1.bf16.msra.mxu0 0
    %2880 = vmatprep.subr.bf16.mxu0 0
    %2881 = vmatpush1.bf16.msra.mxu0 %v2864
    %2882 = vmatprep.subr.bf16.mxu0 0
    %2883 = vmatpush2.bf16.msra.mxu0 0
    %2884 = vmatprep.subr.bf16.mxu0 0
    %2885 = vmatpush2.bf16.msra.mxu0 0
    %2886 = vmatprep.subr.bf16.mxu0 0
    %2887 = vmatpush2.bf16.msra.mxu0 0
    %2888 = vmatprep.subr.bf16.mxu0 0
    %2889 = vmatpush2.bf16.msra.mxu0 0
    %2890 = vmatprep.subr.bf16.mxu0 0
    %2891 = vmatpush2.bf16.msra.mxu0 0
    %2892 = vmatprep.subr.bf16.mxu0 0
    %2893 = vmatpush2.bf16.msra.mxu0 0
    %2894 = vmatprep.subr.bf16.mxu0 0
    %2895 = vmatpush2.bf16.msra.mxu0 0
    %2896 = vmatprep.subr.bf16.mxu0 0
    %2897 = vmatpush2.bf16.msra.mxu0 0
    %2898 = vmatprep.mubr.bf16.mxu0 0
    %2899 = vmatmul.mubr.bf16.gmra.mxu0 %v2861
    %v2900 = vpop.f32.mrf.mxu0
    %v2901 = vadd.f32 0.0, %v2900
    %v2902 = vpop.f32.mrf.mxu0
    %v2903 = vpop.f32.mrf.mxu0
    %v2904 = vpop.f32.mrf.mxu0
    %2905 = vdwg.mxu0
    %v2907 = vsel %vm816, %v2673, 0
    %v2910 = vsel %vm916, %v2187, 0
    %2912 = vmatprep.subr.bf16.mxu0 0
    %2913 = vmatpush1.bf16.msra.mxu0 0
    %2914 = vmatprep.subr.bf16.mxu0 0
    %2915 = vmatpush1.bf16.msra.mxu0 0
    %2916 = vmatprep.subr.bf16.mxu0 0
    %2917 = vmatpush1.bf16.msra.mxu0 0
    %2918 = vmatprep.subr.bf16.mxu0 0
    %2919 = vmatpush1.bf16.msra.mxu0 0
    %2920 = vmatprep.subr.bf16.mxu0 0
    %2921 = vmatpush1.bf16.msra.mxu0 0
    %2922 = vmatprep.subr.bf16.mxu0 0
    %2923 = vmatpush1.bf16.msra.mxu0 0
    %2924 = vmatprep.subr.bf16.mxu0 0
    %2925 = vmatpush1.bf16.msra.mxu0 0
    %2926 = vmatprep.subr.bf16.mxu0 0
    %2927 = vmatpush1.bf16.msra.mxu0 %v2910
    %2928 = vmatprep.subr.bf16.mxu0 0
    %2929 = vmatpush2.bf16.msra.mxu0 0
    %2930 = vmatprep.subr.bf16.mxu0 0
    %2931 = vmatpush2.bf16.msra.mxu0 0
    %2932 = vmatprep.subr.bf16.mxu0 0
    %2933 = vmatpush2.bf16.msra.mxu0 0
    %2934 = vmatprep.subr.bf16.mxu0 0
    %2935 = vmatpush2.bf16.msra.mxu0 0
    %2936 = vmatprep.subr.bf16.mxu0 0
    %2937 = vmatpush2.bf16.msra.mxu0 0
    %2938 = vmatprep.subr.bf16.mxu0 0
    %2939 = vmatpush2.bf16.msra.mxu0 0
    %2940 = vmatprep.subr.bf16.mxu0 0
    %2941 = vmatpush2.bf16.msra.mxu0 0
    %2942 = vmatprep.subr.bf16.mxu0 0
    %2943 = vmatpush2.bf16.msra.mxu0 0
    %2944 = vmatprep.mubr.bf16.mxu0 0
    %2945 = vmatmul.mubr.bf16.gmra.mxu0 %v2907
    %v2946 = vpop.f32.mrf.mxu0
    %v2947 = vadd.f32 0.0, %v2946
    %v2948 = vpop.f32.mrf.mxu0
    %v2949 = vpop.f32.mrf.mxu0
    %v2950 = vpop.f32.mrf.mxu0
    %2951 = vdwg.mxu0
    %v2953 = vsel %vm816, %v2674, 0
    %v2956 = vsel %vm916, %v2191, 0
    %2958 = vmatprep.subr.bf16.mxu0 0
    %2959 = vmatpush1.bf16.msra.mxu0 0
    %2960 = vmatprep.subr.bf16.mxu0 0
    %2961 = vmatpush1.bf16.msra.mxu0 0
    %2962 = vmatprep.subr.bf16.mxu0 0
    %2963 = vmatpush1.bf16.msra.mxu0 0
    %2964 = vmatprep.subr.bf16.mxu0 0
    %2965 = vmatpush1.bf16.msra.mxu0 0
    %2966 = vmatprep.subr.bf16.mxu0 0
    %2967 = vmatpush1.bf16.msra.mxu0 0
    %2968 = vmatprep.subr.bf16.mxu0 0
    %2969 = vmatpush1.bf16.msra.mxu0 0
    %2970 = vmatprep.subr.bf16.mxu0 0
    %2971 = vmatpush1.bf16.msra.mxu0 0
    %2972 = vmatprep.subr.bf16.mxu0 0
    %2973 = vmatpush1.bf16.msra.mxu0 %v2956
    %2974 = vmatprep.subr.bf16.mxu0 0
    %2975 = vmatpush2.bf16.msra.mxu0 0
    %2976 = vmatprep.subr.bf16.mxu0 0
    %2977 = vmatpush2.bf16.msra.mxu0 0
    %2978 = vmatprep.subr.bf16.mxu0 0
    %2979 = vmatpush2.bf16.msra.mxu0 0
    %2980 = vmatprep.subr.bf16.mxu0 0
    %2981 = vmatpush2.bf16.msra.mxu0 0
    %2982 = vmatprep.subr.bf16.mxu0 0
    %2983 = vmatpush2.bf16.msra.mxu0 0
    %2984 = vmatprep.subr.bf16.mxu0 0
    %2985 = vmatpush2.bf16.msra.mxu0 0
    %2986 = vmatprep.subr.bf16.mxu0 0
    %2987 = vmatpush2.bf16.msra.mxu0 0
    %2988 = vmatprep.subr.bf16.mxu0 0
    %2989 = vmatpush2.bf16.msra.mxu0 0
    %2990 = vmatprep.mubr.bf16.mxu0 0
    %2991 = vmatmul.mubr.bf16.gmra.mxu0 %v2953
    %v2992 = vpop.f32.mrf.mxu0
    %v2993 = vadd.f32 0.0, %v2992
    %v2994 = vpop.f32.mrf.mxu0
    %v2995 = vpop.f32.mrf.mxu0
    %v2996 = vpop.f32.mrf.mxu0
    %2997 = vdwg.mxu0
    %v2999 = vsel %vm816, %v2675, 0
    %v3002 = vsel %vm916, %v2195, 0
    %3004 = vmatprep.subr.bf16.mxu0 0
    %3005 = vmatpush1.bf16.msra.mxu0 0
    %3006 = vmatprep.subr.bf16.mxu0 0
    %3007 = vmatpush1.bf16.msra.mxu0 0
    %3008 = vmatprep.subr.bf16.mxu0 0
    %3009 = vmatpush1.bf16.msra.mxu0 0
    %3010 = vmatprep.subr.bf16.mxu0 0
    %3011 = vmatpush1.bf16.msra.mxu0 0
    %3012 = vmatprep.subr.bf16.mxu0 0
    %3013 = vmatpush1.bf16.msra.mxu0 0
    %3014 = vmatprep.subr.bf16.mxu0 0
    %3015 = vmatpush1.bf16.msra.mxu0 0
    %3016 = vmatprep.subr.bf16.mxu0 0
    %3017 = vmatpush1.bf16.msra.mxu0 0
    %3018 = vmatprep.subr.bf16.mxu0 0
    %3019 = vmatpush1.bf16.msra.mxu0 %v3002
    %3020 = vmatprep.subr.bf16.mxu0 0
    %3021 = vmatpush2.bf16.msra.mxu0 0
    %3022 = vmatprep.subr.bf16.mxu0 0
    %3023 = vmatpush2.bf16.msra.mxu0 0
    %3024 = vmatprep.subr.bf16.mxu0 0
    %3025 = vmatpush2.bf16.msra.mxu0 0
    %3026 = vmatprep.subr.bf16.mxu0 0
    %3027 = vmatpush2.bf16.msra.mxu0 0
    %3028 = vmatprep.subr.bf16.mxu0 0
    %3029 = vmatpush2.bf16.msra.mxu0 0
    %3030 = vmatprep.subr.bf16.mxu0 0
    %3031 = vmatpush2.bf16.msra.mxu0 0
    %3032 = vmatprep.subr.bf16.mxu0 0
    %3033 = vmatpush2.bf16.msra.mxu0 0
    %3034 = vmatprep.subr.bf16.mxu0 0
    %3035 = vmatpush2.bf16.msra.mxu0 0
    %3036 = vmatprep.mubr.bf16.mxu0 0
    %3037 = vmatmul.mubr.bf16.gmra.mxu0 %v2999
    %v3038 = vpop.f32.mrf.mxu0
    %v3039 = vadd.f32 0.0, %v3038
    %v3040 = vpop.f32.mrf.mxu0
    %v3041 = vpop.f32.mrf.mxu0
    %v3042 = vpop.f32.mrf.mxu0
    %3043 = vdwg.mxu0
    %3046 = vrot.lane.b32.xlu0 %v2763, 32
    %v3047 = vpop.permute.xlu0 %3046
    %3048 = vrot.lane.b32.xlu0 %v2947, 32
    %v3049 = vpop.permute.xlu0 %3048
    %3054 = vrot.lane.b32.xlu0 %v2809, 64
    %v3055 = vpop.permute.xlu0 %3054
    %3056 = vrot.lane.b32.xlu0 %v2993, 64
    %v3057 = vpop.permute.xlu0 %3056
    %3062 = vrot.lane.b32.xlu0 %v2855, 96
    %v3063 = vpop.permute.xlu0 %3062
    %3064 = vrot.lane.b32.xlu0 %v3039, 96
    %v3065 = vpop.permute.xlu0 %3064
    %v3068 = vsel %vm421, %v2717, %v3047
    %v3069 = vsel %vm421, %v2901, %v3049
    %v3070 = vsel %vm1308, %v3068, %v3055
    %v3071 = vsel %vm1308, %v3069, %v3057
    %v3072 = vsel %vm1311, %v3070, %v3063
    %v3073 = vsel %vm1311, %v3071, %v3065
    %v3074 = vpack.c.bf16 %v3073, %v3072
    %s3075 = scalar_lea.vmem %s4, 64
    %v3076 = vld [vmem:[%s3075] sm:$0xf]
    %v3077 = vld [vmem:[%s3075 + $0x4] sm:$0xf]
    %v3078 = vld [vmem:[%s3075 + $0x8] sm:$0xf]
    %v3079 = vld [vmem:[%s3075 + $0xc] sm:$0xf]
    %v3080 = vld [vmem:[%s3075 + $0x10] sm:$0xf]
    %v3081 = vld [vmem:[%s3075 + $0x14] sm:$0xf]
    %v3082 = vld [vmem:[%s3075 + $0x18] sm:$0xf]
    %v3083 = vld [vmem:[%s3075 + $0x1c] sm:$0xf]
    %v3084 = vld [vmem:[%s3075 + $0x20] sm:$0xf]
    %v3085 = vld [vmem:[%s3075 + $0x24] sm:$0xf]
    %v3086 = vld [vmem:[%s3075 + $0x28] sm:$0xf]
    %v3087 = vld [vmem:[%s3075 + $0x2c] sm:$0xf]
    %v3088 = vld [vmem:[%s3075 + $0x30] sm:$0xf]
    %v3089 = vld [vmem:[%s3075 + $0x34] sm:$0xf]
    %v3090 = vld [vmem:[%s3075 + $0x38] sm:$0xf]
    %v3091 = vld [vmem:[%s3075 + $0x3c] sm:$0xf]
    %s3092 = scalar_lea.vmem %s5, 1
    %v3093 = vld [vmem:[%s3092] sm:$0x1]
    %v3095 = vlaneseq
    %v3096 = vshrl.u32 %v3095, 7
    %v3097 = vsub.s32 0, %v3096
    %v3098 = vrot.slane %v3093, %v3097
    %v3116 = vunpack.c.l.b16 %v3076
    %v3117 = vunpack.c.l.b16 %v3077
    %v3118 = vunpack.c.l.b16 %v3078
    %v3119 = vunpack.c.l.b16 %v3079
    %v3120 = vunpack.c.l.b16 %v3080
    %v3121 = vunpack.c.l.b16 %v3081
    %v3122 = vunpack.c.l.b16 %v3082
    %v3123 = vunpack.c.l.b16 %v3083
    %v3124 = vunpack.c.l.b16 %v3084
    %v3125 = vunpack.c.l.b16 %v3085
    %v3126 = vunpack.c.l.b16 %v3086
    %v3127 = vunpack.c.l.b16 %v3087
    %v3128 = vunpack.c.l.b16 %v3088
    %v3129 = vunpack.c.l.b16 %v3089
    %v3130 = vunpack.c.l.b16 %v3090
    %v3131 = vunpack.c.l.b16 %v3091
    %v3132 = vpack.c.b16 %v3117, %v3116
    %v3133 = vpack.c.b16 %v3119, %v3118
    %v3134 = vpack.c.b16 %v3121, %v3120
    %v3135 = vpack.c.b16 %v3123, %v3122
    %v3136 = vpack.c.b16 %v3125, %v3124
    %v3137 = vpack.c.b16 %v3127, %v3126
    %v3138 = vpack.c.b16 %v3129, %v3128
    %v3139 = vpack.c.b16 %v3131, %v3130
    %3148 = vmatprep.subr.bf16.mxu0 0
    %3149 = vmatpush1.bf16.msra.mxu0 %v3139
    %3150 = vmatprep.subr.bf16.mxu0 0
    %3151 = vmatpush1.bf16.msra.mxu0 %v3138
    %3152 = vmatprep.subr.bf16.mxu0 0
    %3153 = vmatpush1.bf16.msra.mxu0 %v3137
    %3154 = vmatprep.subr.bf16.mxu0 0
    %3155 = vmatpush1.bf16.msra.mxu0 %v3136
    %3156 = vmatprep.subr.bf16.mxu0 0
    %3157 = vmatpush1.bf16.msra.mxu0 %v3135
    %3158 = vmatprep.subr.bf16.mxu0 0
    %3159 = vmatpush1.bf16.msra.mxu0 %v3134
    %3160 = vmatprep.subr.bf16.mxu0 0
    %3161 = vmatpush1.bf16.msra.mxu0 %v3133
    %3162 = vmatprep.subr.bf16.mxu0 0
    %3163 = vmatpush1.bf16.msra.mxu0 %v3132
    %3164 = vmatprep.subr.bf16.mxu0 0
    %3165 = vmatpush2.bf16.msra.mxu0 0
    %3166 = vmatprep.subr.bf16.mxu0 0
    %3167 = vmatpush2.bf16.msra.mxu0 0
    %3168 = vmatprep.subr.bf16.mxu0 0
    %3169 = vmatpush2.bf16.msra.mxu0 0
    %3170 = vmatprep.subr.bf16.mxu0 0
    %3171 = vmatpush2.bf16.msra.mxu0 0
    %3172 = vmatprep.subr.bf16.mxu0 0
    %3173 = vmatpush2.bf16.msra.mxu0 0
    %3174 = vmatprep.subr.bf16.mxu0 0
    %3175 = vmatpush2.bf16.msra.mxu0 0
    %3176 = vmatprep.subr.bf16.mxu0 0
    %3177 = vmatpush2.bf16.msra.mxu0 0
    %3178 = vmatprep.subr.bf16.mxu0 0
    %3179 = vmatpush2.bf16.msra.mxu0 0
    %3180 = vmatprep.mubr.bf16.mxu0 0
    %3181 = vmatmul.mubr.bf16.gmra.mxu0 %v3074
    %v3182 = vpop.f32.mrf.mxu0
    %v3183 = vadd.f32 %v3098, %v3182
    %v3184 = vpop.f32.mrf.mxu0
    %v3185 = vpop.f32.mrf.mxu0
    %v3186 = vadd.f32 %v3098, %v3185
    %v3187 = vpop.f32.mrf.mxu0
    %3188 = vdwg.mxu0
    %v3189 = vadd.f32 %v1876, %v3183
    %v3190 = vadd.f32 %v1877, %v3186
    %s3191 = scalar_lea.vmem %s6, 1
    %v3192 = vld [vmem:[%s3191] sm:$0x1]
    %s3193 = scalar_lea.vmem %s7, 1
    %v3194 = vld [vmem:[%s3193] sm:$0x1]
    %3195 = vadd.xlane.f32.xlu0 %v3189
    %v3196 = vpop.xlane.xlu0 %3195
    %3197 = vadd.xlane.f32.xlu0 %v3190
    %v3198 = vpop.xlane.xlu0 %3197
    %v3199 = vmul.f32 %v3196, %v1435
    %v3200 = vmul.f32 %v3198, %v1435
    %v3201 = vsub.f32 %v3189, %v3199
    %v3202 = vsub.f32 %v3190, %v3200
    %v3203 = vmul.f32 %v3201, %v3201
    %v3204 = vmul.f32 %v3202, %v3202
    %3205 = vadd.xlane.f32.xlu0 %v3203
    %v3206 = vpop.xlane.xlu0 %3205
    %3207 = vadd.xlane.f32.xlu0 %v3204
    %v3208 = vpop.xlane.xlu0 %3207
    %v3209 = vmul.f32 %v3206, %v1435
    %v3210 = vmul.f32 %v3208, %v1435
    %v3211 = vadd.f32 %v3209, 1e-12
    %v3212 = vadd.f32 %v3210, 1e-12
    %v3213 = vrsqrt.pop %v3211
    %v3214 = vrsqrt.pop %v3212
    %v3215 = vmul.f32 %v3201, %v3213
    %v3216 = vmul.f32 %v3202, %v3214
    %v3218 = vlaneseq
    %v3219 = vshrl.u32 %v3218, 7
    %v3220 = vsub.s32 0, %v3219
    %v3221 = vrot.slane %v3192, %v3220
    %v3223 = vmul.f32 %v3215, %v3221
    %v3224 = vmul.f32 %v3216, %v3221
    %v3226 = vlaneseq
    %v3227 = vshrl.u32 %v3226, 7
    %v3228 = vsub.s32 0, %v3227
    %v3229 = vrot.slane %v3194, %v3228
    %v3231 = vadd.f32 %v3223, %v3229
    %v3232 = vadd.f32 %v3224, %v3229
    %v3233 = vpack.c.bf16 %v3232, %v3231
    %s3234 = scalar_lea.vmem %s8, 128
    %v3235 = vld [vmem:[%s3234] sm:$0xff]
    %v3236 = vld [vmem:[%s3234 + $0x8] sm:$0xff]
    %v3237 = vld [vmem:[%s3234 + $0x10] sm:$0xff]
    %v3238 = vld [vmem:[%s3234 + $0x18] sm:$0xff]
    %v3239 = vld [vmem:[%s3234 + $0x20] sm:$0xff]
    %v3240 = vld [vmem:[%s3234 + $0x28] sm:$0xff]
    %v3241 = vld [vmem:[%s3234 + $0x30] sm:$0xff]
    %v3242 = vld [vmem:[%s3234 + $0x38] sm:$0xff]
    %v3243 = vld [vmem:[%s3234 + $0x40] sm:$0xff]
    %v3244 = vld [vmem:[%s3234 + $0x48] sm:$0xff]
    %v3245 = vld [vmem:[%s3234 + $0x50] sm:$0xff]
    %v3246 = vld [vmem:[%s3234 + $0x58] sm:$0xff]
    %v3247 = vld [vmem:[%s3234 + $0x60] sm:$0xff]
    %v3248 = vld [vmem:[%s3234 + $0x68] sm:$0xff]
    %v3249 = vld [vmem:[%s3234 + $0x70] sm:$0xff]
    %v3250 = vld [vmem:[%s3234 + $0x78] sm:$0xff]
    %s3251 = scalar_lea.vmem %s9, 2
    %v3252 = vld [vmem:[%s3251] sm:$0x3]
    %v3254 = vlaneseq
    %v3255 = vshrl.u32 %v3254, 7
    %v3256 = vsub.s32 0, %v3255
    %v3257 = vrot.slane %v3252, %v3256
    %v3258 = vlaneseq
    %v3259 = vshrl.u32 %v3258, 7
    %v3260 = vsub.s32 1, %v3259
    %v3261 = vrot.slane %v3252, %v3260
    %v3280 = vunpack.c.l.b16 %v3235
    %v3281 = vunpack.c.h.b16 %v3235
    %v3282 = vunpack.c.l.b16 %v3236
    %v3283 = vunpack.c.h.b16 %v3236
    %v3284 = vunpack.c.l.b16 %v3237
    %v3285 = vunpack.c.h.b16 %v3237
    %v3286 = vunpack.c.l.b16 %v3238
    %v3287 = vunpack.c.h.b16 %v3238
    %v3288 = vunpack.c.l.b16 %v3239
    %v3289 = vunpack.c.h.b16 %v3239
    %v3290 = vunpack.c.l.b16 %v3240
    %v3291 = vunpack.c.h.b16 %v3240
    %v3292 = vunpack.c.l.b16 %v3241
    %v3293 = vunpack.c.h.b16 %v3241
    %v3294 = vunpack.c.l.b16 %v3242
    %v3295 = vunpack.c.h.b16 %v3242
    %v3296 = vunpack.c.l.b16 %v3243
    %v3297 = vunpack.c.h.b16 %v3243
    %v3298 = vunpack.c.l.b16 %v3244
    %v3299 = vunpack.c.h.b16 %v3244
    %v3300 = vunpack.c.l.b16 %v3245
    %v3301 = vunpack.c.h.b16 %v3245
    %v3302 = vunpack.c.l.b16 %v3246
    %v3303 = vunpack.c.h.b16 %v3246
    %v3304 = vunpack.c.l.b16 %v3247
    %v3305 = vunpack.c.h.b16 %v3247
    %v3306 = vunpack.c.l.b16 %v3248
    %v3307 = vunpack.c.h.b16 %v3248
    %v3308 = vunpack.c.l.b16 %v3249
    %v3309 = vunpack.c.h.b16 %v3249
    %v3310 = vunpack.c.l.b16 %v3250
    %v3311 = vunpack.c.h.b16 %v3250
    %v3312 = vpack.c.b16 %v3282, %v3280
    %v3313 = vpack.c.b16 %v3283, %v3281
    %v3314 = vpack.c.b16 %v3286, %v3284
    %v3315 = vpack.c.b16 %v3287, %v3285
    %v3316 = vpack.c.b16 %v3290, %v3288
    %v3317 = vpack.c.b16 %v3291, %v3289
    %v3318 = vpack.c.b16 %v3294, %v3292
    %v3319 = vpack.c.b16 %v3295, %v3293
    %v3320 = vpack.c.b16 %v3298, %v3296
    %v3321 = vpack.c.b16 %v3299, %v3297
    %v3322 = vpack.c.b16 %v3302, %v3300
    %v3323 = vpack.c.b16 %v3303, %v3301
    %v3324 = vpack.c.b16 %v3306, %v3304
    %v3325 = vpack.c.b16 %v3307, %v3305
    %v3326 = vpack.c.b16 %v3310, %v3308
    %v3327 = vpack.c.b16 %v3311, %v3309
    %3344 = vmatprep.subr.bf16.mxu0 %v3327
    %3345 = vmatpush1.bf16.msra.mxu0 %v3326
    %3346 = vmatprep.subr.bf16.mxu0 %v3325
    %3347 = vmatpush1.bf16.msra.mxu0 %v3324
    %3348 = vmatprep.subr.bf16.mxu0 %v3323
    %3349 = vmatpush1.bf16.msra.mxu0 %v3322
    %3350 = vmatprep.subr.bf16.mxu0 %v3321
    %3351 = vmatpush1.bf16.msra.mxu0 %v3320
    %3352 = vmatprep.subr.bf16.mxu0 %v3319
    %3353 = vmatpush1.bf16.msra.mxu0 %v3318
    %3354 = vmatprep.subr.bf16.mxu0 %v3317
    %3355 = vmatpush1.bf16.msra.mxu0 %v3316
    %3356 = vmatprep.subr.bf16.mxu0 %v3315
    %3357 = vmatpush1.bf16.msra.mxu0 %v3314
    %3358 = vmatprep.subr.bf16.mxu0 %v3313
    %3359 = vmatpush1.bf16.msra.mxu0 %v3312
    %3360 = vmatprep.subr.bf16.mxu0 0
    %3361 = vmatpush2.bf16.msra.mxu0 0
    %3362 = vmatprep.subr.bf16.mxu0 0
    %3363 = vmatpush2.bf16.msra.mxu0 0
    %3364 = vmatprep.subr.bf16.mxu0 0
    %3365 = vmatpush2.bf16.msra.mxu0 0
    %3366 = vmatprep.subr.bf16.mxu0 0
    %3367 = vmatpush2.bf16.msra.mxu0 0
    %3368 = vmatprep.subr.bf16.mxu0 0
    %3369 = vmatpush2.bf16.msra.mxu0 0
    %3370 = vmatprep.subr.bf16.mxu0 0
    %3371 = vmatpush2.bf16.msra.mxu0 0
    %3372 = vmatprep.subr.bf16.mxu0 0
    %3373 = vmatpush2.bf16.msra.mxu0 0
    %3374 = vmatprep.subr.bf16.mxu0 0
    %3375 = vmatpush2.bf16.msra.mxu0 0
    %3376 = vmatprep.mubr.bf16.mxu0 0
    %3377 = vmatmul.mubr.bf16.gmra.mxu0 %v3233
    %v3378 = vpop.f32.mrf.mxu0
    %v3379 = vadd.f32 %v3257, %v3378
    %v3380 = vpop.f32.mrf.mxu0
    %v3381 = vadd.f32 %v3261, %v3380
    %v3382 = vpop.f32.mrf.mxu0
    %v3383 = vadd.f32 %v3257, %v3382
    %v3384 = vpop.f32.mrf.mxu0
    %v3385 = vadd.f32 %v3261, %v3384
    %3386 = vdwg.mxu0
    %v3387 = vmul.f32 %v3379, %v3379
    %v3388 = vmul.f32 %v3381, %v3381
    %v3389 = vmul.f32 %v3383, %v3383
    %v3390 = vmul.f32 %v3385, %v3385
    %v3391 = vmul.f32 %v3379, %v3387
    %v3392 = vmul.f32 %v3381, %v3388
    %v3393 = vmul.f32 %v3383, %v3389
    %v3394 = vmul.f32 %v3385, %v3390
    %v3395 = vmul.f32 %v3391, 0.044715
    %v3396 = vmul.f32 %v3392, 0.044715
    %v3397 = vmul.f32 %v3393, 0.044715
    %v3398 = vmul.f32 %v3394, 0.044715
    %v3399 = vadd.f32 %v3379, %v3395
    %v3400 = vadd.f32 %v3381, %v3396
    %v3401 = vadd.f32 %v3383, %v3397
    %v3402 = vadd.f32 %v3385, %v3398
    %v3403 = vmul.f32 %v3399, 0.7978846
    %v3404 = vmul.f32 %v3400, 0.7978846
    %v3405 = vmul.f32 %v3401, 0.7978846
    %v3406 = vmul.f32 %v3402, 0.7978846
    %v3407 = vtanh.pop %v3403
    %v3408 = vtanh.pop %v3404
    %v3409 = vtanh.pop %v3405
    %v3410 = vtanh.pop %v3406
    %v3411 = vadd.f32 %v3407, 1.0
    %v3412 = vadd.f32 %v3408, 1.0
    %v3413 = vadd.f32 %v3409, 1.0
    %v3414 = vadd.f32 %v3410, 1.0
    %v3415 = vmul.f32 %v3411, 0.5
    %v3416 = vmul.f32 %v3412, 0.5
    %v3417 = vmul.f32 %v3413, 0.5
    %v3418 = vmul.f32 %v3414, 0.5
    %v3419 = vmul.f32 %v3379, %v3415
    %v3420 = vmul.f32 %v3381, %v3416
    %v3421 = vmul.f32 %v3383, %v3417
    %v3422 = vmul.f32 %v3385, %v3418
    %v3423 = vpack.c.bf16 %v3421, %v3419
    %v3424 = vpack.c.bf16 %v3422, %v3420
    %s3425 = scalar_lea.vmem [#allocation5], 128
    %v3426 = vld [vmem:[%s3425] sm:$0xf]
    %v3427 = vld [vmem:[%s3425 + $0x4] sm:$0xf]
    %v3428 = vld [vmem:[%s3425 + $0x8] sm:$0xf]
    %v3429 = vld [vmem:[%s3425 + $0xc] sm:$0xf]
    %v3430 = vld [vmem:[%s3425 + $0x10] sm:$0xf]
    %v3431 = vld [vmem:[%s3425 + $0x14] sm:$0xf]
    %v3432 = vld [vmem:[%s3425 + $0x18] sm:$0xf]
    %v3433 = vld [vmem:[%s3425 + $0x1c] sm:$0xf]
    %v3434 = vld [vmem:[%s3425 + $0x20] sm:$0xf]
    %v3435 = vld [vmem:[%s3425 + $0x24] sm:$0xf]
    %v3436 = vld [vmem:[%s3425 + $0x28] sm:$0xf]
    %v3437 = vld [vmem:[%s3425 + $0x2c] sm:$0xf]
    %v3438 = vld [vmem:[%s3425 + $0x30] sm:$0xf]
    %v3439 = vld [vmem:[%s3425 + $0x34] sm:$0xf]
    %v3440 = vld [vmem:[%s3425 + $0x38] sm:$0xf]
    %v3441 = vld [vmem:[%s3425 + $0x3c] sm:$0xf]
    %v3442 = vld [vmem:[%s3425 + $0x40] sm:$0xf]
    %v3443 = vld [vmem:[%s3425 + $0x44] sm:$0xf]
    %v3444 = vld [vmem:[%s3425 + $0x48] sm:$0xf]
    %v3445 = vld [vmem:[%s3425 + $0x4c] sm:$0xf]
    %v3446 = vld [vmem:[%s3425 + $0x50] sm:$0xf]
    %v3447 = vld [vmem:[%s3425 + $0x54] sm:$0xf]
    %v3448 = vld [vmem:[%s3425 + $0x58] sm:$0xf]
    %v3449 = vld [vmem:[%s3425 + $0x5c] sm:$0xf]
    %v3450 = vld [vmem:[%s3425 + $0x60] sm:$0xf]
    %v3451 = vld [vmem:[%s3425 + $0x64] sm:$0xf]
    %v3452 = vld [vmem:[%s3425 + $0x68] sm:$0xf]
    %v3453 = vld [vmem:[%s3425 + $0x6c] sm:$0xf]
    %v3454 = vld [vmem:[%s3425 + $0x70] sm:$0xf]
    %v3455 = vld [vmem:[%s3425 + $0x74] sm:$0xf]
    %v3456 = vld [vmem:[%s3425 + $0x78] sm:$0xf]
    %v3457 = vld [vmem:[%s3425 + $0x7c] sm:$0xf]
    %s3458 = scalar_lea.vmem %s11, 1
    %v3459 = vld [vmem:[%s3458] sm:$0x1]
    %v3461 = vlaneseq
    %v3462 = vshrl.u32 %v3461, 7
    %v3463 = vsub.s32 0, %v3462
    %v3464 = vrot.slane %v3459, %v3463
    %v3498 = vunpack.c.l.b16 %v3426
    %v3499 = vunpack.c.l.b16 %v3427
    %v3500 = vunpack.c.l.b16 %v3428
    %v3501 = vunpack.c.l.b16 %v3429
    %v3502 = vunpack.c.l.b16 %v3430
    %v3503 = vunpack.c.l.b16 %v3431
    %v3504 = vunpack.c.l.b16 %v3432
    %v3505 = vunpack.c.l.b16 %v3433
    %v3506 = vunpack.c.l.b16 %v3434
    %v3507 = vunpack.c.l.b16 %v3435
    %v3508 = vunpack.c.l.b16 %v3436
    %v3509 = vunpack.c.l.b16 %v3437
    %v3510 = vunpack.c.l.b16 %v3438
    %v3511 = vunpack.c.l.b16 %v3439
    %v3512 = vunpack.c.l.b16 %v3440
    %v3513 = vunpack.c.l.b16 %v3441
    %v3514 = vunpack.c.l.b16 %v3442
    %v3515 = vunpack.c.l.b16 %v3443
    %v3516 = vunpack.c.l.b16 %v3444
    %v3517 = vunpack.c.l.b16 %v3445
    %v3518 = vunpack.c.l.b16 %v3446
    %v3519 = vunpack.c.l.b16 %v3447
    %v3520 = vunpack.c.l.b16 %v3448
    %v3521 = vunpack.c.l.b16 %v3449
    %v3522 = vunpack.c.l.b16 %v3450
    %v3523 = vunpack.c.l.b16 %v3451
    %v3524 = vunpack.c.l.b16 %v3452
    %v3525 = vunpack.c.l.b16 %v3453
    %v3526 = vunpack.c.l.b16 %v3454
    %v3527 = vunpack.c.l.b16 %v3455
    %v3528 = vunpack.c.l.b16 %v3456
    %v3529 = vunpack.c.l.b16 %v3457
    %v3530 = vpack.c.b16 %v3499, %v3498
    %v3531 = vpack.c.b16 %v3501, %v3500
    %v3532 = vpack.c.b16 %v3503, %v3502
    %v3533 = vpack.c.b16 %v3505, %v3504
    %v3534 = vpack.c.b16 %v3507, %v3506
    %v3535 = vpack.c.b16 %v3509, %v3508
    %v3536 = vpack.c.b16 %v3511, %v3510
    %v3537 = vpack.c.b16 %v3513, %v3512
    %v3538 = vpack.c.b16 %v3515, %v3514
    %v3539 = vpack.c.b16 %v3517, %v3516
    %v3540 = vpack.c.b16 %v3519, %v3518
    %v3541 = vpack.c.b16 %v3521, %v3520
    %v3542 = vpack.c.b16 %v3523, %v3522
    %v3543 = vpack.c.b16 %v3525, %v3524
    %v3544 = vpack.c.b16 %v3527, %v3526
    %v3545 = vpack.c.b16 %v3529, %v3528
    %3562 = vmatprep.subr.bf16.mxu0 0
    %3563 = vmatpush1.bf16.msra.mxu0 %v3537
    %3564 = vmatprep.subr.bf16.mxu0 0
    %3565 = vmatpush1.bf16.msra.mxu0 %v3536
    %3566 = vmatprep.subr.bf16.mxu0 0
    %3567 = vmatpush1.bf16.msra.mxu0 %v3535
    %3568 = vmatprep.subr.bf16.mxu0 0
    %3569 = vmatpush1.bf16.msra.mxu0 %v3534
    %3570 = vmatprep.subr.bf16.mxu0 0
    %3571 = vmatpush1.bf16.msra.mxu0 %v3533
    %3572 = vmatprep.subr.bf16.mxu0 0
    %3573 = vmatpush1.bf16.msra.mxu0 %v3532
    %3574 = vmatprep.subr.bf16.mxu0 0
    %3575 = vmatpush1.bf16.msra.mxu0 %v3531
    %3576 = vmatprep.subr.bf16.mxu0 0
    %3577 = vmatpush1.bf16.msra.mxu0 %v3530
    %3578 = vmatprep.subr.bf16.mxu0 0
    %3579 = vmatpush2.bf16.msra.mxu0 %v3545
    %3580 = vmatprep.subr.bf16.mxu0 0
    %3581 = vmatpush2.bf16.msra.mxu0 %v3544
    %3582 = vmatprep.subr.bf16.mxu0 0
    %3583 = vmatpush2.bf16.msra.mxu0 %v3543
    %3584 = vmatprep.subr.bf16.mxu0 0
    %3585 = vmatpush2.bf16.msra.mxu0 %v3542
    %3586 = vmatprep.subr.bf16.mxu0 0
    %3587 = vmatpush2.bf16.msra.mxu0 %v3541
    %3588 = vmatprep.subr.bf16.mxu0 0
    %3589 = vmatpush2.bf16.msra.mxu0 %v3540
    %3590 = vmatprep.subr.bf16.mxu0 0
    %3591 = vmatpush2.bf16.msra.mxu0 %v3539
    %3592 = vmatprep.subr.bf16.mxu0 0
    %3593 = vmatpush2.bf16.msra.mxu0 %v3538
    %3594 = vmatprep.mubr.bf16.mxu0 %v3424
    %3595 = vmatmul.mubr.bf16.gmra.mxu0 %v3423
    %v3596 = vpop.f32.mrf.mxu0
    %v3597 = vadd.f32 %v3464, %v3596
    %v3598 = vpop.f32.mrf.mxu0
    %v3599 = vpop.f32.mrf.mxu0
    %v3600 = vadd.f32 %v3464, %v3599
    %v3601 = vpop.f32.mrf.mxu0
    %3602 = vdwg.mxu0
    %v3603 = vadd.f32 %v3231, %v3597
    %v3604 = vadd.f32 %v3232, %v3600
    %s3605 = scalar_lea.vmem %s12, 1
    %v3606 = vld [vmem:[%s3605] sm:$0x1]
    %s3607 = scalar_lea.vmem %s13, 1
    %v3608 = vld [vmem:[%s3607] sm:$0x1]
    %3609 = vadd.xlane.f32.xlu0 %v3603
    %v3610 = vpop.xlane.xlu0 %3609
    %3611 = vadd.xlane.f32.xlu0 %v3604
    %v3612 = vpop.xlane.xlu0 %3611
    %v3613 = vmul.f32 %v3610, %v1435
    %v3614 = vmul.f32 %v3612, %v1435
    %v3615 = vsub.f32 %v3603, %v3613
    %v3616 = vsub.f32 %v3604, %v3614
    %v3617 = vmul.f32 %v3615, %v3615
    %v3618 = vmul.f32 %v3616, %v3616
    %3619 = vadd.xlane.f32.xlu0 %v3617
    %v3620 = vpop.xlane.xlu0 %3619
    %3621 = vadd.xlane.f32.xlu0 %v3618
    %v3622 = vpop.xlane.xlu0 %3621
    %v3623 = vmul.f32 %v3620, %v1435
    %v3624 = vmul.f32 %v3622, %v1435
    %v3625 = vadd.f32 %v3623, 1e-12
    %v3626 = vadd.f32 %v3624, 1e-12
    %v3627 = vrsqrt.pop %v3625
    %v3628 = vrsqrt.pop %v3626
    %v3629 = vmul.f32 %v3615, %v3627
    %v3630 = vmul.f32 %v3616, %v3628
    %v3632 = vlaneseq
    %v3633 = vshrl.u32 %v3632, 7
    %v3634 = vsub.s32 0, %v3633
    %v3635 = vrot.slane %v3606, %v3634
    %v3637 = vmul.f32 %v3629, %v3635
    %v3638 = vmul.f32 %v3630, %v3635
    %v3640 = vlaneseq
    %v3641 = vshrl.u32 %v3640, 7
    %v3642 = vsub.s32 0, %v3641
    %v3643 = vrot.slane %v3608, %v3642
    %v3645 = vadd.f32 %v3637, %v3643
    %v3646 = vadd.f32 %v3638, %v3643
    %v3647 = vlaneseq
    %v3648 = vshrl.u32 %v3647, 7
    %v3649 = vsub.s32 0, %v3648
    %v3650 = vrot.slane %v79, %v3649
    %3652 = vbcast.lane.b32.xlu0 %v3650, 256
    %v3653 = vpop.permute.xlu0 %3652
    %v3654 = vlaneseq
    %v3655 = vshrl.u32 %v3654, 7
    %v3656 = vsub.s32 1, %v3655
    %v3657 = vrot.slane %v79, %v3656
    %3659 = vbcast.lane.b32.xlu0 %v3657, 256
    %v3660 = vpop.permute.xlu0 %3659
    %v3661 = vmul.f32 %v3645, %v3653
    %v3662 = vmul.f32 %v3646, %v3660
    %v3663 = vrot.slane %v3661, 4
    %v3664 = vadd.f32 %v3661, %v3663
    %v3665 = vrot.slane %v3664, 2
    %v3666 = vadd.f32 %v3664, %v3665
    %v3667 = vrot.slane %v3666, 1
    %v3668 = vadd.f32 %v3666, %v3667
    %v3669 = vrot.slane %v3662, 4
    %v3670 = vadd.f32 %v3662, %v3669
    %v3671 = vrot.slane %v3670, 2
    %v3672 = vadd.f32 %v3670, %v3671
    %v3673 = vrot.slane %v3672, 1
    %v3674 = vadd.f32 %v3672, %v3673
    %vm3675 = vcmask 58368
    %v3676 = vsel %vm3675, %v79, 0.0
    %3677 = vadd.xlane.f32.xlu0 %v3676
    %v3678 = vpop.xlane.xlu0 %3677
    %v3679 = vmax.f32 %v3678, 1e-09
    %v3680 = vrcp.pop %v3679
    %v3682 = vrot.slane %v3680, 1
    %v3685 = vmul.f32 %v3668, %v3680
    %v3686 = vmul.f32 %v3674, %v3682
    %v3687 = vmul.f32 %v3685, %v3685
    %v3688 = vmul.f32 %v3686, %v3686
    %v3691 = vrot.slane %v3688, 7
    %vm3692 = vcmask 1041409
    %v3693 = vsel %vm3692, %v3691, %v3687
    %vm3695 = vcmask 1041408
    %v3696 = vsel %vm3695, %v3693, 0.0
    %3697 = vadd.xlane.f32.xlu0 %v3696
    %v3698 = vpop.xlane.xlu0 %3697
    %v3699 = vmax.f32 %v3698, 1e-24
    %v3700 = vrsqrt.pop %v3699
    %v3702 = vrot.slane %v3700, 1
    %v3705 = vmul.f32 %v3685, %v3700
    %v3706 = vmul.f32 %v3686, %v3702
    %v3709 = vrot.slane %v3706, 7
    %v3710 = vsel %vm3692, %v3709, %v3705
    %3712 = vst [vmem:[#allocation7] sm:$0x3] %v3710
    // Predicated region
    $region66: #{_lambda_.1} parent=1 // pred_check
      _
    $region67: #{_lambda_.1} parent=1 // pred_check_branch
      %3714 = sbr.rel (0) target = $region69
    $region68: #{_lambda_.1} parent=1 // pred_region
      %s3716 = ssub.s32 32, 32
      %3717 = vsyncadd [#allocation4], %s3716
      %s3719 = sshll.u32 [#allocation7], 4
      %s3720 = int_to_ptr.vmem [resolvable:$true] %s3719
      %3722 = dma.vmem_to_hbm [thread:$0]  %s3720, 32, %s14, [#allocation4]
    $region69: #{_lambda_.1} parent=1 // pred_fallthru
      _
    // Predicated region
    $region70: #{_lambda_.1} parent=1 // pred_check
      _
    $region71: #{_lambda_.1} parent=1 // pred_check_branch
      %3724 = sbr.rel (0) target = $region73
    $region72: #{_lambda_.1} parent=1 // pred_region
      %3725 = dma.done [#allocation4], 32
    $region73: #{_lambda_.1} parent=1 // pred_fallthru
      _
    %3726 = vsyncpa [#allocation3], 1
    %3727 = vsyncpa [#allocation6], 1
    %3728 = vsyncpa [#allocation4], 1

</llo_original>
